<compile_context>
chip_gen: v6e
topology: v6e:2x2x1
jax: 0.10.0
libtpu: 0.0.40
codegen_flags: <defaults>
</compile_context>

<pallas_src>
import math
import jax
import jax.numpy as jnp
from jax import lax
from jax.experimental import pallas as pl
from jax.experimental.pallas import tpu as pltpu

# ---------------- small synthetic GemmaConfig ----------------
VOCAB = 128          # unused by forward (forward consumes inputs_embeds)
HIDDEN = 32
INTERMEDIATE = 64
NUM_LAYERS = 2
NUM_HEADS = 4
NUM_KV_HEADS = 2
HEAD_DIM = 16
RMS_EPS = 1e-6
ROPE_THETA = 10000.0
BATCH = 2
SEQ = 8

N_REP = NUM_HEADS // NUM_KV_HEADS

# fused-QKV column layout: [ Q | Qrot | K | Krot | V ]  (rotate-half folded
# into the *rot columns, 1/sqrt(Dh) folded into the Q columns)
QKV_Q_OFF = 0
QKV_QR_OFF = NUM_HEADS * HEAD_DIM                     # 64
QKV_K_OFF = QKV_QR_OFF + NUM_HEADS * HEAD_DIM         # 128
QKV_KR_OFF = QKV_K_OFF + NUM_KV_HEADS * HEAD_DIM      # 160
QKV_V_OFF = QKV_KR_OFF + NUM_KV_HEADS * HEAD_DIM      # 192
QKV_WIDTH = QKV_V_OFF + NUM_KV_HEADS * HEAD_DIM       # 224
GU_WIDTH = 2 * INTERMEDIATE                           # 128 (gate | up)


# ---------------- shared math helpers (also traced inside the kernel) -------
def _rms(x, w, eps):
    # Gemma RMSNorm with (1 + weight) scaling; w broadcasts over rows.
    var = jnp.mean(x * x, axis=-1, keepdims=True)
    return x * lax.rsqrt(var + eps) * (1.0 + w)


def _gelu_tanh(x):
    c = math.sqrt(2.0 / math.pi)
    return 0.5 * x * (1.0 + jnp.tanh(c * (x + 0.044715 * x * x * x)))


def rope_cos_sin(position_ids, head_dim, theta):
    inv_freq = 1.0 / (theta ** (jnp.arange(0, head_dim, 2, dtype=jnp.float32) / head_dim))
    freqs = position_ids.astype(jnp.float32)[:, :, None] * inv_freq[None, None, :]
    emb = jnp.concatenate([freqs, freqs], axis=-1)          # (B, S, head_dim)
    return jnp.cos(emb), jnp.sin(emb)


# ---------------- single fused whole-model Pallas kernel --------------------
def gemma_forward_kernel(x_ref, mask_ref, cosq_ref, sinq_ref,
                         ln1_ref, wqkv_ref, wo_ref, ln2_ref, wgu_ref, wd_ref,
                         fnorm_ref, out_ref):
    # Per grid step: one batch element (batch dim squeezed by the BlockSpec).
    S, H = x_ref.shape
    Dh = HEAD_DIM

    mask = mask_ref[...]                       # (S, S) additive causal mask
    cos_q = cosq_ref[...]                      # (S, NH*Dh)  head-tiled cos
    sin_q = sinq_ref[...]                      # (S, NH*Dh)
    cos_k = cos_q[:, : NUM_KV_HEADS * Dh]      # prefix == NKV-tiled cos
    sin_k = sin_q[:, : NUM_KV_HEADS * Dh]

    # Gemma embedding normalizer (inputs_embeds * sqrt(hidden_size)), f32.
    h = x_ref[...] * jnp.float32(HIDDEN ** 0.5)                      # (S, H)

    # Static unroll over layers: weights stay VMEM-resident, activations in vregs.
    for l in range(NUM_LAYERS):
        # ---------- self-attention block ----------
        ln_x = _rms(h, ln1_ref[l], RMS_EPS)                          # f32 (S, H)
        # fused [Q|Qrot|K|Krot|V] projection: one (S,32)x(32,224) bf16 MXU push
        qkv = jnp.dot(ln_x.astype(jnp.bfloat16), wqkv_ref[l],
                      preferred_element_type=jnp.float32)            # (S, 224) f32

        # RoPE, lane-dense, no rotate_half / concat (rotation lives in Qrot/Krot cols)
        q = qkv[:, QKV_Q_OFF:QKV_QR_OFF] * cos_q + qkv[:, QKV_QR_OFF:QKV_K_OFF] * sin_q
        k = qkv[:, QKV_K_OFF:QKV_KR_OFF] * cos_k + qkv[:, QKV_KR_OFF:QKV_V_OFF] * sin_k
        v = qkv[:, QKV_V_OFF:QKV_WIDTH]

        # Stack heads into a leading batch axis (GQA: each KV head repeated N_REP x).
        k_g = [k[:, g * Dh:(g + 1) * Dh] for g in range(NUM_KV_HEADS)]
        v_g = [v[:, g * Dh:(g + 1) * Dh] for g in range(NUM_KV_HEADS)]
        qz = jnp.stack([q[:, hh * Dh:(hh + 1) * Dh] for hh in range(NUM_HEADS)],
                       axis=0).astype(jnp.bfloat16)                  # (NH, S, Dh)
        kz = jnp.stack([k_g[hh // N_REP] for hh in range(NUM_HEADS)],
                       axis=0).astype(jnp.bfloat16)                  # (NH, S, Dh)
        vz = jnp.stack([v_g[hh // N_REP] for hh in range(NUM_HEADS)],
                       axis=0).astype(jnp.bfloat16)                  # (NH, S, Dh)

        # One batched score matmul for all heads (scale already folded into wqkv).
        s = jnp.einsum("zid,zjd->zij", qz, kz,
                       preferred_element_type=jnp.float32)           # (NH, S, S)
        s = s + mask                                                 # broadcast over heads
        m = jnp.max(s, axis=-1, keepdims=True)
        p = jnp.exp(s - m)
        p = p * pl.reciprocal(jnp.sum(p, axis=-1, keepdims=True), approx=True)

        # One batched P@V and one batched per-head out-projection; summing the
        # per-head projections == o_proj of the concatenated heads (no concat).
        attn_z = jnp.einsum("zij,zjd->zid", p.astype(jnp.bfloat16), vz,
                            preferred_element_type=jnp.float32)      # (NH, S, Dh)
        proj_z = jnp.einsum("zid,zdh->zih", attn_z.astype(jnp.bfloat16), wo_ref[l],
                            preferred_element_type=jnp.float32)      # (NH, S, H)
        h = h + jnp.sum(proj_z, axis=0)                              # residual 1

        # ---------- MLP block (gelu-tanh gated) ----------
        ln_h = _rms(h, ln2_ref[l], RMS_EPS)
        gu = jnp.dot(ln_h.astype(jnp.bfloat16), wgu_ref[l],
                     preferred_element_type=jnp.float32)             # (S, 128)
        mlp_in = _gelu_tanh(gu[:, :INTERMEDIATE]) * gu[:, INTERMEDIATE:]
        h = h + jnp.dot(mlp_in.astype(jnp.bfloat16), wd_ref[l],
                        preferred_element_type=jnp.float32)          # residual 2

    # final RMSNorm
    out_ref[...] = _rms(h, fnorm_ref[...], RMS_EPS)


# ---------------- pallas_call wrapper ----------------
def _cost_numbers(B, S):
    T = B * S
    per_layer = (2 * T * HIDDEN * QKV_WIDTH
                 + 2 * 2 * B * NUM_HEADS * S * S * HEAD_DIM           # scores + PV
                 + 2 * B * NUM_HEADS * S * HEAD_DIM * HIDDEN          # per-head out-proj
                 + 2 * T * HIDDEN * GU_WIDTH
                 + 2 * T * INTERMEDIATE * HIDDEN)
    flops = NUM_LAYERS * per_layer
    transc = NUM_LAYERS * (B * NUM_HEADS * S * S + T * INTERMEDIATE + 2 * T) + T
    w_bytes = NUM_LAYERS * (HIDDEN * QKV_WIDTH + NUM_HEADS * HEAD_DIM * HIDDEN
                            + HIDDEN * GU_WIDTH + INTERMEDIATE * HIDDEN) * 2 \
        + (2 * NUM_LAYERS + 1) * HIDDEN * 4
    act_bytes = (2 * T * HIDDEN + B * S * S + 2 * B * S * NUM_HEADS * HEAD_DIM) * 4
    return int(flops), int(transc), int(w_bytes + act_bytes)


def gemma_model_forward(inputs_embeds, attention_mask, position_ids, kparams):
    B, S, H = inputs_embeds.shape
    cos, sin = rope_cos_sin(position_ids, HEAD_DIM, ROPE_THETA)       # (B, S, Dh)
    cos_q = jnp.tile(cos, (1, 1, NUM_HEADS))                          # (B, S, NH*Dh)
    sin_q = jnp.tile(sin, (1, 1, NUM_HEADS))

    def const_spec(shape):
        return pl.BlockSpec(shape, lambda b, _s=shape: (0,) * len(_s))

    def per_batch_spec(tail):
        return pl.BlockSpec((None,) + tail, lambda b, _t=tail: (b,) + (0,) * len(_t))

    in_specs = [
        per_batch_spec((S, H)),                                # x
        per_batch_spec((S, S)),                                # additive mask
        per_batch_spec((S, NUM_HEADS * HEAD_DIM)),             # cos (head-tiled)
        per_batch_spec((S, NUM_HEADS * HEAD_DIM)),             # sin (head-tiled)
        const_spec((NUM_LAYERS, 1, H)),                        # ln1
        const_spec((NUM_LAYERS, H, QKV_WIDTH)),                # fused qkv(+rot)
        const_spec((NUM_LAYERS, NUM_HEADS, HEAD_DIM, H)),      # per-head o_proj
        const_spec((NUM_LAYERS, 1, H)),                        # ln2
        const_spec((NUM_LAYERS, H, GU_WIDTH)),                 # gate|up
        const_spec((NUM_LAYERS, INTERMEDIATE, H)),             # down
        const_spec((1, H)),                                    # final norm
    ]
    out_spec = per_batch_spec((S, H))

    flops, transc, bytes_accessed = _cost_numbers(B, S)

    return pl.pallas_call(
        gemma_forward_kernel,
        out_shape=jax.ShapeDtypeStruct((B, S, H), jnp.float32),
        grid=(B,),
        in_specs=in_specs,
        out_specs=out_spec,
        compiler_params=pltpu.CompilerParams(dimension_semantics=("parallel",)),
        cost_estimate=pl.CostEstimate(flops=flops, transcendentals=transc,
                                      bytes_accessed=bytes_accessed),
    )(inputs_embeds, attention_mask, cos_q, sin_q,
      kparams["ln1"], kparams["wqkv"], kparams["wo"], kparams["ln2"],
      kparams["wgu"], kparams["wd"], kparams["final_norm"])


# ------------- pack "natural" per-layer params into fused stacked tensors ---
def pack_params(params):
    Dh = HEAD_DIM
    q_scale = 1.0 / math.sqrt(Dh)

    def rot_cols(w):
        # rotate_half applied to the per-head output columns (last axis).
        return jnp.concatenate([-w[..., Dh // 2:], w[..., : Dh // 2]], axis=-1)

    def heads_to_cols(w):                       # (n, H, Dh) -> (H, n*Dh)
        n, hdim, d = w.shape
        return jnp.transpose(w, (1, 0, 2)).reshape(hdim, n * d)

    def fuse_qkv(lp):
        wq = q_scale * lp["wq"]                 # fold 1/sqrt(Dh) into Q columns
        return jnp.concatenate([
            heads_to_cols(wq),                  # Q
            heads_to_cols(rot_cols(wq)),        # Qrot (rotate_half folded in)
            heads_to_cols(lp["wk"]),            # K
            heads_to_cols(rot_cols(lp["wk"])),  # Krot
            heads_to_cols(lp["wv"]),            # V
        ], axis=1)                              # (H, 224)

    def stack(fn, dtype):
        return jnp.stack([fn(lp) for lp in params["layers"]], axis=0).astype(dtype)

    return dict(
        ln1=stack(lambda lp: lp["ln1"], jnp.float32),                       # (L,1,H)
        wqkv=stack(fuse_qkv, jnp.bfloat16),                                 # (L,H,224)
        wo=stack(lambda lp: lp["wo"], jnp.bfloat16),                        # (L,NH,Dh,H)
        ln2=stack(lambda lp: lp["ln2"], jnp.float32),                       # (L,1,H)
        wgu=stack(lambda lp: jnp.concatenate([lp["wg"], lp["wu"]], axis=1),
                  jnp.bfloat16),                                            # (L,H,128)
        wd=stack(lambda lp: lp["wd"], jnp.bfloat16),                        # (L,I,H)
        final_norm=params["final_norm"],                                    # (1,H) f32
    )


# ---------------- pure-JAX reference (for a sanity check) ----------------
def ref_forward(inputs_embeds, attention_mask, position_ids, params):
    P = lax.Precision.HIGHEST
    cos, sin = rope_cos_sin(position_ids, HEAD_DIM, ROPE_THETA)
    c, s = cos[:, None], sin[:, None]                       # (B,1,S,Dh)

    def rot(t):
        d = t.shape[-1]
        return jnp.concatenate([-t[..., d // 2:], t[..., : d // 2]], axis=-1)

    h = inputs_embeds * (HIDDEN ** 0.5)
    for lp in params["layers"]:
        ln_x = _rms(h, lp["ln1"], RMS_EPS)
        q = jnp.einsum("bsh,nhd->bnsd", ln_x, lp["wq"], precision=P)
        k = jnp.einsum("bsh,nhd->bnsd", ln_x, lp["wk"], precision=P)
        v = jnp.einsum("bsh,nhd->bnsd", ln_x, lp["wv"], precision=P)
        q = q * c + rot(q) * s
        k = k * c + rot(k) * s
        k = jnp.repeat(k, N_REP, axis=1)
        v = jnp.repeat(v, N_REP, axis=1)
        scores = jnp.einsum("bnqd,bnkd->bnqk", q, k, precision=P) / math.sqrt(HEAD_DIM)
        scores = scores + attention_mask[:, None]
        p = jax.nn.softmax(scores, axis=-1)
        o = jnp.einsum("bnqk,bnkd->bnqd", p, v, precision=P)
        attn = jnp.einsum("bnqd,ndh->bqh", o, lp["wo"], precision=P)
        h1 = h + attn
        ln_h1 = _rms(h1, lp["ln2"], RMS_EPS)
        gate = _gelu_tanh(jnp.einsum("bsh,hi->bsi", ln_h1, lp["wg"], precision=P))
        up = jnp.einsum("bsh,hi->bsi", ln_h1, lp["wu"], precision=P)
        mlp = jnp.einsum("bsi,ih->bsh", gate * up, lp["wd"], precision=P)
        h = h1 + mlp
    return _rms(h, params["final_norm"], RMS_EPS)


# ---------------- deterministic parameter init ----------------
def init_params(key):
    layers = []
    scale = 0.05
    for _ in range(NUM_LAYERS):
        key, *ks = jax.random.split(key, 10)
        layers.append(dict(
            ln1=0.1 * jax.random.normal(ks[0], (1, HIDDEN), jnp.float32),
            wq=scale * jax.random.normal(ks[1], (NUM_HEADS, HIDDEN, HEAD_DIM), jnp.float32),
            wk=scale * jax.random.normal(ks[2], (NUM_KV_HEADS, HIDDEN, HEAD_DIM), jnp.float32),
            wv=scale * jax.random.normal(ks[3], (NUM_KV_HEADS, HIDDEN, HEAD_DIM), jnp.float32),
            wo=scale * jax.random.normal(ks[4], (NUM_HEADS, HEAD_DIM, HIDDEN), jnp.float32),
            ln2=0.1 * jax.random.normal(ks[5], (1, HIDDEN), jnp.float32),
            wg=scale * jax.random.normal(ks[6], (HIDDEN, INTERMEDIATE), jnp.float32),
            wu=scale * jax.random.normal(ks[7], (HIDDEN, INTERMEDIATE), jnp.float32),
            wd=scale * jax.random.normal(ks[8], (INTERMEDIATE, HIDDEN), jnp.float32),
        ))
    key, k = jax.random.split(key)
    final_norm = 0.1 * jax.random.normal(k, (1, HIDDEN), jnp.float32)
    return dict(layers=layers, final_norm=final_norm)


if __name__ == "__main__":
    key = jax.random.PRNGKey(0)
    key, k_emb = jax.random.split(key)
    params = init_params(key)
    kparams = pack_params(params)

    inputs_embeds = jax.random.normal(k_emb, (BATCH, SEQ, HIDDEN), jnp.float32)
    position_ids = jnp.broadcast_to(jnp.arange(SEQ, dtype=jnp.int32)[None, :], (BATCH, SEQ))
    causal = jnp.tril(jnp.ones((SEQ, SEQ), jnp.bool_))
    attention_mask = jnp.where(causal, 0.0, -1e9).astype(jnp.float32)
    attention_mask = jnp.broadcast_to(attention_mask[None], (BATCH, SEQ, SEQ))

    out = gemma_model_forward(inputs_embeds, attention_mask, position_ids, kparams)
    out = jax.block_until_ready(out)

    ref = ref_forward(inputs_embeds, attention_mask, position_ids, params)
    assert out.shape == (BATCH, SEQ, HIDDEN)
    assert bool(jnp.all(jnp.isfinite(out)))
    # bf16 MXU operands + approx-reciprocal softmax => compare at 2e-2.
    assert bool(jnp.allclose(out, ref, atol=2e-2, rtol=2e-2)), "mismatch vs reference"

    print("KERNEL_OK")
</pallas_src>

<mosaic_0001>
module attributes {stable_mosaic.version = 11 : i64} {
  func.func @gemma_forward_kernel(%arg0: i32, %arg1: memref<1x8x32xf32, #tpu.memory_space<vmem>>, %arg2: memref<1x8x8xf32, #tpu.memory_space<vmem>>, %arg3: memref<1x8x64xf32, #tpu.memory_space<vmem>>, %arg4: memref<1x8x64xf32, #tpu.memory_space<vmem>>, %arg5: memref<2x1x32xf32, #tpu.memory_space<vmem>>, %arg6: memref<2x32x224xbf16, #tpu.memory_space<vmem>>, %arg7: memref<2x4x16x32xbf16, #tpu.memory_space<vmem>>, %arg8: memref<2x1x32xf32, #tpu.memory_space<vmem>>, %arg9: memref<2x32x128xbf16, #tpu.memory_space<vmem>>, %arg10: memref<2x64x32xbf16, #tpu.memory_space<vmem>>, %arg11: memref<1x32xf32, #tpu.memory_space<vmem>>, %arg12: memref<1x8x32xf32, #tpu.memory_space<vmem>>) attributes {dimension_semantics = [#tpu.dimension_semantics<parallel>], iteration_bounds = array<i64: 2>, scalar_prefetch = 0 : i64, scratch_operands = 0 : i64, tpu.core_type = #tpu.core_type<tc>, window_params = [{transform_indices = @transform_0, window_bounds = array<i64: 1, 8, 32>}, {transform_indices = @transform_1, window_bounds = array<i64: 1, 8, 8>}, {transform_indices = @transform_2, window_bounds = array<i64: 1, 8, 64>}, {transform_indices = @transform_3, window_bounds = array<i64: 1, 8, 64>}, {pipeline_mode = #tpu.pipeline_mode<synchronous>, transform_indices = @transform_4, window_bounds = array<i64: 2, 1, 32>}, {pipeline_mode = #tpu.pipeline_mode<synchronous>, transform_indices = @transform_5, window_bounds = array<i64: 2, 32, 224>}, {pipeline_mode = #tpu.pipeline_mode<synchronous>, transform_indices = @transform_6, window_bounds = array<i64: 2, 4, 16, 32>}, {pipeline_mode = #tpu.pipeline_mode<synchronous>, transform_indices = @transform_7, window_bounds = array<i64: 2, 1, 32>}, {pipeline_mode = #tpu.pipeline_mode<synchronous>, transform_indices = @transform_8, window_bounds = array<i64: 2, 32, 128>}, {pipeline_mode = #tpu.pipeline_mode<synchronous>, transform_indices = @transform_9, window_bounds = array<i64: 2, 64, 32>}, {pipeline_mode = #tpu.pipeline_mode<synchronous>, transform_indices = @transform_10, window_bounds = array<i64: 1, 32>}, {transform_indices = @transform_11, window_bounds = array<i64: 1, 8, 32>}]} {
    %c0 = arith.constant 0 : index
    %c0_0 = arith.constant 0 : index
    %c0_1 = arith.constant 0 : index
    %0 = vector.load %arg2[%c0, %c0_0, %c0_1] : memref<1x8x8xf32, #tpu.memory_space<vmem>>, vector<1x8x8xf32>
    %1 = vector.shape_cast %0 : vector<1x8x8xf32> to vector<8x8xf32>
    %c0_2 = arith.constant 0 : index
    %c0_3 = arith.constant 0 : index
    %c0_4 = arith.constant 0 : index
    %2 = vector.load %arg3[%c0_2, %c0_3, %c0_4] : memref<1x8x64xf32, #tpu.memory_space<vmem>>, vector<1x8x64xf32>
    %3 = vector.shape_cast %2 : vector<1x8x64xf32> to vector<8x64xf32>
    %c0_5 = arith.constant 0 : index
    %c0_6 = arith.constant 0 : index
    %c0_7 = arith.constant 0 : index
    %4 = vector.load %arg4[%c0_5, %c0_6, %c0_7] : memref<1x8x64xf32, #tpu.memory_space<vmem>>, vector<1x8x64xf32>
    %5 = vector.shape_cast %4 : vector<1x8x64xf32> to vector<8x64xf32>
    %6 = vector.extract_strided_slice %3 {offsets = [0, 0], sizes = [8, 32], strides = [1, 1]} : vector<8x64xf32> to vector<8x32xf32>
    %7 = vector.extract_strided_slice %5 {offsets = [0, 0], sizes = [8, 32], strides = [1, 1]} : vector<8x64xf32> to vector<8x32xf32>
    %c0_8 = arith.constant 0 : index
    %c0_9 = arith.constant 0 : index
    %c0_10 = arith.constant 0 : index
    %8 = vector.load %arg1[%c0_8, %c0_9, %c0_10] : memref<1x8x32xf32, #tpu.memory_space<vmem>>, vector<1x8x32xf32>
    %9 = vector.shape_cast %8 : vector<1x8x32xf32> to vector<8x32xf32>
    %cst = arith.constant 5.65685415 : f32
    %10 = vector.broadcast %cst : f32 to vector<8x32xf32>
    %11 = arith.mulf %9, %10 : vector<8x32xf32>
    %c0_11 = arith.constant 0 : index
    %c0_12 = arith.constant 0 : index
    %c0_13 = arith.constant 0 : index
    %12 = vector.load %arg5[%c0_11, %c0_12, %c0_13] : memref<2x1x32xf32, #tpu.memory_space<vmem>>, vector<1x1x32xf32>
    %13 = vector.shape_cast %12 : vector<1x1x32xf32> to vector<1x32xf32>
    %14 = arith.mulf %11, %11 : vector<8x32xf32>
    %cst_14 = arith.constant dense<0.000000e+00> : vector<8xf32>
    %15 = vector.multi_reduction <add>, %14, %cst_14 [1] : vector<8x32xf32> to vector<8xf32>
    %16 = vector.shape_cast %15 : vector<8xf32> to vector<8x1xf32>
    %cst_15 = arith.constant 3.200000e+01 : f32
    %17 = vector.broadcast %cst_15 : f32 to vector<8x1xf32>
    %18 = arith.divf %16, %17 : vector<8x1xf32>
    %cst_16 = arith.constant 9.99999997E-7 : f32
    %19 = vector.broadcast %cst_16 : f32 to vector<8x1xf32>
    %20 = arith.addf %18, %19 : vector<8x1xf32>
    %21 = math.rsqrt %20 : vector<8x1xf32>
    %22 = vector.broadcast %21 : vector<8x1xf32> to vector<8x32xf32>
    %23 = arith.mulf %11, %22 : vector<8x32xf32>
    %cst_17 = arith.constant 1.000000e+00 : f32
    %24 = vector.broadcast %cst_17 : f32 to vector<1x32xf32>
    %25 = arith.addf %24, %13 : vector<1x32xf32>
    %26 = vector.broadcast %25 : vector<1x32xf32> to vector<8x32xf32>
    %27 = arith.mulf %23, %26 : vector<8x32xf32>
    %28 = arith.truncf %27 : vector<8x32xf32> to vector<8x32xbf16>
    %c0_18 = arith.constant 0 : index
    %c0_19 = arith.constant 0 : index
    %c0_20 = arith.constant 0 : index
    %29 = vector.load %arg6[%c0_18, %c0_19, %c0_20] : memref<2x32x224xbf16, #tpu.memory_space<vmem>>, vector<1x32x224xbf16>
    %30 = vector.shape_cast %29 : vector<1x32x224xbf16> to vector<32x224xbf16>
    %cst_21 = arith.constant dense<0.000000e+00> : vector<8x224xf32>
    %31 = tpu.matmul %28, %30, %cst_21 {dimension_numbers = #tpu.dot_dimension_numbers<[1], [0], [0], [1], [0, 0, 1, 1], [], []>} : vector<8x32xbf16>, vector<32x224xbf16>, vector<8x224xf32> -> vector<8x224xf32>
    %32 = vector.extract_strided_slice %31 {offsets = [0, 0], sizes = [8, 64], strides = [1, 1]} : vector<8x224xf32> to vector<8x64xf32>
    %33 = arith.mulf %32, %3 : vector<8x64xf32>
    %34 = vector.extract_strided_slice %31 {offsets = [0, 64], sizes = [8, 64], strides = [1, 1]} : vector<8x224xf32> to vector<8x64xf32>
    %35 = arith.mulf %34, %5 : vector<8x64xf32>
    %36 = arith.addf %33, %35 : vector<8x64xf32>
    %37 = vector.extract_strided_slice %31 {offsets = [0, 128], sizes = [8, 32], strides = [1, 1]} : vector<8x224xf32> to vector<8x32xf32>
    %38 = arith.mulf %37, %6 : vector<8x32xf32>
    %39 = vector.extract_strided_slice %31 {offsets = [0, 160], sizes = [8, 32], strides = [1, 1]} : vector<8x224xf32> to vector<8x32xf32>
    %40 = arith.mulf %39, %7 : vector<8x32xf32>
    %41 = arith.addf %38, %40 : vector<8x32xf32>
    %42 = vector.extract_strided_slice %31 {offsets = [0, 192], sizes = [8, 32], strides = [1, 1]} : vector<8x224xf32> to vector<8x32xf32>
    %43 = vector.extract_strided_slice %41 {offsets = [0, 0], sizes = [8, 16], strides = [1, 1]} : vector<8x32xf32> to vector<8x16xf32>
    %44 = vector.extract_strided_slice %41 {offsets = [0, 16], sizes = [8, 16], strides = [1, 1]} : vector<8x32xf32> to vector<8x16xf32>
    %45 = vector.extract_strided_slice %42 {offsets = [0, 0], sizes = [8, 16], strides = [1, 1]} : vector<8x32xf32> to vector<8x16xf32>
    %46 = vector.extract_strided_slice %42 {offsets = [0, 16], sizes = [8, 16], strides = [1, 1]} : vector<8x32xf32> to vector<8x16xf32>
    %47 = vector.extract_strided_slice %36 {offsets = [0, 0], sizes = [8, 16], strides = [1, 1]} : vector<8x64xf32> to vector<8x16xf32>
    %48 = vector.extract_strided_slice %36 {offsets = [0, 16], sizes = [8, 16], strides = [1, 1]} : vector<8x64xf32> to vector<8x16xf32>
    %49 = vector.extract_strided_slice %36 {offsets = [0, 32], sizes = [8, 16], strides = [1, 1]} : vector<8x64xf32> to vector<8x16xf32>
    %50 = vector.extract_strided_slice %36 {offsets = [0, 48], sizes = [8, 16], strides = [1, 1]} : vector<8x64xf32> to vector<8x16xf32>
    %51 = vector.shape_cast %47 : vector<8x16xf32> to vector<1x8x16xf32>
    %52 = vector.shape_cast %48 : vector<8x16xf32> to vector<1x8x16xf32>
    %53 = vector.shape_cast %49 : vector<8x16xf32> to vector<1x8x16xf32>
    %54 = vector.shape_cast %50 : vector<8x16xf32> to vector<1x8x16xf32>
    %55 = tpu.concatenate %51, %52, %53, %54 in 0 : vector<1x8x16xf32>, vector<1x8x16xf32>, vector<1x8x16xf32>, vector<1x8x16xf32> -> vector<4x8x16xf32>
    %56 = arith.truncf %55 : vector<4x8x16xf32> to vector<4x8x16xbf16>
    %57 = vector.shape_cast %43 : vector<8x16xf32> to vector<1x8x16xf32>
    %58 = vector.shape_cast %43 : vector<8x16xf32> to vector<1x8x16xf32>
    %59 = vector.shape_cast %44 : vector<8x16xf32> to vector<1x8x16xf32>
    %60 = vector.shape_cast %44 : vector<8x16xf32> to vector<1x8x16xf32>
    %61 = tpu.concatenate %57, %58, %59, %60 in 0 : vector<1x8x16xf32>, vector<1x8x16xf32>, vector<1x8x16xf32>, vector<1x8x16xf32> -> vector<4x8x16xf32>
    %62 = arith.truncf %61 : vector<4x8x16xf32> to vector<4x8x16xbf16>
    %63 = vector.shape_cast %45 : vector<8x16xf32> to vector<1x8x16xf32>
    %64 = vector.shape_cast %45 : vector<8x16xf32> to vector<1x8x16xf32>
    %65 = vector.shape_cast %46 : vector<8x16xf32> to vector<1x8x16xf32>
    %66 = vector.shape_cast %46 : vector<8x16xf32> to vector<1x8x16xf32>
    %67 = tpu.concatenate %63, %64, %65, %66 in 0 : vector<1x8x16xf32>, vector<1x8x16xf32>, vector<1x8x16xf32>, vector<1x8x16xf32> -> vector<4x8x16xf32>
    %68 = arith.truncf %67 : vector<4x8x16xf32> to vector<4x8x16xbf16>
    "tpu.trace_start"() <{level = 10 : i32, message = "zid,zjd->zij"}> : () -> ()
    %cst_22 = arith.constant dense<0.000000e+00> : vector<4x8x8xf32>
    %69 = tpu.matmul %56, %62, %cst_22 {dimension_numbers = #tpu.dot_dimension_numbers<[2], [2], [1], [1], [0, 0, 0, 1, 1, 1], [0], [0]>} : vector<4x8x16xbf16>, vector<4x8x16xbf16>, vector<4x8x8xf32> -> vector<4x8x8xf32>
    "tpu.trace_stop"() : () -> ()
    %70 = vector.shape_cast %1 : vector<8x8xf32> to vector<1x8x8xf32>
    %71 = vector.broadcast %70 : vector<1x8x8xf32> to vector<4x8x8xf32>
    %72 = arith.addf %69, %71 : vector<4x8x8xf32>
    %cst_23 = arith.constant dense<0xFF800000> : vector<4x8xf32>
    %73 = vector.multi_reduction <maximumf>, %72, %cst_23 [2] : vector<4x8x8xf32> to vector<4x8xf32>
    %74 = vector.shape_cast %73 : vector<4x8xf32> to vector<4x8x1xf32>
    %75 = vector.broadcast %74 : vector<4x8x1xf32> to vector<4x8x8xf32>
    %76 = arith.subf %72, %75 : vector<4x8x8xf32>
    %77 = math.exp %76 : vector<4x8x8xf32>
    %cst_24 = arith.constant dense<0.000000e+00> : vector<4x8xf32>
    %78 = vector.multi_reduction <add>, %77, %cst_24 [2] : vector<4x8x8xf32> to vector<4x8xf32>
    %79 = vector.shape_cast %78 : vector<4x8xf32> to vector<4x8x1xf32>
    %80 = tpu.reciprocal %79 {approx = true} : vector<4x8x1xf32> -> vector<4x8x1xf32>
    %81 = vector.broadcast %80 : vector<4x8x1xf32> to vector<4x8x8xf32>
    %82 = arith.mulf %77, %81 : vector<4x8x8xf32>
    %83 = arith.truncf %82 : vector<4x8x8xf32> to vector<4x8x8xbf16>
    "tpu.trace_start"() <{level = 10 : i32, message = "zij,zjd->zid"}> : () -> ()
    %cst_25 = arith.constant dense<0.000000e+00> : vector<4x8x16xf32>
    %84 = tpu.matmul %83, %68, %cst_25 {dimension_numbers = #tpu.dot_dimension_numbers<[2], [1], [1], [2], [0, 0, 0, 1, 1, 2], [0], [0]>} : vector<4x8x8xbf16>, vector<4x8x16xbf16>, vector<4x8x16xf32> -> vector<4x8x16xf32>
    "tpu.trace_stop"() : () -> ()
    %85 = arith.truncf %84 : vector<4x8x16xf32> to vector<4x8x16xbf16>
    %c0_26 = arith.constant 0 : index
    %c0_27 = arith.constant 0 : index
    %c0_28 = arith.constant 0 : index
    %c0_29 = arith.constant 0 : index
    %86 = vector.load %arg7[%c0_26, %c0_27, %c0_28, %c0_29] : memref<2x4x16x32xbf16, #tpu.memory_space<vmem>>, vector<1x4x16x32xbf16>
    %87 = vector.shape_cast %86 : vector<1x4x16x32xbf16> to vector<4x16x32xbf16>
    "tpu.trace_start"() <{level = 10 : i32, message = "zid,zdh->zih"}> : () -> ()
    %cst_30 = arith.constant dense<0.000000e+00> : vector<4x8x32xf32>
    %88 = tpu.matmul %85, %87, %cst_30 {dimension_numbers = #tpu.dot_dimension_numbers<[2], [1], [1], [2], [0, 0, 0, 1, 1, 2], [0], [0]>} : vector<4x8x16xbf16>, vector<4x16x32xbf16>, vector<4x8x32xf32> -> vector<4x8x32xf32>
    "tpu.trace_stop"() : () -> ()
    %cst_31 = arith.constant dense<0.000000e+00> : vector<8x32xf32>
    %89 = vector.multi_reduction <add>, %88, %cst_31 [0] : vector<4x8x32xf32> to vector<8x32xf32>
    %90 = arith.addf %11, %89 : vector<8x32xf32>
    %c0_32 = arith.constant 0 : index
    %c0_33 = arith.constant 0 : index
    %c0_34 = arith.constant 0 : index
    %91 = vector.load %arg8[%c0_32, %c0_33, %c0_34] : memref<2x1x32xf32, #tpu.memory_space<vmem>>, vector<1x1x32xf32>
    %92 = vector.shape_cast %91 : vector<1x1x32xf32> to vector<1x32xf32>
    %93 = arith.mulf %90, %90 : vector<8x32xf32>
    %cst_35 = arith.constant dense<0.000000e+00> : vector<8xf32>
    %94 = vector.multi_reduction <add>, %93, %cst_35 [1] : vector<8x32xf32> to vector<8xf32>
    %95 = vector.shape_cast %94 : vector<8xf32> to vector<8x1xf32>
    %cst_36 = arith.constant 3.200000e+01 : f32
    %96 = vector.broadcast %cst_36 : f32 to vector<8x1xf32>
    %97 = arith.divf %95, %96 : vector<8x1xf32>
    %cst_37 = arith.constant 9.99999997E-7 : f32
    %98 = vector.broadcast %cst_37 : f32 to vector<8x1xf32>
    %99 = arith.addf %97, %98 : vector<8x1xf32>
    %100 = math.rsqrt %99 : vector<8x1xf32>
    %101 = vector.broadcast %100 : vector<8x1xf32> to vector<8x32xf32>
    %102 = arith.mulf %90, %101 : vector<8x32xf32>
    %cst_38 = arith.constant 1.000000e+00 : f32
    %103 = vector.broadcast %cst_38 : f32 to vector<1x32xf32>
    %104 = arith.addf %103, %92 : vector<1x32xf32>
    %105 = vector.broadcast %104 : vector<1x32xf32> to vector<8x32xf32>
    %106 = arith.mulf %102, %105 : vector<8x32xf32>
    %107 = arith.truncf %106 : vector<8x32xf32> to vector<8x32xbf16>
    %c0_39 = arith.constant 0 : index
    %c0_40 = arith.constant 0 : index
    %c0_41 = arith.constant 0 : index
    %108 = vector.load %arg9[%c0_39, %c0_40, %c0_41] : memref<2x32x128xbf16, #tpu.memory_space<vmem>>, vector<1x32x128xbf16>
    %109 = vector.shape_cast %108 : vector<1x32x128xbf16> to vector<32x128xbf16>
    %cst_42 = arith.constant dense<0.000000e+00> : vector<8x128xf32>
    %110 = tpu.matmul %107, %109, %cst_42 {dimension_numbers = #tpu.dot_dimension_numbers<[1], [0], [0], [1], [0, 0, 1, 1], [], []>} : vector<8x32xbf16>, vector<32x128xbf16>, vector<8x128xf32> -> vector<8x128xf32>
    %111 = vector.extract_strided_slice %110 {offsets = [0, 0], sizes = [8, 64], strides = [1, 1]} : vector<8x128xf32> to vector<8x64xf32>
    %cst_43 = arith.constant 5.000000e-01 : f32
    %112 = vector.broadcast %cst_43 : f32 to vector<8x64xf32>
    %113 = arith.mulf %112, %111 : vector<8x64xf32>
    %cst_44 = arith.constant 4.471500e-02 : f32
    %114 = vector.broadcast %cst_44 : f32 to vector<8x64xf32>
    %115 = arith.mulf %114, %111 : vector<8x64xf32>
    %116 = arith.mulf %115, %111 : vector<8x64xf32>
    %117 = arith.mulf %116, %111 : vector<8x64xf32>
    %118 = arith.addf %111, %117 : vector<8x64xf32>
    %cst_45 = arith.constant 0.797884583 : f32
    %119 = vector.broadcast %cst_45 : f32 to vector<8x64xf32>
    %120 = arith.mulf %119, %118 : vector<8x64xf32>
    %121 = math.tanh %120 : vector<8x64xf32>
    %cst_46 = arith.constant 1.000000e+00 : f32
    %122 = vector.broadcast %cst_46 : f32 to vector<8x64xf32>
    %123 = arith.addf %122, %121 : vector<8x64xf32>
    %124 = arith.mulf %113, %123 : vector<8x64xf32>
    %125 = vector.extract_strided_slice %110 {offsets = [0, 64], sizes = [8, 64], strides = [1, 1]} : vector<8x128xf32> to vector<8x64xf32>
    %126 = arith.mulf %124, %125 : vector<8x64xf32>
    %127 = arith.truncf %126 : vector<8x64xf32> to vector<8x64xbf16>
    %c0_47 = arith.constant 0 : index
    %c0_48 = arith.constant 0 : index
    %c0_49 = arith.constant 0 : index
    %128 = vector.load %arg10[%c0_47, %c0_48, %c0_49] : memref<2x64x32xbf16, #tpu.memory_space<vmem>>, vector<1x64x32xbf16>
    %129 = vector.shape_cast %128 : vector<1x64x32xbf16> to vector<64x32xbf16>
    %cst_50 = arith.constant dense<0.000000e+00> : vector<8x32xf32>
    %130 = tpu.matmul %127, %129, %cst_50 {dimension_numbers = #tpu.dot_dimension_numbers<[1], [0], [0], [1], [0, 0, 1, 1], [], []>} : vector<8x64xbf16>, vector<64x32xbf16>, vector<8x32xf32> -> vector<8x32xf32>
    %131 = arith.addf %90, %130 : vector<8x32xf32>
    %c1 = arith.constant 1 : index
    %c0_51 = arith.constant 0 : index
    %c0_52 = arith.constant 0 : index
    %132 = vector.load %arg5[%c1, %c0_51, %c0_52] : memref<2x1x32xf32, #tpu.memory_space<vmem>>, vector<1x1x32xf32>
    %133 = vector.shape_cast %132 : vector<1x1x32xf32> to vector<1x32xf32>
    %134 = arith.mulf %131, %131 : vector<8x32xf32>
    %cst_53 = arith.constant dense<0.000000e+00> : vector<8xf32>
    %135 = vector.multi_reduction <add>, %134, %cst_53 [1] : vector<8x32xf32> to vector<8xf32>
    %136 = vector.shape_cast %135 : vector<8xf32> to vector<8x1xf32>
    %cst_54 = arith.constant 3.200000e+01 : f32
    %137 = vector.broadcast %cst_54 : f32 to vector<8x1xf32>
    %138 = arith.divf %136, %137 : vector<8x1xf32>
    %cst_55 = arith.constant 9.99999997E-7 : f32
    %139 = vector.broadcast %cst_55 : f32 to vector<8x1xf32>
    %140 = arith.addf %138, %139 : vector<8x1xf32>
    %141 = math.rsqrt %140 : vector<8x1xf32>
    %142 = vector.broadcast %141 : vector<8x1xf32> to vector<8x32xf32>
    %143 = arith.mulf %131, %142 : vector<8x32xf32>
    %cst_56 = arith.constant 1.000000e+00 : f32
    %144 = vector.broadcast %cst_56 : f32 to vector<1x32xf32>
    %145 = arith.addf %144, %133 : vector<1x32xf32>
    %146 = vector.broadcast %145 : vector<1x32xf32> to vector<8x32xf32>
    %147 = arith.mulf %143, %146 : vector<8x32xf32>
    %148 = arith.truncf %147 : vector<8x32xf32> to vector<8x32xbf16>
    %c1_57 = arith.constant 1 : index
    %c0_58 = arith.constant 0 : index
    %c0_59 = arith.constant 0 : index
    %149 = vector.load %arg6[%c1_57, %c0_58, %c0_59] : memref<2x32x224xbf16, #tpu.memory_space<vmem>>, vector<1x32x224xbf16>
    %150 = vector.shape_cast %149 : vector<1x32x224xbf16> to vector<32x224xbf16>
    %cst_60 = arith.constant dense<0.000000e+00> : vector<8x224xf32>
    %151 = tpu.matmul %148, %150, %cst_60 {dimension_numbers = #tpu.dot_dimension_numbers<[1], [0], [0], [1], [0, 0, 1, 1], [], []>} : vector<8x32xbf16>, vector<32x224xbf16>, vector<8x224xf32> -> vector<8x224xf32>
    %152 = vector.extract_strided_slice %151 {offsets = [0, 0], sizes = [8, 64], strides = [1, 1]} : vector<8x224xf32> to vector<8x64xf32>
    %153 = arith.mulf %152, %3 : vector<8x64xf32>
    %154 = vector.extract_strided_slice %151 {offsets = [0, 64], sizes = [8, 64], strides = [1, 1]} : vector<8x224xf32> to vector<8x64xf32>
    %155 = arith.mulf %154, %5 : vector<8x64xf32>
    %156 = arith.addf %153, %155 : vector<8x64xf32>
    %157 = vector.extract_strided_slice %151 {offsets = [0, 128], sizes = [8, 32], strides = [1, 1]} : vector<8x224xf32> to vector<8x32xf32>
    %158 = arith.mulf %157, %6 : vector<8x32xf32>
    %159 = vector.extract_strided_slice %151 {offsets = [0, 160], sizes = [8, 32], strides = [1, 1]} : vector<8x224xf32> to vector<8x32xf32>
    %160 = arith.mulf %159, %7 : vector<8x32xf32>
    %161 = arith.addf %158, %160 : vector<8x32xf32>
    %162 = vector.extract_strided_slice %151 {offsets = [0, 192], sizes = [8, 32], strides = [1, 1]} : vector<8x224xf32> to vector<8x32xf32>
    %163 = vector.extract_strided_slice %161 {offsets = [0, 0], sizes = [8, 16], strides = [1, 1]} : vector<8x32xf32> to vector<8x16xf32>
    %164 = vector.extract_strided_slice %161 {offsets = [0, 16], sizes = [8, 16], strides = [1, 1]} : vector<8x32xf32> to vector<8x16xf32>
    %165 = vector.extract_strided_slice %162 {offsets = [0, 0], sizes = [8, 16], strides = [1, 1]} : vector<8x32xf32> to vector<8x16xf32>
    %166 = vector.extract_strided_slice %162 {offsets = [0, 16], sizes = [8, 16], strides = [1, 1]} : vector<8x32xf32> to vector<8x16xf32>
    %167 = vector.extract_strided_slice %156 {offsets = [0, 0], sizes = [8, 16], strides = [1, 1]} : vector<8x64xf32> to vector<8x16xf32>
    %168 = vector.extract_strided_slice %156 {offsets = [0, 16], sizes = [8, 16], strides = [1, 1]} : vector<8x64xf32> to vector<8x16xf32>
    %169 = vector.extract_strided_slice %156 {offsets = [0, 32], sizes = [8, 16], strides = [1, 1]} : vector<8x64xf32> to vector<8x16xf32>
    %170 = vector.extract_strided_slice %156 {offsets = [0, 48], sizes = [8, 16], strides = [1, 1]} : vector<8x64xf32> to vector<8x16xf32>
    %171 = vector.shape_cast %167 : vector<8x16xf32> to vector<1x8x16xf32>
    %172 = vector.shape_cast %168 : vector<8x16xf32> to vector<1x8x16xf32>
    %173 = vector.shape_cast %169 : vector<8x16xf32> to vector<1x8x16xf32>
    %174 = vector.shape_cast %170 : vector<8x16xf32> to vector<1x8x16xf32>
    %175 = tpu.concatenate %171, %172, %173, %174 in 0 : vector<1x8x16xf32>, vector<1x8x16xf32>, vector<1x8x16xf32>, vector<1x8x16xf32> -> vector<4x8x16xf32>
    %176 = arith.truncf %175 : vector<4x8x16xf32> to vector<4x8x16xbf16>
    %177 = vector.shape_cast %163 : vector<8x16xf32> to vector<1x8x16xf32>
    %178 = vector.shape_cast %163 : vector<8x16xf32> to vector<1x8x16xf32>
    %179 = vector.shape_cast %164 : vector<8x16xf32> to vector<1x8x16xf32>
    %180 = vector.shape_cast %164 : vector<8x16xf32> to vector<1x8x16xf32>
    %181 = tpu.concatenate %177, %178, %179, %180 in 0 : vector<1x8x16xf32>, vector<1x8x16xf32>, vector<1x8x16xf32>, vector<1x8x16xf32> -> vector<4x8x16xf32>
    %182 = arith.truncf %181 : vector<4x8x16xf32> to vector<4x8x16xbf16>
    %183 = vector.shape_cast %165 : vector<8x16xf32> to vector<1x8x16xf32>
    %184 = vector.shape_cast %165 : vector<8x16xf32> to vector<1x8x16xf32>
    %185 = vector.shape_cast %166 : vector<8x16xf32> to vector<1x8x16xf32>
    %186 = vector.shape_cast %166 : vector<8x16xf32> to vector<1x8x16xf32>
    %187 = tpu.concatenate %183, %184, %185, %186 in 0 : vector<1x8x16xf32>, vector<1x8x16xf32>, vector<1x8x16xf32>, vector<1x8x16xf32> -> vector<4x8x16xf32>
    %188 = arith.truncf %187 : vector<4x8x16xf32> to vector<4x8x16xbf16>
    "tpu.trace_start"() <{level = 10 : i32, message = "zid,zjd->zij"}> : () -> ()
    %cst_61 = arith.constant dense<0.000000e+00> : vector<4x8x8xf32>
    %189 = tpu.matmul %176, %182, %cst_61 {dimension_numbers = #tpu.dot_dimension_numbers<[2], [2], [1], [1], [0, 0, 0, 1, 1, 1], [0], [0]>} : vector<4x8x16xbf16>, vector<4x8x16xbf16>, vector<4x8x8xf32> -> vector<4x8x8xf32>
    "tpu.trace_stop"() : () -> ()
    %190 = vector.shape_cast %1 : vector<8x8xf32> to vector<1x8x8xf32>
    %191 = vector.broadcast %190 : vector<1x8x8xf32> to vector<4x8x8xf32>
    %192 = arith.addf %189, %191 : vector<4x8x8xf32>
    %cst_62 = arith.constant dense<0xFF800000> : vector<4x8xf32>
    %193 = vector.multi_reduction <maximumf>, %192, %cst_62 [2] : vector<4x8x8xf32> to vector<4x8xf32>
    %194 = vector.shape_cast %193 : vector<4x8xf32> to vector<4x8x1xf32>
    %195 = vector.broadcast %194 : vector<4x8x1xf32> to vector<4x8x8xf32>
    %196 = arith.subf %192, %195 : vector<4x8x8xf32>
    %197 = math.exp %196 : vector<4x8x8xf32>
    %cst_63 = arith.constant dense<0.000000e+00> : vector<4x8xf32>
    %198 = vector.multi_reduction <add>, %197, %cst_63 [2] : vector<4x8x8xf32> to vector<4x8xf32>
    %199 = vector.shape_cast %198 : vector<4x8xf32> to vector<4x8x1xf32>
    %200 = tpu.reciprocal %199 {approx = true} : vector<4x8x1xf32> -> vector<4x8x1xf32>
    %201 = vector.broadcast %200 : vector<4x8x1xf32> to vector<4x8x8xf32>
    %202 = arith.mulf %197, %201 : vector<4x8x8xf32>
    %203 = arith.truncf %202 : vector<4x8x8xf32> to vector<4x8x8xbf16>
    "tpu.trace_start"() <{level = 10 : i32, message = "zij,zjd->zid"}> : () -> ()
    %cst_64 = arith.constant dense<0.000000e+00> : vector<4x8x16xf32>
    %204 = tpu.matmul %203, %188, %cst_64 {dimension_numbers = #tpu.dot_dimension_numbers<[2], [1], [1], [2], [0, 0, 0, 1, 1, 2], [0], [0]>} : vector<4x8x8xbf16>, vector<4x8x16xbf16>, vector<4x8x16xf32> -> vector<4x8x16xf32>
    "tpu.trace_stop"() : () -> ()
    %205 = arith.truncf %204 : vector<4x8x16xf32> to vector<4x8x16xbf16>
    %c1_65 = arith.constant 1 : index
    %c0_66 = arith.constant 0 : index
    %c0_67 = arith.constant 0 : index
    %c0_68 = arith.constant 0 : index
    %206 = vector.load %arg7[%c1_65, %c0_66, %c0_67, %c0_68] : memref<2x4x16x32xbf16, #tpu.memory_space<vmem>>, vector<1x4x16x32xbf16>
    %207 = vector.shape_cast %206 : vector<1x4x16x32xbf16> to vector<4x16x32xbf16>
    "tpu.trace_start"() <{level = 10 : i32, message = "zid,zdh->zih"}> : () -> ()
    %cst_69 = arith.constant dense<0.000000e+00> : vector<4x8x32xf32>
    %208 = tpu.matmul %205, %207, %cst_69 {dimension_numbers = #tpu.dot_dimension_numbers<[2], [1], [1], [2], [0, 0, 0, 1, 1, 2], [0], [0]>} : vector<4x8x16xbf16>, vector<4x16x32xbf16>, vector<4x8x32xf32> -> vector<4x8x32xf32>
    "tpu.trace_stop"() : () -> ()
    %cst_70 = arith.constant dense<0.000000e+00> : vector<8x32xf32>
    %209 = vector.multi_reduction <add>, %208, %cst_70 [0] : vector<4x8x32xf32> to vector<8x32xf32>
    %210 = arith.addf %131, %209 : vector<8x32xf32>
    %c1_71 = arith.constant 1 : index
    %c0_72 = arith.constant 0 : index
    %c0_73 = arith.constant 0 : index
    %211 = vector.load %arg8[%c1_71, %c0_72, %c0_73] : memref<2x1x32xf32, #tpu.memory_space<vmem>>, vector<1x1x32xf32>
    %212 = vector.shape_cast %211 : vector<1x1x32xf32> to vector<1x32xf32>
    %213 = arith.mulf %210, %210 : vector<8x32xf32>
    %cst_74 = arith.constant dense<0.000000e+00> : vector<8xf32>
    %214 = vector.multi_reduction <add>, %213, %cst_74 [1] : vector<8x32xf32> to vector<8xf32>
    %215 = vector.shape_cast %214 : vector<8xf32> to vector<8x1xf32>
    %cst_75 = arith.constant 3.200000e+01 : f32
    %216 = vector.broadcast %cst_75 : f32 to vector<8x1xf32>
    %217 = arith.divf %215, %216 : vector<8x1xf32>
    %cst_76 = arith.constant 9.99999997E-7 : f32
    %218 = vector.broadcast %cst_76 : f32 to vector<8x1xf32>
    %219 = arith.addf %217, %218 : vector<8x1xf32>
    %220 = math.rsqrt %219 : vector<8x1xf32>
    %221 = vector.broadcast %220 : vector<8x1xf32> to vector<8x32xf32>
    %222 = arith.mulf %210, %221 : vector<8x32xf32>
    %cst_77 = arith.constant 1.000000e+00 : f32
    %223 = vector.broadcast %cst_77 : f32 to vector<1x32xf32>
    %224 = arith.addf %223, %212 : vector<1x32xf32>
    %225 = vector.broadcast %224 : vector<1x32xf32> to vector<8x32xf32>
    %226 = arith.mulf %222, %225 : vector<8x32xf32>
    %227 = arith.truncf %226 : vector<8x32xf32> to vector<8x32xbf16>
    %c1_78 = arith.constant 1 : index
    %c0_79 = arith.constant 0 : index
    %c0_80 = arith.constant 0 : index
    %228 = vector.load %arg9[%c1_78, %c0_79, %c0_80] : memref<2x32x128xbf16, #tpu.memory_space<vmem>>, vector<1x32x128xbf16>
    %229 = vector.shape_cast %228 : vector<1x32x128xbf16> to vector<32x128xbf16>
    %cst_81 = arith.constant dense<0.000000e+00> : vector<8x128xf32>
    %230 = tpu.matmul %227, %229, %cst_81 {dimension_numbers = #tpu.dot_dimension_numbers<[1], [0], [0], [1], [0, 0, 1, 1], [], []>} : vector<8x32xbf16>, vector<32x128xbf16>, vector<8x128xf32> -> vector<8x128xf32>
    %231 = vector.extract_strided_slice %230 {offsets = [0, 0], sizes = [8, 64], strides = [1, 1]} : vector<8x128xf32> to vector<8x64xf32>
    %cst_82 = arith.constant 5.000000e-01 : f32
    %232 = vector.broadcast %cst_82 : f32 to vector<8x64xf32>
    %233 = arith.mulf %232, %231 : vector<8x64xf32>
    %cst_83 = arith.constant 4.471500e-02 : f32
    %234 = vector.broadcast %cst_83 : f32 to vector<8x64xf32>
    %235 = arith.mulf %234, %231 : vector<8x64xf32>
    %236 = arith.mulf %235, %231 : vector<8x64xf32>
    %237 = arith.mulf %236, %231 : vector<8x64xf32>
    %238 = arith.addf %231, %237 : vector<8x64xf32>
    %cst_84 = arith.constant 0.797884583 : f32
    %239 = vector.broadcast %cst_84 : f32 to vector<8x64xf32>
    %240 = arith.mulf %239, %238 : vector<8x64xf32>
    %241 = math.tanh %240 : vector<8x64xf32>
    %cst_85 = arith.constant 1.000000e+00 : f32
    %242 = vector.broadcast %cst_85 : f32 to vector<8x64xf32>
    %243 = arith.addf %242, %241 : vector<8x64xf32>
    %244 = arith.mulf %233, %243 : vector<8x64xf32>
    %245 = vector.extract_strided_slice %230 {offsets = [0, 64], sizes = [8, 64], strides = [1, 1]} : vector<8x128xf32> to vector<8x64xf32>
    %246 = arith.mulf %244, %245 : vector<8x64xf32>
    %247 = arith.truncf %246 : vector<8x64xf32> to vector<8x64xbf16>
    %c1_86 = arith.constant 1 : index
    %c0_87 = arith.constant 0 : index
    %c0_88 = arith.constant 0 : index
    %248 = vector.load %arg10[%c1_86, %c0_87, %c0_88] : memref<2x64x32xbf16, #tpu.memory_space<vmem>>, vector<1x64x32xbf16>
    %249 = vector.shape_cast %248 : vector<1x64x32xbf16> to vector<64x32xbf16>
    %cst_89 = arith.constant dense<0.000000e+00> : vector<8x32xf32>
    %250 = tpu.matmul %247, %249, %cst_89 {dimension_numbers = #tpu.dot_dimension_numbers<[1], [0], [0], [1], [0, 0, 1, 1], [], []>} : vector<8x64xbf16>, vector<64x32xbf16>, vector<8x32xf32> -> vector<8x32xf32>
    %251 = arith.addf %210, %250 : vector<8x32xf32>
    %c0_90 = arith.constant 0 : index
    %c0_91 = arith.constant 0 : index
    %252 = vector.load %arg11[%c0_90, %c0_91] : memref<1x32xf32, #tpu.memory_space<vmem>>, vector<1x32xf32>
    %253 = arith.mulf %251, %251 : vector<8x32xf32>
    %cst_92 = arith.constant dense<0.000000e+00> : vector<8xf32>
    %254 = vector.multi_reduction <add>, %253, %cst_92 [1] : vector<8x32xf32> to vector<8xf32>
    %255 = vector.shape_cast %254 : vector<8xf32> to vector<8x1xf32>
    %cst_93 = arith.constant 3.200000e+01 : f32
    %256 = vector.broadcast %cst_93 : f32 to vector<8x1xf32>
    %257 = arith.divf %255, %256 : vector<8x1xf32>
    %cst_94 = arith.constant 9.99999997E-7 : f32
    %258 = vector.broadcast %cst_94 : f32 to vector<8x1xf32>
    %259 = arith.addf %257, %258 : vector<8x1xf32>
    %260 = math.rsqrt %259 : vector<8x1xf32>
    %261 = vector.broadcast %260 : vector<8x1xf32> to vector<8x32xf32>
    %262 = arith.mulf %251, %261 : vector<8x32xf32>
    %cst_95 = arith.constant 1.000000e+00 : f32
    %263 = vector.broadcast %cst_95 : f32 to vector<1x32xf32>
    %264 = arith.addf %263, %252 : vector<1x32xf32>
    %265 = vector.broadcast %264 : vector<1x32xf32> to vector<8x32xf32>
    %266 = arith.mulf %262, %265 : vector<8x32xf32>
    %c0_96 = arith.constant 0 : index
    %c0_97 = arith.constant 0 : index
    %c0_98 = arith.constant 0 : index
    %267 = vector.load %arg12[%c0_96, %c0_97, %c0_98] : memref<1x8x32xf32, #tpu.memory_space<vmem>>, vector<1x8x32xf32>
    %268 = vector.shape_cast %267 : vector<1x8x32xf32> to vector<8x32xf32>
    %269 = vector.shape_cast %266 : vector<8x32xf32> to vector<1x8x32xf32>
    tpu.vector_store %arg12[%c0_96, %c0_97, %c0_98], %269 {strides = array<i32>} : memref<1x8x32xf32, #tpu.memory_space<vmem>>, vector<1x8x32xf32>,
    return
  }
  func.func @transform_0(%arg0: i32) -> (i32, i32, i32) {
    %c0_i32 = arith.constant 0 : i32
    %c0_i32_0 = arith.constant 0 : i32
    %c0_i32_1 = arith.constant 0 : i32
    return %arg0, %c0_i32, %c0_i32_0 : i32, i32, i32
  }
  func.func @transform_1(%arg0: i32) -> (i32, i32, i32) {
    %c0_i32 = arith.constant 0 : i32
    %c0_i32_0 = arith.constant 0 : i32
    %c0_i32_1 = arith.constant 0 : i32
    return %arg0, %c0_i32, %c0_i32_0 : i32, i32, i32
  }
  func.func @transform_2(%arg0: i32) -> (i32, i32, i32) {
    %c0_i32 = arith.constant 0 : i32
    %c0_i32_0 = arith.constant 0 : i32
    %c0_i32_1 = arith.constant 0 : i32
    return %arg0, %c0_i32, %c0_i32_0 : i32, i32, i32
  }
  func.func @transform_3(%arg0: i32) -> (i32, i32, i32) {
    %c0_i32 = arith.constant 0 : i32
    %c0_i32_0 = arith.constant 0 : i32
    %c0_i32_1 = arith.constant 0 : i32
    return %arg0, %c0_i32, %c0_i32_0 : i32, i32, i32
  }
  func.func @transform_4(%arg0: i32) -> (i32, i32, i32) {
    %c0_i32 = arith.constant 0 : i32
    %c0_i32_0 = arith.constant 0 : i32
    %c0_i32_1 = arith.constant 0 : i32
    %c0_i32_2 = arith.constant 0 : i32
    return %c0_i32, %c0_i32_0, %c0_i32_1 : i32, i32, i32
  }
  func.func @transform_5(%arg0: i32) -> (i32, i32, i32) {
    %c0_i32 = arith.constant 0 : i32
    %c0_i32_0 = arith.constant 0 : i32
    %c0_i32_1 = arith.constant 0 : i32
    %c0_i32_2 = arith.constant 0 : i32
    return %c0_i32, %c0_i32_0, %c0_i32_1 : i32, i32, i32
  }
  func.func @transform_6(%arg0: i32) -> (i32, i32, i32, i32) {
    %c0_i32 = arith.constant 0 : i32
    %c0_i32_0 = arith.constant 0 : i32
    %c0_i32_1 = arith.constant 0 : i32
    %c0_i32_2 = arith.constant 0 : i32
    %c0_i32_3 = arith.constant 0 : i32
    return %c0_i32, %c0_i32_0, %c0_i32_1, %c0_i32_2 : i32, i32, i32, i32
  }
  func.func @transform_7(%arg0: i32) -> (i32, i32, i32) {
    %c0_i32 = arith.constant 0 : i32
    %c0_i32_0 = arith.constant 0 : i32
    %c0_i32_1 = arith.constant 0 : i32
    %c0_i32_2 = arith.constant 0 : i32
    return %c0_i32, %c0_i32_0, %c0_i32_1 : i32, i32, i32
  }
  func.func @transform_8(%arg0: i32) -> (i32, i32, i32) {
    %c0_i32 = arith.constant 0 : i32
    %c0_i32_0 = arith.constant 0 : i32
    %c0_i32_1 = arith.constant 0 : i32
    %c0_i32_2 = arith.constant 0 : i32
    return %c0_i32, %c0_i32_0, %c0_i32_1 : i32, i32, i32
  }
  func.func @transform_9(%arg0: i32) -> (i32, i32, i32) {
    %c0_i32 = arith.constant 0 : i32
    %c0_i32_0 = arith.constant 0 : i32
    %c0_i32_1 = arith.constant 0 : i32
    %c0_i32_2 = arith.constant 0 : i32
    return %c0_i32, %c0_i32_0, %c0_i32_1 : i32, i32, i32
  }
  func.func @transform_10(%arg0: i32) -> (i32, i32) {
    %c0_i32 = arith.constant 0 : i32
    %c0_i32_0 = arith.constant 0 : i32
    %c0_i32_1 = arith.constant 0 : i32
    return %c0_i32, %c0_i32_0 : i32, i32
  }
  func.func @transform_11(%arg0: i32) -> (i32, i32, i32) {
    %c0_i32 = arith.constant 0 : i32
    %c0_i32_0 = arith.constant 0 : i32
    %c0_i32_1 = arith.constant 0 : i32
    return %arg0, %c0_i32, %c0_i32_0 : i32, i32, i32
  }
}

</mosaic_0001>

<llo_original>
// kernel: tpu_custom_call.1
$region0: #{tpu_custom_call.1}
  #allocation0 [shape = 'u32[]', space=smem, size = 0x4, offset = 0x4, fixed_abs, tag = 'smem constant byte address 0x4 - core index']
  #allocation1 [shape = 'u32[144,128]{1,0:T(1,128)}', space=vmem, size = 0x12000, scoped, tag = 'internal scratch']
  %s0 = inlined_call_operand.hbm [shape: f32[2,8,32], index: 0, kind: input, shape index: {}]
  %s1 = inlined_call_operand.hbm [shape: f32[2,8,8], index: 1, kind: input, shape index: {}]
  %s2 = inlined_call_operand.hbm [shape: f32[2,8,64], index: 2, kind: input, shape index: {}]
  %s3 = inlined_call_operand.hbm [shape: f32[2,8,64], index: 3, kind: input, shape index: {}]
  %s4 = inlined_call_operand.vmem [shape: f32[2,1,32], index: 4, kind: input, shape index: {}]
  %s5 = inlined_call_operand.vmem [shape: bf16[2,32,224], index: 5, kind: input, shape index: {}]
  %s6 = inlined_call_operand.hbm [shape: bf16[2,4,16,32], index: 6, kind: input, shape index: {}]
  %s7 = inlined_call_operand.vmem [shape: f32[2,1,32], index: 7, kind: input, shape index: {}]
  %s8 = inlined_call_operand.vmem [shape: bf16[2,32,128], index: 8, kind: input, shape index: {}]
  %s9 = inlined_call_operand.vmem [shape: bf16[2,64,32], index: 9, kind: input, shape index: {}]
  %s10 = inlined_call_operand.vmem [shape: f32[1,32], index: 10, kind: input, shape index: {}]
  %s11 = inlined_call_operand.hbm [shape: f32[2,8,32], index: 11, kind: output, shape index: {}]
  %s12 = sld [smem:[#allocation0]]
  $region97: #{tpu_custom_call.1} parent=0
    _
  %s14 = ssub.s32 1, %s12
  %s15 = scalar_select 0, %s14, %s12
  $region1: #{tpu_custom_call.1} parent=0
    #allocation2 [shape = 'u8[8192]{0}', space=vmem, size = 0x2000, scoped, tag = 'input window, operand 0']
    #allocation3 [shape = 's32[2]{0}', space=sflag, size = 0x8, scoped, tag = 'scoped memory for tpu_custom_call.1']
    #allocation4 [shape = 's32[2]{0}', space=sflag, size = 0x8, scoped, tag = 'scoped memory for tpu_custom_call.1']
    #allocation5 [shape = 'u8[8192]{0}', space=vmem, size = 0x2000, scoped, tag = 'input window, operand 1']
    #allocation6 [shape = 's32[2]{0}', space=sflag, size = 0x8, scoped, tag = 'scoped memory for tpu_custom_call.1']
    #allocation7 [shape = 'u8[8192]{0}', space=vmem, size = 0x2000, scoped, tag = 'input window, operand 2']
    #allocation8 [shape = 'u8[8192]{0}', space=vmem, size = 0x2000, scoped, tag = 'input window, operand 3']
    #allocation9 [shape = 's32[2]{0}', space=sflag, size = 0x8, scoped, tag = 'scoped memory for tpu_custom_call.1']
    #allocation10 [shape = 'u8[32768]{0}', space=vmem, size = 0x8000, scoped, tag = 'input window, operand 6, single buffered']
    #allocation11 [shape = 'u8[8192]{0}', space=vmem, size = 0x2000, scoped, tag = 'output window, operand 0']
    %16 = vsyncpa [#allocation3], 0
    %s17 = scalar_lea.sflag [#allocation3], 1
    %18 = vsyncpa %s17, 0
    %19 = vsyncpa [#allocation6], 0
    %s20 = scalar_lea.sflag [#allocation6], 1
    %21 = vsyncpa %s20, 0
    %22 = vsyncpa [#allocation9], 0
    %s23 = scalar_lea.sflag [#allocation9], 1
    %24 = vsyncpa %s23, 0
    %25 = vsyncpa [#allocation4], 0
    %s26 = scalar_lea.sflag [#allocation4], 1
    %27 = vsyncpa %s26, 0
    loop: start=0, step=1, limit=4
    $region2: #{tpu_custom_call.1} parent=1 // loop_pre_header
      _
    $region3: #{tpu_custom_call.1} parent=1 // loop_header
      %s29 = sphi 0, %s33
      %p30 = scmp.ge.s32.totalorder %s29, 4
      %s39 = sphi 0, %s41
      %s42 = sphi 0, %s39
      %s43 = sphi 0, %s42
      %s59 = sphi 0, %s43
      %s65 = sphi 0, %s67
      %s68 = sphi 0, %s65
      %s69 = sphi 0, %s68
      %s85 = sphi 0, %s69
      %s91 = sphi 0, %s93
      %s94 = sphi 0, %s91
      %s95 = sphi 0, %s94
      %s111 = sphi 0, %s95
      %s117 = sphi 0, %s119
      %s120 = sphi 0, %s117
      %s121 = sphi 0, %s120
      %s137 = sphi 0, %s121
      %s141 = sphi 0, %s141
      %s143 = sphi 0, %s141
      %s144 = sphi 0, %s143
      %s158 = sphi 0, %s144
      %s162 = sphi 0, %s162
      %s164 = sphi 0, %s162
      %s165 = sphi 0, %s164
      %s179 = sphi 0, %s165
      %s183 = sphi 0, %s183
      %s185 = sphi 0, %s183
      %s186 = sphi 0, %s185
      %s200 = sphi 0, %s186
      %s204 = sphi 0, %s204
      %s206 = sphi 0, %s204
      %s207 = sphi 0, %s206
      %s221 = sphi 0, %s207
      %s225 = sphi 0, %s225
      %s227 = sphi 0, %s225
      %s228 = sphi 0, %s227
      %s242 = sphi 0, %s228
      %s246 = sphi 0, %s246
      %s248 = sphi 0, %s246
      %s249 = sphi 0, %s248
      %s263 = sphi 0, %s249
      %s267 = sphi 0, %s267
      %s269 = sphi 0, %s267
      %s270 = sphi 0, %s269
      %s284 = sphi 0, %s270
      %s290 = sphi 0, %s292
      %s293 = sphi 0, %s290
      %s294 = sphi 0, %s293
      %s310 = sphi 0, %s294
    $region4: #{tpu_custom_call.1} parent=1 // loop_header_branch
      %32 = sbr.rel (%p30) target = $region8
    $region5: #{tpu_custom_call.1} parent=1 // loop_body
      %s34 = ssub.s32 %s29, 1
      %s35 = ssub.s32 %s29, 2
      %s36 = sadd.s32 %s29, 1
      %s37 = ssub.s32 %s29, %s36
      %p38 = scmp.eq.s32.totalorder %s37, 0
      %s40 = sadd.s32 %s39, 1
      %s41 = scalar_select %p38, %s39, %s40
      %p44 = pneg %p38
      %p45 = scmp.eq.s32.totalorder %s29, 1
      %p46 = por %p44, %p45
      %p47 = scmp.ne.s32.totalorder %s39, %s42
      %p48 = scmp.eq.s32.totalorder %s29, 0
      %p49 = por %p47, %p48
      %p50 = scmp.ne.s32.totalorder %s39, %s42
      %p51 = scmp.eq.s32.totalorder %s34, 1
      %p52 = por %p50, %p51
      %p53 = scmp.ne.s32.totalorder %s42, %s43
      %p54 = scmp.eq.s32.totalorder %s34, 0
      %p55 = por %p53, %p54
      %p56 = scmp.ne.s32.totalorder %s42, %s43
      %p57 = scmp.eq.s32.totalorder %s35, 1
      %p58 = por %p56, %p57
      %p60 = scmp.ne.s32.totalorder %s43, %s59
      %p61 = scmp.eq.s32.totalorder %s35, 0
      %p62 = por %p60, %p61
      %s63 = ssub.s32 %s29, %s36
      %p64 = scmp.eq.s32.totalorder %s63, 0
      %s66 = sadd.s32 %s65, 1
      %s67 = scalar_select %p64, %s65, %s66
      %p70 = pneg %p64
      %p71 = scmp.eq.s32.totalorder %s29, 1
      %p72 = por %p70, %p71
      %p73 = scmp.ne.s32.totalorder %s65, %s68
      %p74 = scmp.eq.s32.totalorder %s29, 0
      %p75 = por %p73, %p74
      %p76 = scmp.ne.s32.totalorder %s65, %s68
      %p77 = scmp.eq.s32.totalorder %s34, 1
      %p78 = por %p76, %p77
      %p79 = scmp.ne.s32.totalorder %s68, %s69
      %p80 = scmp.eq.s32.totalorder %s34, 0
      %p81 = por %p79, %p80
      %p82 = scmp.ne.s32.totalorder %s68, %s69
      %p83 = scmp.eq.s32.totalorder %s35, 1
      %p84 = por %p82, %p83
      %p86 = scmp.ne.s32.totalorder %s69, %s85
      %p87 = scmp.eq.s32.totalorder %s35, 0
      %p88 = por %p86, %p87
      %s89 = ssub.s32 %s29, %s36
      %p90 = scmp.eq.s32.totalorder %s89, 0
      %s92 = sadd.s32 %s91, 1
      %s93 = scalar_select %p90, %s91, %s92
      %p96 = pneg %p90
      %p97 = scmp.eq.s32.totalorder %s29, 1
      %p98 = por %p96, %p97
      %p99 = scmp.ne.s32.totalorder %s91, %s94
      %p100 = scmp.eq.s32.totalorder %s29, 0
      %p101 = por %p99, %p100
      %p102 = scmp.ne.s32.totalorder %s91, %s94
      %p103 = scmp.eq.s32.totalorder %s34, 1
      %p104 = por %p102, %p103
      %p105 = scmp.ne.s32.totalorder %s94, %s95
      %p106 = scmp.eq.s32.totalorder %s34, 0
      %p107 = por %p105, %p106
      %p108 = scmp.ne.s32.totalorder %s94, %s95
      %p109 = scmp.eq.s32.totalorder %s35, 1
      %p110 = por %p108, %p109
      %p112 = scmp.ne.s32.totalorder %s95, %s111
      %p113 = scmp.eq.s32.totalorder %s35, 0
      %p114 = por %p112, %p113
      %s115 = ssub.s32 %s29, %s36
      %p116 = scmp.eq.s32.totalorder %s115, 0
      %s118 = sadd.s32 %s117, 1
      %s119 = scalar_select %p116, %s117, %s118
      %p122 = pneg %p116
      %p123 = scmp.eq.s32.totalorder %s29, 1
      %p124 = por %p122, %p123
      %p125 = scmp.ne.s32.totalorder %s117, %s120
      %p126 = scmp.eq.s32.totalorder %s29, 0
      %p127 = por %p125, %p126
      %p128 = scmp.ne.s32.totalorder %s117, %s120
      %p129 = scmp.eq.s32.totalorder %s34, 1
      %p130 = por %p128, %p129
      %p131 = scmp.ne.s32.totalorder %s120, %s121
      %p132 = scmp.eq.s32.totalorder %s34, 0
      %p133 = por %p131, %p132
      %p134 = scmp.ne.s32.totalorder %s120, %s121
      %p135 = scmp.eq.s32.totalorder %s35, 1
      %p136 = por %p134, %p135
      %p138 = scmp.ne.s32.totalorder %s121, %s137
      %p139 = scmp.eq.s32.totalorder %s35, 0
      %p140 = por %p138, %p139
      %s142 = sadd.s32 %s141, 1
      %p145 = scmp.eq.s32.totalorder %s29, 1
      %p146 = scmp.ne.s32.totalorder %s141, %s143
      %p147 = scmp.eq.s32.totalorder %s29, 0
      %p148 = por %p146, %p147
      %p149 = scmp.ne.s32.totalorder %s141, %s143
      %p150 = scmp.eq.s32.totalorder %s34, 1
      %p151 = por %p149, %p150
      %p152 = scmp.ne.s32.totalorder %s143, %s144
      %p153 = scmp.eq.s32.totalorder %s34, 0
      %p154 = por %p152, %p153
      %p155 = scmp.ne.s32.totalorder %s143, %s144
      %p156 = scmp.eq.s32.totalorder %s35, 1
      %p157 = por %p155, %p156
      %p159 = scmp.ne.s32.totalorder %s144, %s158
      %p160 = scmp.eq.s32.totalorder %s35, 0
      %p161 = por %p159, %p160
      %s163 = sadd.s32 %s162, 1
      %p166 = scmp.eq.s32.totalorder %s29, 1
      %p167 = scmp.ne.s32.totalorder %s162, %s164
      %p168 = scmp.eq.s32.totalorder %s29, 0
      %p169 = por %p167, %p168
      %p170 = scmp.ne.s32.totalorder %s162, %s164
      %p171 = scmp.eq.s32.totalorder %s34, 1
      %p172 = por %p170, %p171
      %p173 = scmp.ne.s32.totalorder %s164, %s165
      %p174 = scmp.eq.s32.totalorder %s34, 0
      %p175 = por %p173, %p174
      %p176 = scmp.ne.s32.totalorder %s164, %s165
      %p177 = scmp.eq.s32.totalorder %s35, 1
      %p178 = por %p176, %p177
      %p180 = scmp.ne.s32.totalorder %s165, %s179
      %p181 = scmp.eq.s32.totalorder %s35, 0
      %p182 = por %p180, %p181
      %s184 = sadd.s32 %s183, 1
      %p187 = scmp.eq.s32.totalorder %s29, 1
      %p188 = scmp.ne.s32.totalorder %s183, %s185
      %p189 = scmp.eq.s32.totalorder %s29, 0
      %p190 = por %p188, %p189
      %p191 = scmp.ne.s32.totalorder %s183, %s185
      %p192 = scmp.eq.s32.totalorder %s34, 1
      %p193 = por %p191, %p192
      %p194 = scmp.ne.s32.totalorder %s185, %s186
      %p195 = scmp.eq.s32.totalorder %s34, 0
      %p196 = por %p194, %p195
      %p197 = scmp.ne.s32.totalorder %s185, %s186
      %p198 = scmp.eq.s32.totalorder %s35, 1
      %p199 = por %p197, %p198
      %p201 = scmp.ne.s32.totalorder %s186, %s200
      %p202 = scmp.eq.s32.totalorder %s35, 0
      %p203 = por %p201, %p202
      %s205 = sadd.s32 %s204, 1
      %p208 = scmp.eq.s32.totalorder %s29, 1
      %p209 = scmp.ne.s32.totalorder %s204, %s206
      %p210 = scmp.eq.s32.totalorder %s29, 0
      %p211 = por %p209, %p210
      %p212 = scmp.ne.s32.totalorder %s204, %s206
      %p213 = scmp.eq.s32.totalorder %s34, 1
      %p214 = por %p212, %p213
      %p215 = scmp.ne.s32.totalorder %s206, %s207
      %p216 = scmp.eq.s32.totalorder %s34, 0
      %p217 = por %p215, %p216
      %p218 = scmp.ne.s32.totalorder %s206, %s207
      %p219 = scmp.eq.s32.totalorder %s35, 1
      %p220 = por %p218, %p219
      %p222 = scmp.ne.s32.totalorder %s207, %s221
      %p223 = scmp.eq.s32.totalorder %s35, 0
      %p224 = por %p222, %p223
      %s226 = sadd.s32 %s225, 1
      %p229 = scmp.eq.s32.totalorder %s29, 1
      %p230 = scmp.ne.s32.totalorder %s225, %s227
      %p231 = scmp.eq.s32.totalorder %s29, 0
      %p232 = por %p230, %p231
      %p233 = scmp.ne.s32.totalorder %s225, %s227
      %p234 = scmp.eq.s32.totalorder %s34, 1
      %p235 = por %p233, %p234
      %p236 = scmp.ne.s32.totalorder %s227, %s228
      %p237 = scmp.eq.s32.totalorder %s34, 0
      %p238 = por %p236, %p237
      %p239 = scmp.ne.s32.totalorder %s227, %s228
      %p240 = scmp.eq.s32.totalorder %s35, 1
      %p241 = por %p239, %p240
      %p243 = scmp.ne.s32.totalorder %s228, %s242
      %p244 = scmp.eq.s32.totalorder %s35, 0
      %p245 = por %p243, %p244
      %s247 = sadd.s32 %s246, 1
      %p250 = scmp.eq.s32.totalorder %s29, 1
      %p251 = scmp.ne.s32.totalorder %s246, %s248
      %p252 = scmp.eq.s32.totalorder %s29, 0
      %p253 = por %p251, %p252
      %p254 = scmp.ne.s32.totalorder %s246, %s248
      %p255 = scmp.eq.s32.totalorder %s34, 1
      %p256 = por %p254, %p255
      %p257 = scmp.ne.s32.totalorder %s248, %s249
      %p258 = scmp.eq.s32.totalorder %s34, 0
      %p259 = por %p257, %p258
      %p260 = scmp.ne.s32.totalorder %s248, %s249
      %p261 = scmp.eq.s32.totalorder %s35, 1
      %p262 = por %p260, %p261
      %p264 = scmp.ne.s32.totalorder %s249, %s263
      %p265 = scmp.eq.s32.totalorder %s35, 0
      %p266 = por %p264, %p265
      %s268 = sadd.s32 %s267, 1
      %p271 = scmp.eq.s32.totalorder %s29, 1
      %p272 = scmp.ne.s32.totalorder %s267, %s269
      %p273 = scmp.eq.s32.totalorder %s29, 0
      %p274 = por %p272, %p273
      %p275 = scmp.ne.s32.totalorder %s267, %s269
      %p276 = scmp.eq.s32.totalorder %s34, 1
      %p277 = por %p275, %p276
      %p278 = scmp.ne.s32.totalorder %s269, %s270
      %p279 = scmp.eq.s32.totalorder %s34, 0
      %p280 = por %p278, %p279
      %p281 = scmp.ne.s32.totalorder %s269, %s270
      %p282 = scmp.eq.s32.totalorder %s35, 1
      %p283 = por %p281, %p282
      %p285 = scmp.ne.s32.totalorder %s270, %s284
      %p286 = scmp.eq.s32.totalorder %s35, 0
      %p287 = por %p285, %p286
      %s288 = ssub.s32 %s29, %s36
      %p289 = scmp.eq.s32.totalorder %s288, 0
      %s291 = sadd.s32 %s290, 1
      %s292 = scalar_select %p289, %s290, %s291
      %p295 = pneg %p289
      %p296 = scmp.eq.s32.totalorder %s29, 1
      %p297 = por %p295, %p296
      %p298 = scmp.ne.s32.totalorder %s290, %s293
      %p299 = scmp.eq.s32.totalorder %s29, 0
      %p300 = por %p298, %p299
      %p301 = scmp.ne.s32.totalorder %s290, %s293
      %p302 = scmp.eq.s32.totalorder %s34, 1
      %p303 = por %p301, %p302
      %p304 = scmp.ne.s32.totalorder %s293, %s294
      %p305 = scmp.eq.s32.totalorder %s34, 0
      %p306 = por %p304, %p305
      %p307 = scmp.ne.s32.totalorder %s293, %s294
      %p308 = scmp.eq.s32.totalorder %s35, 1
      %p309 = por %p307, %p308
      %p311 = scmp.ne.s32.totalorder %s294, %s310
      %p312 = scmp.eq.s32.totalorder %s35, 0
      %p313 = por %p311, %p312
      %p314 = scmp.le.s32.totalorder 1, %s29
      %p315 = scmp.lt.s32.totalorder %s29, 3
      %p316 = pnand %p314, %p315
      %p317 = pneg %p316
      // Predicated region
      $region9: #{tpu_custom_call.1} parent=5 // pred_check
        _
      $region10: #{tpu_custom_call.1} parent=5 // pred_check_branch
        %319 = sbr.rel (%p316) target = $region12
      $region11: #{tpu_custom_call.1} parent=5 // pred_region
        %s320 = ssub.s32 %s29, 1
        // Predicated region
        $region13: #{tpu_custom_call.1} parent=11 // pred_check
          %p321 = pneg %p154
        $region14: #{tpu_custom_call.1} parent=11 // pred_check_branch
          %323 = sbr.rel (%p321) target = $region16
        $region15: #{tpu_custom_call.1} parent=11 // pred_region
          _
        $region16: #{tpu_custom_call.1} parent=11 // pred_fallthru
          _
        // Predicated region
        $region17: #{tpu_custom_call.1} parent=11 // pred_check
          %p324 = pneg %p175
        $region18: #{tpu_custom_call.1} parent=11 // pred_check_branch
          %326 = sbr.rel (%p324) target = $region20
        $region19: #{tpu_custom_call.1} parent=11 // pred_region
          _
        $region20: #{tpu_custom_call.1} parent=11 // pred_fallthru
          _
        // Predicated region
        $region21: #{tpu_custom_call.1} parent=11 // pred_check
          %p327 = pneg %p196
        $region22: #{tpu_custom_call.1} parent=11 // pred_check_branch
          %329 = sbr.rel (%p327) target = $region24
        $region23: #{tpu_custom_call.1} parent=11 // pred_region
          %s331 = ssub.s32 1024, 1024
          %332 = vsyncadd [#allocation9], %s331
          %s333 = sshll.u32 [#allocation10], 4
          %s334 = int_to_ptr.vmem [resolvable:$true] %s333
          %339 = dma.hbm_to_vmem [thread:$0]  %s6, 1024, %s334, [#allocation9], 64, 64, 4
        $region24: #{tpu_custom_call.1} parent=11 // pred_fallthru
          _
        // Predicated region
        $region25: #{tpu_custom_call.1} parent=11 // pred_check
          %p340 = pneg %p217
        $region26: #{tpu_custom_call.1} parent=11 // pred_check_branch
          %342 = sbr.rel (%p340) target = $region28
        $region27: #{tpu_custom_call.1} parent=11 // pred_region
          _
        $region28: #{tpu_custom_call.1} parent=11 // pred_fallthru
          _
        // Predicated region
        $region29: #{tpu_custom_call.1} parent=11 // pred_check
          %p343 = pneg %p238
        $region30: #{tpu_custom_call.1} parent=11 // pred_check_branch
          %345 = sbr.rel (%p343) target = $region32
        $region31: #{tpu_custom_call.1} parent=11 // pred_region
          _
        $region32: #{tpu_custom_call.1} parent=11 // pred_fallthru
          _
        // Predicated region
        $region33: #{tpu_custom_call.1} parent=11 // pred_check
          %p346 = pneg %p259
        $region34: #{tpu_custom_call.1} parent=11 // pred_check_branch
          %348 = sbr.rel (%p346) target = $region36
        $region35: #{tpu_custom_call.1} parent=11 // pred_region
          _
        $region36: #{tpu_custom_call.1} parent=11 // pred_fallthru
          _
        // Predicated region
        $region37: #{tpu_custom_call.1} parent=11 // pred_check
          %p349 = pneg %p280
        $region38: #{tpu_custom_call.1} parent=11 // pred_check_branch
          %351 = sbr.rel (%p349) target = $region40
        $region39: #{tpu_custom_call.1} parent=11 // pred_region
          _
        $region40: #{tpu_custom_call.1} parent=11 // pred_fallthru
          _
      $region12: #{tpu_custom_call.1} parent=5 // pred_fallthru
        _
      %p352 = scmp.lt.s32.totalorder %s29, 2
      // Predicated region
      $region41: #{tpu_custom_call.1} parent=5 // pred_check
        %p353 = pneg %p352
      $region42: #{tpu_custom_call.1} parent=5 // pred_check_branch
        %355 = sbr.rel (%p353) target = $region44
      $region43: #{tpu_custom_call.1} parent=5 // pred_region
        // Predicated region
        $region45: #{tpu_custom_call.1} parent=43 // pred_check
          %p356 = pneg %p49
        $region46: #{tpu_custom_call.1} parent=43 // pred_check_branch
          %358 = sbr.rel (%p356) target = $region48
        $region47: #{tpu_custom_call.1} parent=43 // pred_region
          %s359 = sand.u32 %s39, 1
          %s360 = scalar_lea.sflag [#allocation3], %s359
          %s361 = sand.u32 %s39, 1
          %s362 = smul.addr %s361, 8
          %s363 = scalar_lea.vmem [#allocation2], %s362
          %s365 = ssub.s32 128, 128
          %366 = vsyncadd %s360, %s365
          %s367 = smul.addr %s29, 128
          %s368 = scalar_lea.hbm %s0, %s367
          %s370 = sshll.u32 %s363, 4
          %s371 = int_to_ptr.vmem [resolvable:$true] %s370
          %373 = dma.hbm_to_vmem [thread:$0]  %s368, 128, %s371, %s360
        $region48: #{tpu_custom_call.1} parent=43 // pred_fallthru
          _
        // Predicated region
        $region49: #{tpu_custom_call.1} parent=43 // pred_check
          %p374 = pneg %p75
        $region50: #{tpu_custom_call.1} parent=43 // pred_check_branch
          %376 = sbr.rel (%p374) target = $region52
        $region51: #{tpu_custom_call.1} parent=43 // pred_region
          %s377 = sand.u32 %s29, 1
          %s378 = scalar_lea.sflag [#allocation6], %s377
          %s379 = sand.u32 %s65, 1
          %s380 = smul.addr %s379, 8
          %s381 = scalar_lea.vmem [#allocation5], %s380
          %s383 = ssub.s32 128, 128
          %384 = vsyncadd %s378, %s383
          %s385 = smul.addr %s29, 128
          %s386 = scalar_lea.hbm %s1, %s385
          %s388 = sshll.u32 %s381, 4
          %s389 = int_to_ptr.vmem [resolvable:$true] %s388
          %391 = dma.hbm_to_vmem [thread:$0]  %s386, 128, %s389, %s378
        $region52: #{tpu_custom_call.1} parent=43 // pred_fallthru
          _
        // Predicated region
        $region53: #{tpu_custom_call.1} parent=43 // pred_check
          %p392 = pneg %p101
        $region54: #{tpu_custom_call.1} parent=43 // pred_check_branch
          %394 = sbr.rel (%p392) target = $region56
        $region55: #{tpu_custom_call.1} parent=43 // pred_region
          %s395 = sand.u32 %s29, 1
          %s396 = scalar_lea.sflag [#allocation6], %s395
          %s397 = sand.u32 %s91, 1
          %s398 = smul.addr %s397, 8
          %s399 = scalar_lea.vmem [#allocation7], %s398
          %s401 = ssub.s32 128, 128
          %402 = vsyncadd %s396, %s401
          %s403 = smul.addr %s29, 128
          %s404 = scalar_lea.hbm %s2, %s403
          %s406 = sshll.u32 %s399, 4
          %s407 = int_to_ptr.vmem [resolvable:$true] %s406
          %409 = dma.hbm_to_vmem [thread:$0]  %s404, 128, %s407, %s396
        $region56: #{tpu_custom_call.1} parent=43 // pred_fallthru
          _
        // Predicated region
        $region57: #{tpu_custom_call.1} parent=43 // pred_check
          %p410 = pneg %p127
        $region58: #{tpu_custom_call.1} parent=43 // pred_check_branch
          %412 = sbr.rel (%p410) target = $region60
        $region59: #{tpu_custom_call.1} parent=43 // pred_region
          %s413 = sand.u32 %s29, 1
          %s414 = scalar_lea.sflag [#allocation9], %s413
          %s415 = sand.u32 %s117, 1
          %s416 = smul.addr %s415, 8
          %s417 = scalar_lea.vmem [#allocation8], %s416
          %s419 = ssub.s32 128, 128
          %420 = vsyncadd %s414, %s419
          %s421 = smul.addr %s29, 128
          %s422 = scalar_lea.hbm %s3, %s421
          %s424 = sshll.u32 %s417, 4
          %s425 = int_to_ptr.vmem [resolvable:$true] %s424
          %427 = dma.hbm_to_vmem [thread:$0]  %s422, 128, %s425, %s414
        $region60: #{tpu_custom_call.1} parent=43 // pred_fallthru
          _
      $region44: #{tpu_custom_call.1} parent=5 // pred_fallthru
        _
      %p428 = scmp.le.s32.totalorder 1, %s29
      %p429 = scmp.lt.s32.totalorder %s29, 3
      %p430 = pnand %p428, %p429
      %p431 = pneg %p430
      // Predicated region
      $region61: #{tpu_custom_call.1} parent=5 // pred_check
        _
      $region62: #{tpu_custom_call.1} parent=5 // pred_check_branch
        %433 = sbr.rel (%p430) target = $region64
      $region63: #{tpu_custom_call.1} parent=5 // pred_region
        %s434 = ssub.s32 %s29, 1
        %s435 = sand.u32 %s42, 1
        %s436 = scalar_lea.sflag [#allocation3], %s435
        %s437 = sand.u32 %s42, 1
        %s438 = smul.addr %s437, 8
        %s439 = scalar_lea.vmem [#allocation2], %s438
        // Predicated region
        $region65: #{tpu_custom_call.1} parent=63 // pred_check
          %p440 = pneg %p55
        $region66: #{tpu_custom_call.1} parent=63 // pred_check_branch
          %442 = sbr.rel (%p440) target = $region68
        $region67: #{tpu_custom_call.1} parent=63 // pred_region
          %443 = dma.done %s436, 128
        $region68: #{tpu_custom_call.1} parent=63 // pred_fallthru
          _
        %s444 = sand.u32 %s34, 1
        %s445 = scalar_lea.sflag [#allocation6], %s444
        %s446 = sand.u32 %s68, 1
        %s447 = smul.addr %s446, 8
        %s448 = scalar_lea.vmem [#allocation5], %s447
        // Predicated region
        $region69: #{tpu_custom_call.1} parent=63 // pred_check
          %p449 = pneg %p81
        $region70: #{tpu_custom_call.1} parent=63 // pred_check_branch
          %451 = sbr.rel (%p449) target = $region72
        $region71: #{tpu_custom_call.1} parent=63 // pred_region
          %452 = dma.done %s445, 128
        $region72: #{tpu_custom_call.1} parent=63 // pred_fallthru
          _
        %s453 = sand.u32 %s34, 1
        %s454 = scalar_lea.sflag [#allocation6], %s453
        %s455 = sand.u32 %s94, 1
        %s456 = smul.addr %s455, 8
        %s457 = scalar_lea.vmem [#allocation7], %s456
        // Predicated region
        $region73: #{tpu_custom_call.1} parent=63 // pred_check
          %p458 = pneg %p107
        $region74: #{tpu_custom_call.1} parent=63 // pred_check_branch
          %460 = sbr.rel (%p458) target = $region76
        $region75: #{tpu_custom_call.1} parent=63 // pred_region
          %461 = dma.done %s454, 128
        $region76: #{tpu_custom_call.1} parent=63 // pred_fallthru
          _
        %s462 = sand.u32 %s34, 1
        %s463 = scalar_lea.sflag [#allocation9], %s462
        %s464 = sand.u32 %s120, 1
        %s465 = smul.addr %s464, 8
        %s466 = scalar_lea.vmem [#allocation8], %s465
        // Predicated region
        $region77: #{tpu_custom_call.1} parent=63 // pred_check
          %p467 = pneg %p133
        $region78: #{tpu_custom_call.1} parent=63 // pred_check_branch
          %469 = sbr.rel (%p467) target = $region80
        $region79: #{tpu_custom_call.1} parent=63 // pred_region
          %470 = dma.done %s463, 128
        $region80: #{tpu_custom_call.1} parent=63 // pred_fallthru
          _
        // Predicated region
        $region81: #{tpu_custom_call.1} parent=63 // pred_check
          %p471 = pneg %p196
        $region82: #{tpu_custom_call.1} parent=63 // pred_check_branch
          %473 = sbr.rel (%p471) target = $region84
        $region83: #{tpu_custom_call.1} parent=63 // pred_region
          %474 = dma.done [#allocation9], 1024
        $region84: #{tpu_custom_call.1} parent=63 // pred_fallthru
          _
        %s475 = sand.u32 %s42, 1
        %s476 = scalar_lea.sflag [#allocation3], %s475
        %s477 = sand.u32 %s42, 1
        %s478 = smul.addr %s477, 8
        %s479 = scalar_lea.vmem [#allocation2], %s478
        %p480 = pneg %p55
        %p481 = pneg %p52
        %s482 = sand.u32 %s34, 1
        %s483 = scalar_lea.sflag [#allocation6], %s482
        %s484 = sand.u32 %s68, 1
        %s485 = smul.addr %s484, 8
        %s486 = scalar_lea.vmem [#allocation5], %s485
        %p487 = pneg %p81
        %p488 = pneg %p78
        %s489 = sand.u32 %s34, 1
        %s490 = scalar_lea.sflag [#allocation6], %s489
        %s491 = sand.u32 %s94, 1
        %s492 = smul.addr %s491, 8
        %s493 = scalar_lea.vmem [#allocation7], %s492
        %p494 = pneg %p107
        %p495 = pneg %p104
        %s496 = sand.u32 %s34, 1
        %s497 = scalar_lea.sflag [#allocation9], %s496
        %s498 = sand.u32 %s120, 1
        %s499 = smul.addr %s498, 8
        %s500 = scalar_lea.vmem [#allocation8], %s499
        %p501 = pneg %p133
        %p502 = pneg %p130
        %p503 = pneg %p154
        %p504 = pneg %p151
        %p505 = pneg %p175
        %p506 = pneg %p172
        %p507 = pneg %p196
        %p508 = pneg %p193
        %p509 = pneg %p217
        %p510 = pneg %p214
        %p511 = pneg %p238
        %p512 = pneg %p235
        %p513 = pneg %p259
        %p514 = pneg %p256
        %p515 = pneg %p280
        %p516 = pneg %p277
        %p517 = pneg %p306
        %p518 = pneg %p303
        %s519 = sand.u32 %s293, 1
        %s520 = scalar_lea.sflag [#allocation4], %s519
        %s521 = sand.u32 %s293, 1
        %s522 = smul.addr %s521, 8
        %s523 = scalar_lea.vmem [#allocation11], %s522
        %v525 = vld [vmem:[%s448] sm:$0xff]
        %v526 = vld [vmem:[%s457] sm:$0xff]
        %v527 = vld [vmem:[%s466] sm:$0xff]
        %v528 = vld [vmem:[%s439] sm:$0xff]
        %v529 = vmul.f32 %v528, 5.656854
        %v530 = vld [vmem:[%s4] sm:$0x1]
        %v531 = vmul.f32 %v529, %v529
        %vm532 = vcmask 261120
        %v533 = vsel %vm532, %v531, 0.0
        %534 = vadd.xlane.f32.xlu0 %v533
        %v535 = vpop.xlane.xlu0 %534
        %v536 = vrcp.pop 32.0
        %v537 = vmul.f32 %v535, %v536
        %v538 = vadd.f32 %v537, 1e-06
        %v539 = vrsqrt.pop %v538
        %v540 = vmul.f32 %v529, %v539
        %v541 = vadd.f32 %v530, 1.0
        %v543 = vlaneseq
        %v544 = vshrl.u32 %v543, 7
        %v545 = vsub.s32 0, %v544
        %v546 = vrot.slane %v541, %v545
        %v548 = vmul.f32 %v540, %v546
        %v549 = vpack.c.bf16 %v548, %v548
        %v550 = vld [vmem:[%s5] sm:$0xff]
        %v551 = vld [vmem:[%s5 + $0x8] sm:$0xff]
        %v552 = vld [vmem:[%s5 + $0x10] sm:$0xff]
        %v553 = vld [vmem:[%s5 + $0x18] sm:$0xff]
        %v558 = vunpack.c.l.b16 %v550
        %v559 = vunpack.c.h.b16 %v550
        %v560 = vunpack.c.l.b16 %v551
        %v561 = vunpack.c.h.b16 %v551
        %v562 = vunpack.c.l.b16 %v552
        %v563 = vunpack.c.h.b16 %v552
        %v564 = vunpack.c.l.b16 %v553
        %v565 = vunpack.c.h.b16 %v553
        %v566 = vpack.c.b16 %v560, %v558
        %v567 = vpack.c.b16 %v561, %v559
        %v568 = vpack.c.b16 %v564, %v562
        %v569 = vpack.c.b16 %v565, %v563
        %v575 = vsel %vm532, %v549, 0
        %577 = vmatprep.subr.bf16.mxu0 0
        %578 = vmatpush1.bf16.msra.mxu0 0
        %579 = vmatprep.subr.bf16.mxu0 0
        %580 = vmatpush1.bf16.msra.mxu0 0
        %581 = vmatprep.subr.bf16.mxu0 0
        %582 = vmatpush1.bf16.msra.mxu0 0
        %583 = vmatprep.subr.bf16.mxu0 0
        %584 = vmatpush1.bf16.msra.mxu0 0
        %585 = vmatprep.subr.bf16.mxu0 0
        %586 = vmatpush1.bf16.msra.mxu0 0
        %587 = vmatprep.subr.bf16.mxu0 0
        %588 = vmatpush1.bf16.msra.mxu0 0
        %589 = vmatprep.subr.bf16.mxu0 %v569
        %590 = vmatpush1.bf16.msra.mxu0 %v568
        %591 = vmatprep.subr.bf16.mxu0 %v567
        %592 = vmatpush1.bf16.msra.mxu0 %v566
        %593 = vmatprep.subr.bf16.mxu0 0
        %594 = vmatpush2.bf16.msra.mxu0 0
        %595 = vmatprep.subr.bf16.mxu0 0
        %596 = vmatpush2.bf16.msra.mxu0 0
        %597 = vmatprep.subr.bf16.mxu0 0
        %598 = vmatpush2.bf16.msra.mxu0 0
        %599 = vmatprep.subr.bf16.mxu0 0
        %600 = vmatpush2.bf16.msra.mxu0 0
        %601 = vmatprep.subr.bf16.mxu0 0
        %602 = vmatpush2.bf16.msra.mxu0 0
        %603 = vmatprep.subr.bf16.mxu0 0
        %604 = vmatpush2.bf16.msra.mxu0 0
        %605 = vmatprep.subr.bf16.mxu0 0
        %606 = vmatpush2.bf16.msra.mxu0 0
        %607 = vmatprep.subr.bf16.mxu0 0
        %608 = vmatpush2.bf16.msra.mxu0 0
        %609 = vmatprep.mubr.bf16.mxu0 0
        %610 = vmatmul.mubr.bf16.gmra.mxu0 %v575
        %v611 = vpop.f32.mrf.mxu0
        %v612 = vadd.f32 0.0, %v611
        %v613 = vpop.f32.mrf.mxu0
        %v614 = vadd.f32 0.0, %v613
        %v615 = vpop.f32.mrf.mxu0
        %v616 = vpop.f32.mrf.mxu0
        %617 = vdwg.mxu0
        %v618 = vmul.f32 %v612, %v526
        %620 = vrot.lane.b32.xlu0 %v527, 64
        %v621 = vpop.permute.xlu0 %620
        %v623 = vmul.f32 %v612, %v621
        %625 = vrot.lane.b32.xlu0 %v623, 64
        %v626 = vpop.permute.xlu0 %625
        %v628 = vadd.f32 %v618, %v626
        %v629 = vmul.f32 %v614, %v526
        %630 = vrot.lane.b32.xlu0 %v527, 32
        %v631 = vpop.permute.xlu0 %630
        %v633 = vmul.f32 %v614, %v631
        %635 = vrot.lane.b32.xlu0 %v633, 96
        %v636 = vpop.permute.xlu0 %635
        %v638 = vadd.f32 %v629, %v636
        %640 = vrot.lane.b32.xlu0 %v628, 112
        %v641 = vpop.permute.xlu0 %640
        %643 = vrot.lane.b32.xlu0 %v628, 96
        %v644 = vpop.permute.xlu0 %643
        %646 = vrot.lane.b32.xlu0 %v628, 80
        %v647 = vpop.permute.xlu0 %646
        %v649 = vpack.c.bf16 %v628, %v628
        %v650 = vpack.c.bf16 %v641, %v641
        %v651 = vpack.c.bf16 %v644, %v644
        %v652 = vpack.c.bf16 %v647, %v647
        %654 = vrot.lane.b32.xlu0 %v638, 112
        %v655 = vpop.permute.xlu0 %654
        %v657 = vpack.c.bf16 %v638, %v638
        %v658 = vpack.c.bf16 %v655, %v655
        %660 = vrot.lane.b32.xlu0 %v614, 112
        %v661 = vpop.permute.xlu0 %660
        %v663 = vpack.c.bf16 %v614, %v614
        %v664 = vpack.c.bf16 %v661, %v661
        %vm665 = vcmask 130048
        %v667 = vsel %vm665, %v649, 0
        %v670 = vsel %vm665, %v657, 0
        %672 = vmatprep.subr.bf16.mxu0 0
        %673 = vmatpush1.bf16.xpose.msra.mxu0 0
        %674 = vmatprep.subr.bf16.mxu0 0
        %675 = vmatpush1.bf16.xpose.msra.mxu0 0
        %676 = vmatprep.subr.bf16.mxu0 0
        %677 = vmatpush1.bf16.xpose.msra.mxu0 0
        %678 = vmatprep.subr.bf16.mxu0 0
        %679 = vmatpush1.bf16.xpose.msra.mxu0 0
        %680 = vmatprep.subr.bf16.mxu0 0
        %681 = vmatpush1.bf16.xpose.msra.mxu0 0
        %682 = vmatprep.subr.bf16.mxu0 0
        %683 = vmatpush1.bf16.xpose.msra.mxu0 0
        %684 = vmatprep.subr.bf16.mxu0 0
        %685 = vmatpush1.bf16.xpose.msra.mxu0 0
        %686 = vmatprep.subr.bf16.mxu0 0
        %687 = vmatpush1.bf16.xpose.msra.mxu0 %v670
        %688 = vmatprep.subr.bf16.mxu0 0
        %689 = vmatpush2.bf16.xpose.msra.mxu0 0
        %690 = vmatprep.subr.bf16.mxu0 0
        %691 = vmatpush2.bf16.xpose.msra.mxu0 0
        %692 = vmatprep.subr.bf16.mxu0 0
        %693 = vmatpush2.bf16.xpose.msra.mxu0 0
        %694 = vmatprep.subr.bf16.mxu0 0
        %695 = vmatpush2.bf16.xpose.msra.mxu0 0
        %696 = vmatprep.subr.bf16.mxu0 0
        %697 = vmatpush2.bf16.xpose.msra.mxu0 0
        %698 = vmatprep.subr.bf16.mxu0 0
        %699 = vmatpush2.bf16.xpose.msra.mxu0 0
        %700 = vmatprep.subr.bf16.mxu0 0
        %701 = vmatpush2.bf16.xpose.msra.mxu0 0
        %702 = vmatprep.subr.bf16.mxu0 0
        %703 = vmatpush2.bf16.xpose.msra.mxu0 0
        %704 = vmatprep.mubr.bf16.mxu0 0
        %705 = vmatmul.mubr.bf16.gmra.mxu0 %v667
        %v706 = vpop.f32.mrf.mxu0
        %v707 = vadd.f32 %v525, %v706
        %v708 = vpop.f32.mrf.mxu0
        %v709 = vpop.f32.mrf.mxu0
        %v710 = vpop.f32.mrf.mxu0
        %711 = vdwg.mxu0
        %v713 = vsel %vm665, %v650, 0
        %715 = vmatprep.subr.bf16.mxu0 0
        %716 = vmatpush1.bf16.xpose.msra.mxu0 0
        %717 = vmatprep.subr.bf16.mxu0 0
        %718 = vmatpush1.bf16.xpose.msra.mxu0 0
        %719 = vmatprep.subr.bf16.mxu0 0
        %720 = vmatpush1.bf16.xpose.msra.mxu0 0
        %721 = vmatprep.subr.bf16.mxu0 0
        %722 = vmatpush1.bf16.xpose.msra.mxu0 0
        %723 = vmatprep.subr.bf16.mxu0 0
        %724 = vmatpush1.bf16.xpose.msra.mxu0 0
        %725 = vmatprep.subr.bf16.mxu0 0
        %726 = vmatpush1.bf16.xpose.msra.mxu0 0
        %727 = vmatprep.subr.bf16.mxu0 0
        %728 = vmatpush1.bf16.xpose.msra.mxu0 0
        %729 = vmatprep.subr.bf16.mxu0 0
        %730 = vmatpush1.bf16.xpose.msra.mxu0 %v670
        %731 = vmatprep.subr.bf16.mxu0 0
        %732 = vmatpush2.bf16.xpose.msra.mxu0 0
        %733 = vmatprep.subr.bf16.mxu0 0
        %734 = vmatpush2.bf16.xpose.msra.mxu0 0
        %735 = vmatprep.subr.bf16.mxu0 0
        %736 = vmatpush2.bf16.xpose.msra.mxu0 0
        %737 = vmatprep.subr.bf16.mxu0 0
        %738 = vmatpush2.bf16.xpose.msra.mxu0 0
        %739 = vmatprep.subr.bf16.mxu0 0
        %740 = vmatpush2.bf16.xpose.msra.mxu0 0
        %741 = vmatprep.subr.bf16.mxu0 0
        %742 = vmatpush2.bf16.xpose.msra.mxu0 0
        %743 = vmatprep.subr.bf16.mxu0 0
        %744 = vmatpush2.bf16.xpose.msra.mxu0 0
        %745 = vmatprep.subr.bf16.mxu0 0
        %746 = vmatpush2.bf16.xpose.msra.mxu0 0
        %747 = vmatprep.mubr.bf16.mxu0 0
        %748 = vmatmul.mubr.bf16.gmra.mxu0 %v713
        %v749 = vpop.f32.mrf.mxu0
        %v750 = vadd.f32 %v525, %v749
        %v751 = vpop.f32.mrf.mxu0
        %v752 = vpop.f32.mrf.mxu0
        %v753 = vpop.f32.mrf.mxu0
        %754 = vdwg.mxu0
        %v756 = vsel %vm665, %v651, 0
        %v759 = vsel %vm665, %v658, 0
        %761 = vmatprep.subr.bf16.mxu0 0
        %762 = vmatpush1.bf16.xpose.msra.mxu0 0
        %763 = vmatprep.subr.bf16.mxu0 0
        %764 = vmatpush1.bf16.xpose.msra.mxu0 0
        %765 = vmatprep.subr.bf16.mxu0 0
        %766 = vmatpush1.bf16.xpose.msra.mxu0 0
        %767 = vmatprep.subr.bf16.mxu0 0
        %768 = vmatpush1.bf16.xpose.msra.mxu0 0
        %769 = vmatprep.subr.bf16.mxu0 0
        %770 = vmatpush1.bf16.xpose.msra.mxu0 0
        %771 = vmatprep.subr.bf16.mxu0 0
        %772 = vmatpush1.bf16.xpose.msra.mxu0 0
        %773 = vmatprep.subr.bf16.mxu0 0
        %774 = vmatpush1.bf16.xpose.msra.mxu0 0
        %775 = vmatprep.subr.bf16.mxu0 0
        %776 = vmatpush1.bf16.xpose.msra.mxu0 %v759
        %777 = vmatprep.subr.bf16.mxu0 0
        %778 = vmatpush2.bf16.xpose.msra.mxu0 0
        %779 = vmatprep.subr.bf16.mxu0 0
        %780 = vmatpush2.bf16.xpose.msra.mxu0 0
        %781 = vmatprep.subr.bf16.mxu0 0
        %782 = vmatpush2.bf16.xpose.msra.mxu0 0
        %783 = vmatprep.subr.bf16.mxu0 0
        %784 = vmatpush2.bf16.xpose.msra.mxu0 0
        %785 = vmatprep.subr.bf16.mxu0 0
        %786 = vmatpush2.bf16.xpose.msra.mxu0 0
        %787 = vmatprep.subr.bf16.mxu0 0
        %788 = vmatpush2.bf16.xpose.msra.mxu0 0
        %789 = vmatprep.subr.bf16.mxu0 0
        %790 = vmatpush2.bf16.xpose.msra.mxu0 0
        %791 = vmatprep.subr.bf16.mxu0 0
        %792 = vmatpush2.bf16.xpose.msra.mxu0 0
        %793 = vmatprep.mubr.bf16.mxu0 0
        %794 = vmatmul.mubr.bf16.gmra.mxu0 %v756
        %v795 = vpop.f32.mrf.mxu0
        %v796 = vadd.f32 %v525, %v795
        %v797 = vpop.f32.mrf.mxu0
        %v798 = vpop.f32.mrf.mxu0
        %v799 = vpop.f32.mrf.mxu0
        %800 = vdwg.mxu0
        %v802 = vsel %vm665, %v652, 0
        %804 = vmatprep.subr.bf16.mxu0 0
        %805 = vmatpush1.bf16.xpose.msra.mxu0 0
        %806 = vmatprep.subr.bf16.mxu0 0
        %807 = vmatpush1.bf16.xpose.msra.mxu0 0
        %808 = vmatprep.subr.bf16.mxu0 0
        %809 = vmatpush1.bf16.xpose.msra.mxu0 0
        %810 = vmatprep.subr.bf16.mxu0 0
        %811 = vmatpush1.bf16.xpose.msra.mxu0 0
        %812 = vmatprep.subr.bf16.mxu0 0
        %813 = vmatpush1.bf16.xpose.msra.mxu0 0
        %814 = vmatprep.subr.bf16.mxu0 0
        %815 = vmatpush1.bf16.xpose.msra.mxu0 0
        %816 = vmatprep.subr.bf16.mxu0 0
        %817 = vmatpush1.bf16.xpose.msra.mxu0 0
        %818 = vmatprep.subr.bf16.mxu0 0
        %819 = vmatpush1.bf16.xpose.msra.mxu0 %v759
        %820 = vmatprep.subr.bf16.mxu0 0
        %821 = vmatpush2.bf16.xpose.msra.mxu0 0
        %822 = vmatprep.subr.bf16.mxu0 0
        %823 = vmatpush2.bf16.xpose.msra.mxu0 0
        %824 = vmatprep.subr.bf16.mxu0 0
        %825 = vmatpush2.bf16.xpose.msra.mxu0 0
        %826 = vmatprep.subr.bf16.mxu0 0
        %827 = vmatpush2.bf16.xpose.msra.mxu0 0
        %828 = vmatprep.subr.bf16.mxu0 0
        %829 = vmatpush2.bf16.xpose.msra.mxu0 0
        %830 = vmatprep.subr.bf16.mxu0 0
        %831 = vmatpush2.bf16.xpose.msra.mxu0 0
        %832 = vmatprep.subr.bf16.mxu0 0
        %833 = vmatpush2.bf16.xpose.msra.mxu0 0
        %834 = vmatprep.subr.bf16.mxu0 0
        %835 = vmatpush2.bf16.xpose.msra.mxu0 0
        %836 = vmatprep.mubr.bf16.mxu0 0
        %837 = vmatmul.mubr.bf16.gmra.mxu0 %v802
        %v838 = vpop.f32.mrf.mxu0
        %v839 = vadd.f32 %v525, %v838
        %v840 = vpop.f32.mrf.mxu0
        %v841 = vpop.f32.mrf.mxu0
        %v842 = vpop.f32.mrf.mxu0
        %843 = vdwg.mxu0
        %vm844 = vcmask 64512
        %v845 = vsel %vm844, %v707, -inf
        %846 = vmax.xlane.f32.xlu0 %v845
        %v847 = vpop.xlane.xlu0 %846
        %v848 = vsel %vm844, %v750, -inf
        %849 = vmax.xlane.f32.xlu0 %v848
        %v850 = vpop.xlane.xlu0 %849
        %v851 = vsel %vm844, %v796, -inf
        %852 = vmax.xlane.f32.xlu0 %v851
        %v853 = vpop.xlane.xlu0 %852
        %v854 = vsel %vm844, %v839, -inf
        %855 = vmax.xlane.f32.xlu0 %v854
        %v856 = vpop.xlane.xlu0 %855
        %v857 = vsub.f32 %v707, %v847
        %v858 = vsub.f32 %v750, %v850
        %v859 = vsub.f32 %v796, %v853
        %v860 = vsub.f32 %v839, %v856
        %v861 = vmul.f32 %v857, 1.442695
        %v862 = vpow.pop %v861
        %v863 = vmul.f32 %v858, 1.442695
        %v864 = vpow.pop %v863
        %v865 = vmul.f32 %v859, 1.442695
        %v866 = vpow.pop %v865
        %v867 = vmul.f32 %v860, 1.442695
        %v868 = vpow.pop %v867
        %v869 = vsel %vm844, %v862, 0.0
        %870 = vadd.xlane.f32.xlu0 %v869
        %v871 = vpop.xlane.xlu0 %870
        %v872 = vsel %vm844, %v864, 0.0
        %873 = vadd.xlane.f32.xlu0 %v872
        %v874 = vpop.xlane.xlu0 %873
        %v875 = vsel %vm844, %v866, 0.0
        %876 = vadd.xlane.f32.xlu0 %v875
        %v877 = vpop.xlane.xlu0 %876
        %v878 = vsel %vm844, %v868, 0.0
        %879 = vadd.xlane.f32.xlu0 %v878
        %v880 = vpop.xlane.xlu0 %879
        %v881 = vrcp.pop %v871
        %v882 = vrcp.pop %v874
        %v883 = vrcp.pop %v877
        %v884 = vrcp.pop %v880
        %v885 = vmul.f32 %v862, %v881
        %v886 = vmul.f32 %v864, %v882
        %v887 = vmul.f32 %v866, %v883
        %v888 = vmul.f32 %v868, %v884
        %v889 = vpack.c.bf16 %v885, %v885
        %v890 = vpack.c.bf16 %v886, %v886
        %v891 = vpack.c.bf16 %v887, %v887
        %v892 = vpack.c.bf16 %v888, %v888
        %894 = vrot.lane.b32.xlu0 %v663, 64
        %v895 = vpop.permute.xlu0 %894
        %v897 = vsel %vm844, %v889, 0
        %vm899 = vcmask 1043456
        %v901 = vsel %vm899, %v895, 0
        %903 = vmatprep.subr.bf16.mxu0 0
        %904 = vmatpush1.bf16.msra.mxu0 0
        %905 = vmatprep.subr.bf16.mxu0 0
        %906 = vmatpush1.bf16.msra.mxu0 0
        %907 = vmatprep.subr.bf16.mxu0 0
        %908 = vmatpush1.bf16.msra.mxu0 0
        %909 = vmatprep.subr.bf16.mxu0 0
        %910 = vmatpush1.bf16.msra.mxu0 0
        %911 = vmatprep.subr.bf16.mxu0 0
        %912 = vmatpush1.bf16.msra.mxu0 0
        %913 = vmatprep.subr.bf16.mxu0 0
        %914 = vmatpush1.bf16.msra.mxu0 0
        %915 = vmatprep.subr.bf16.mxu0 0
        %916 = vmatpush1.bf16.msra.mxu0 0
        %917 = vmatprep.subr.bf16.mxu0 0
        %918 = vmatpush1.bf16.msra.mxu0 %v901
        %919 = vmatprep.subr.bf16.mxu0 0
        %920 = vmatpush2.bf16.msra.mxu0 0
        %921 = vmatprep.subr.bf16.mxu0 0
        %922 = vmatpush2.bf16.msra.mxu0 0
        %923 = vmatprep.subr.bf16.mxu0 0
        %924 = vmatpush2.bf16.msra.mxu0 0
        %925 = vmatprep.subr.bf16.mxu0 0
        %926 = vmatpush2.bf16.msra.mxu0 0
        %927 = vmatprep.subr.bf16.mxu0 0
        %928 = vmatpush2.bf16.msra.mxu0 0
        %929 = vmatprep.subr.bf16.mxu0 0
        %930 = vmatpush2.bf16.msra.mxu0 0
        %931 = vmatprep.subr.bf16.mxu0 0
        %932 = vmatpush2.bf16.msra.mxu0 0
        %933 = vmatprep.subr.bf16.mxu0 0
        %934 = vmatpush2.bf16.msra.mxu0 0
        %935 = vmatprep.mubr.bf16.mxu0 0
        %936 = vmatmul.mubr.bf16.gmra.mxu0 %v897
        %v937 = vpop.f32.mrf.mxu0
        %v938 = vadd.f32 0.0, %v937
        %v939 = vpop.f32.mrf.mxu0
        %v940 = vpop.f32.mrf.mxu0
        %v941 = vpop.f32.mrf.mxu0
        %942 = vdwg.mxu0
        %v944 = vsel %vm844, %v890, 0
        %946 = vmatprep.subr.bf16.mxu0 0
        %947 = vmatpush1.bf16.msra.mxu0 0
        %948 = vmatprep.subr.bf16.mxu0 0
        %949 = vmatpush1.bf16.msra.mxu0 0
        %950 = vmatprep.subr.bf16.mxu0 0
        %951 = vmatpush1.bf16.msra.mxu0 0
        %952 = vmatprep.subr.bf16.mxu0 0
        %953 = vmatpush1.bf16.msra.mxu0 0
        %954 = vmatprep.subr.bf16.mxu0 0
        %955 = vmatpush1.bf16.msra.mxu0 0
        %956 = vmatprep.subr.bf16.mxu0 0
        %957 = vmatpush1.bf16.msra.mxu0 0
        %958 = vmatprep.subr.bf16.mxu0 0
        %959 = vmatpush1.bf16.msra.mxu0 0
        %960 = vmatprep.subr.bf16.mxu0 0
        %961 = vmatpush1.bf16.msra.mxu0 %v901
        %962 = vmatprep.subr.bf16.mxu0 0
        %963 = vmatpush2.bf16.msra.mxu0 0
        %964 = vmatprep.subr.bf16.mxu0 0
        %965 = vmatpush2.bf16.msra.mxu0 0
        %966 = vmatprep.subr.bf16.mxu0 0
        %967 = vmatpush2.bf16.msra.mxu0 0
        %968 = vmatprep.subr.bf16.mxu0 0
        %969 = vmatpush2.bf16.msra.mxu0 0
        %970 = vmatprep.subr.bf16.mxu0 0
        %971 = vmatpush2.bf16.msra.mxu0 0
        %972 = vmatprep.subr.bf16.mxu0 0
        %973 = vmatpush2.bf16.msra.mxu0 0
        %974 = vmatprep.subr.bf16.mxu0 0
        %975 = vmatpush2.bf16.msra.mxu0 0
        %976 = vmatprep.subr.bf16.mxu0 0
        %977 = vmatpush2.bf16.msra.mxu0 0
        %978 = vmatprep.mubr.bf16.mxu0 0
        %979 = vmatmul.mubr.bf16.gmra.mxu0 %v944
        %v980 = vpop.f32.mrf.mxu0
        %v981 = vadd.f32 0.0, %v980
        %v982 = vpop.f32.mrf.mxu0
        %v983 = vpop.f32.mrf.mxu0
        %v984 = vpop.f32.mrf.mxu0
        %985 = vdwg.mxu0
        %987 = vrot.lane.b32.xlu0 %v664, 64
        %v988 = vpop.permute.xlu0 %987
        %v990 = vsel %vm844, %v891, 0
        %v993 = vsel %vm899, %v988, 0
        %995 = vmatprep.subr.bf16.mxu0 0
        %996 = vmatpush1.bf16.msra.mxu0 0
        %997 = vmatprep.subr.bf16.mxu0 0
        %998 = vmatpush1.bf16.msra.mxu0 0
        %999 = vmatprep.subr.bf16.mxu0 0
        %1000 = vmatpush1.bf16.msra.mxu0 0
        %1001 = vmatprep.subr.bf16.mxu0 0
        %1002 = vmatpush1.bf16.msra.mxu0 0
        %1003 = vmatprep.subr.bf16.mxu0 0
        %1004 = vmatpush1.bf16.msra.mxu0 0
        %1005 = vmatprep.subr.bf16.mxu0 0
        %1006 = vmatpush1.bf16.msra.mxu0 0
        %1007 = vmatprep.subr.bf16.mxu0 0
        %1008 = vmatpush1.bf16.msra.mxu0 0
        %1009 = vmatprep.subr.bf16.mxu0 0
        %1010 = vmatpush1.bf16.msra.mxu0 %v993
        %1011 = vmatprep.subr.bf16.mxu0 0
        %1012 = vmatpush2.bf16.msra.mxu0 0
        %1013 = vmatprep.subr.bf16.mxu0 0
        %1014 = vmatpush2.bf16.msra.mxu0 0
        %1015 = vmatprep.subr.bf16.mxu0 0
        %1016 = vmatpush2.bf16.msra.mxu0 0
        %1017 = vmatprep.subr.bf16.mxu0 0
        %1018 = vmatpush2.bf16.msra.mxu0 0
        %1019 = vmatprep.subr.bf16.mxu0 0
        %1020 = vmatpush2.bf16.msra.mxu0 0
        %1021 = vmatprep.subr.bf16.mxu0 0
        %1022 = vmatpush2.bf16.msra.mxu0 0
        %1023 = vmatprep.subr.bf16.mxu0 0
        %1024 = vmatpush2.bf16.msra.mxu0 0
        %1025 = vmatprep.subr.bf16.mxu0 0
        %1026 = vmatpush2.bf16.msra.mxu0 0
        %1027 = vmatprep.mubr.bf16.mxu0 0
        %1028 = vmatmul.mubr.bf16.gmra.mxu0 %v990
        %v1029 = vpop.f32.mrf.mxu0
        %v1030 = vadd.f32 0.0, %v1029
        %v1031 = vpop.f32.mrf.mxu0
        %v1032 = vpop.f32.mrf.mxu0
        %v1033 = vpop.f32.mrf.mxu0
        %1034 = vdwg.mxu0
        %v1036 = vsel %vm844, %v892, 0
        %1038 = vmatprep.subr.bf16.mxu0 0
        %1039 = vmatpush1.bf16.msra.mxu0 0
        %1040 = vmatprep.subr.bf16.mxu0 0
        %1041 = vmatpush1.bf16.msra.mxu0 0
        %1042 = vmatprep.subr.bf16.mxu0 0
        %1043 = vmatpush1.bf16.msra.mxu0 0
        %1044 = vmatprep.subr.bf16.mxu0 0
        %1045 = vmatpush1.bf16.msra.mxu0 0
        %1046 = vmatprep.subr.bf16.mxu0 0
        %1047 = vmatpush1.bf16.msra.mxu0 0
        %1048 = vmatprep.subr.bf16.mxu0 0
        %1049 = vmatpush1.bf16.msra.mxu0 0
        %1050 = vmatprep.subr.bf16.mxu0 0
        %1051 = vmatpush1.bf16.msra.mxu0 0
        %1052 = vmatprep.subr.bf16.mxu0 0
        %1053 = vmatpush1.bf16.msra.mxu0 %v993
        %1054 = vmatprep.subr.bf16.mxu0 0
        %1055 = vmatpush2.bf16.msra.mxu0 0
        %1056 = vmatprep.subr.bf16.mxu0 0
        %1057 = vmatpush2.bf16.msra.mxu0 0
        %1058 = vmatprep.subr.bf16.mxu0 0
        %1059 = vmatpush2.bf16.msra.mxu0 0
        %1060 = vmatprep.subr.bf16.mxu0 0
        %1061 = vmatpush2.bf16.msra.mxu0 0
        %1062 = vmatprep.subr.bf16.mxu0 0
        %1063 = vmatpush2.bf16.msra.mxu0 0
        %1064 = vmatprep.subr.bf16.mxu0 0
        %1065 = vmatpush2.bf16.msra.mxu0 0
        %1066 = vmatprep.subr.bf16.mxu0 0
        %1067 = vmatpush2.bf16.msra.mxu0 0
        %1068 = vmatprep.subr.bf16.mxu0 0
        %1069 = vmatpush2.bf16.msra.mxu0 0
        %1070 = vmatprep.mubr.bf16.mxu0 0
        %1071 = vmatmul.mubr.bf16.gmra.mxu0 %v1036
        %v1072 = vpop.f32.mrf.mxu0
        %v1073 = vadd.f32 0.0, %v1072
        %v1074 = vpop.f32.mrf.mxu0
        %v1075 = vpop.f32.mrf.mxu0
        %v1076 = vpop.f32.mrf.mxu0
        %1077 = vdwg.mxu0
        %v1078 = vpack.c.bf16 %v938, %v938
        %v1079 = vpack.c.bf16 %v981, %v981
        %v1080 = vpack.c.bf16 %v1030, %v1030
        %v1081 = vpack.c.bf16 %v1073, %v1073
        %v1082 = vld [vmem:[#allocation10] sm:$0xf]
        %v1083 = vld [vmem:[#allocation10 + $0x4] sm:$0xf]
        %v1084 = vld [vmem:[#allocation10 + $0x8] sm:$0xf]
        %v1085 = vld [vmem:[#allocation10 + $0xc] sm:$0xf]
        %v1086 = vld [vmem:[#allocation10 + $0x10] sm:$0xf]
        %v1087 = vld [vmem:[#allocation10 + $0x14] sm:$0xf]
        %v1088 = vld [vmem:[#allocation10 + $0x18] sm:$0xf]
        %v1089 = vld [vmem:[#allocation10 + $0x1c] sm:$0xf]
        %v1092 = vunpack.c.l.b16 %v1082
        %v1093 = vunpack.c.l.b16 %v1083
        %v1094 = vpack.c.b16 %v1093, %v1092
        %v1097 = vsel %vm665, %v1078, 0
        %1099 = vmatprep.subr.bf16.mxu0 0
        %1100 = vmatpush1.bf16.msra.mxu0 0
        %1101 = vmatprep.subr.bf16.mxu0 0
        %1102 = vmatpush1.bf16.msra.mxu0 0
        %1103 = vmatprep.subr.bf16.mxu0 0
        %1104 = vmatpush1.bf16.msra.mxu0 0
        %1105 = vmatprep.subr.bf16.mxu0 0
        %1106 = vmatpush1.bf16.msra.mxu0 0
        %1107 = vmatprep.subr.bf16.mxu0 0
        %1108 = vmatpush1.bf16.msra.mxu0 0
        %1109 = vmatprep.subr.bf16.mxu0 0
        %1110 = vmatpush1.bf16.msra.mxu0 0
        %1111 = vmatprep.subr.bf16.mxu0 0
        %1112 = vmatpush1.bf16.msra.mxu0 0
        %1113 = vmatprep.subr.bf16.mxu0 0
        %1114 = vmatpush1.bf16.msra.mxu0 %v1094
        %1115 = vmatprep.subr.bf16.mxu0 0
        %1116 = vmatpush2.bf16.msra.mxu0 0
        %1117 = vmatprep.subr.bf16.mxu0 0
        %1118 = vmatpush2.bf16.msra.mxu0 0
        %1119 = vmatprep.subr.bf16.mxu0 0
        %1120 = vmatpush2.bf16.msra.mxu0 0
        %1121 = vmatprep.subr.bf16.mxu0 0
        %1122 = vmatpush2.bf16.msra.mxu0 0
        %1123 = vmatprep.subr.bf16.mxu0 0
        %1124 = vmatpush2.bf16.msra.mxu0 0
        %1125 = vmatprep.subr.bf16.mxu0 0
        %1126 = vmatpush2.bf16.msra.mxu0 0
        %1127 = vmatprep.subr.bf16.mxu0 0
        %1128 = vmatpush2.bf16.msra.mxu0 0
        %1129 = vmatprep.subr.bf16.mxu0 0
        %1130 = vmatpush2.bf16.msra.mxu0 0
        %1131 = vmatprep.mubr.bf16.mxu0 0
        %1132 = vmatmul.mubr.bf16.gmra.mxu0 %v1097
        %v1133 = vpop.f32.mrf.mxu0
        %v1134 = vadd.f32 0.0, %v1133
        %v1135 = vpop.f32.mrf.mxu0
        %v1136 = vpop.f32.mrf.mxu0
        %v1137 = vpop.f32.mrf.mxu0
        %1138 = vdwg.mxu0
        %v1141 = vunpack.c.l.b16 %v1084
        %v1142 = vunpack.c.l.b16 %v1085
        %v1143 = vpack.c.b16 %v1142, %v1141
        %v1146 = vsel %vm665, %v1079, 0
        %1148 = vmatprep.subr.bf16.mxu0 0
        %1149 = vmatpush1.bf16.msra.mxu0 0
        %1150 = vmatprep.subr.bf16.mxu0 0
        %1151 = vmatpush1.bf16.msra.mxu0 0
        %1152 = vmatprep.subr.bf16.mxu0 0
        %1153 = vmatpush1.bf16.msra.mxu0 0
        %1154 = vmatprep.subr.bf16.mxu0 0
        %1155 = vmatpush1.bf16.msra.mxu0 0
        %1156 = vmatprep.subr.bf16.mxu0 0
        %1157 = vmatpush1.bf16.msra.mxu0 0
        %1158 = vmatprep.subr.bf16.mxu0 0
        %1159 = vmatpush1.bf16.msra.mxu0 0
        %1160 = vmatprep.subr.bf16.mxu0 0
        %1161 = vmatpush1.bf16.msra.mxu0 0
        %1162 = vmatprep.subr.bf16.mxu0 0
        %1163 = vmatpush1.bf16.msra.mxu0 %v1143
        %1164 = vmatprep.subr.bf16.mxu0 0
        %1165 = vmatpush2.bf16.msra.mxu0 0
        %1166 = vmatprep.subr.bf16.mxu0 0
        %1167 = vmatpush2.bf16.msra.mxu0 0
        %1168 = vmatprep.subr.bf16.mxu0 0
        %1169 = vmatpush2.bf16.msra.mxu0 0
        %1170 = vmatprep.subr.bf16.mxu0 0
        %1171 = vmatpush2.bf16.msra.mxu0 0
        %1172 = vmatprep.subr.bf16.mxu0 0
        %1173 = vmatpush2.bf16.msra.mxu0 0
        %1174 = vmatprep.subr.bf16.mxu0 0
        %1175 = vmatpush2.bf16.msra.mxu0 0
        %1176 = vmatprep.subr.bf16.mxu0 0
        %1177 = vmatpush2.bf16.msra.mxu0 0
        %1178 = vmatprep.subr.bf16.mxu0 0
        %1179 = vmatpush2.bf16.msra.mxu0 0
        %1180 = vmatprep.mubr.bf16.mxu0 0
        %1181 = vmatmul.mubr.bf16.gmra.mxu0 %v1146
        %v1182 = vpop.f32.mrf.mxu0
        %v1183 = vadd.f32 0.0, %v1182
        %v1184 = vpop.f32.mrf.mxu0
        %v1185 = vpop.f32.mrf.mxu0
        %v1186 = vpop.f32.mrf.mxu0
        %1187 = vdwg.mxu0
        %v1190 = vunpack.c.l.b16 %v1086
        %v1191 = vunpack.c.l.b16 %v1087
        %v1192 = vpack.c.b16 %v1191, %v1190
        %v1195 = vsel %vm665, %v1080, 0
        %1197 = vmatprep.subr.bf16.mxu0 0
        %1198 = vmatpush1.bf16.msra.mxu0 0
        %1199 = vmatprep.subr.bf16.mxu0 0
        %1200 = vmatpush1.bf16.msra.mxu0 0
        %1201 = vmatprep.subr.bf16.mxu0 0
        %1202 = vmatpush1.bf16.msra.mxu0 0
        %1203 = vmatprep.subr.bf16.mxu0 0
        %1204 = vmatpush1.bf16.msra.mxu0 0
        %1205 = vmatprep.subr.bf16.mxu0 0
        %1206 = vmatpush1.bf16.msra.mxu0 0
        %1207 = vmatprep.subr.bf16.mxu0 0
        %1208 = vmatpush1.bf16.msra.mxu0 0
        %1209 = vmatprep.subr.bf16.mxu0 0
        %1210 = vmatpush1.bf16.msra.mxu0 0
        %1211 = vmatprep.subr.bf16.mxu0 0
        %1212 = vmatpush1.bf16.msra.mxu0 %v1192
        %1213 = vmatprep.subr.bf16.mxu0 0
        %1214 = vmatpush2.bf16.msra.mxu0 0
        %1215 = vmatprep.subr.bf16.mxu0 0
        %1216 = vmatpush2.bf16.msra.mxu0 0
        %1217 = vmatprep.subr.bf16.mxu0 0
        %1218 = vmatpush2.bf16.msra.mxu0 0
        %1219 = vmatprep.subr.bf16.mxu0 0
        %1220 = vmatpush2.bf16.msra.mxu0 0
        %1221 = vmatprep.subr.bf16.mxu0 0
        %1222 = vmatpush2.bf16.msra.mxu0 0
        %1223 = vmatprep.subr.bf16.mxu0 0
        %1224 = vmatpush2.bf16.msra.mxu0 0
        %1225 = vmatprep.subr.bf16.mxu0 0
        %1226 = vmatpush2.bf16.msra.mxu0 0
        %1227 = vmatprep.subr.bf16.mxu0 0
        %1228 = vmatpush2.bf16.msra.mxu0 0
        %1229 = vmatprep.mubr.bf16.mxu0 0
        %1230 = vmatmul.mubr.bf16.gmra.mxu0 %v1195
        %v1231 = vpop.f32.mrf.mxu0
        %v1232 = vadd.f32 0.0, %v1231
        %v1233 = vpop.f32.mrf.mxu0
        %v1234 = vpop.f32.mrf.mxu0
        %v1235 = vpop.f32.mrf.mxu0
        %1236 = vdwg.mxu0
        %v1239 = vunpack.c.l.b16 %v1088
        %v1240 = vunpack.c.l.b16 %v1089
        %v1241 = vpack.c.b16 %v1240, %v1239
        %v1244 = vsel %vm665, %v1081, 0
        %1246 = vmatprep.subr.bf16.mxu0 0
        %1247 = vmatpush1.bf16.msra.mxu0 0
        %1248 = vmatprep.subr.bf16.mxu0 0
        %1249 = vmatpush1.bf16.msra.mxu0 0
        %1250 = vmatprep.subr.bf16.mxu0 0
        %1251 = vmatpush1.bf16.msra.mxu0 0
        %1252 = vmatprep.subr.bf16.mxu0 0
        %1253 = vmatpush1.bf16.msra.mxu0 0
        %1254 = vmatprep.subr.bf16.mxu0 0
        %1255 = vmatpush1.bf16.msra.mxu0 0
        %1256 = vmatprep.subr.bf16.mxu0 0
        %1257 = vmatpush1.bf16.msra.mxu0 0
        %1258 = vmatprep.subr.bf16.mxu0 0
        %1259 = vmatpush1.bf16.msra.mxu0 0
        %1260 = vmatprep.subr.bf16.mxu0 0
        %1261 = vmatpush1.bf16.msra.mxu0 %v1241
        %1262 = vmatprep.subr.bf16.mxu0 0
        %1263 = vmatpush2.bf16.msra.mxu0 0
        %1264 = vmatprep.subr.bf16.mxu0 0
        %1265 = vmatpush2.bf16.msra.mxu0 0
        %1266 = vmatprep.subr.bf16.mxu0 0
        %1267 = vmatpush2.bf16.msra.mxu0 0
        %1268 = vmatprep.subr.bf16.mxu0 0
        %1269 = vmatpush2.bf16.msra.mxu0 0
        %1270 = vmatprep.subr.bf16.mxu0 0
        %1271 = vmatpush2.bf16.msra.mxu0 0
        %1272 = vmatprep.subr.bf16.mxu0 0
        %1273 = vmatpush2.bf16.msra.mxu0 0
        %1274 = vmatprep.subr.bf16.mxu0 0
        %1275 = vmatpush2.bf16.msra.mxu0 0
        %1276 = vmatprep.subr.bf16.mxu0 0
        %1277 = vmatpush2.bf16.msra.mxu0 0
        %1278 = vmatprep.mubr.bf16.mxu0 0
        %1279 = vmatmul.mubr.bf16.gmra.mxu0 %v1244
        %v1280 = vpop.f32.mrf.mxu0
        %v1281 = vadd.f32 0.0, %v1280
        %v1282 = vpop.f32.mrf.mxu0
        %v1283 = vpop.f32.mrf.mxu0
        %v1284 = vpop.f32.mrf.mxu0
        %1285 = vdwg.mxu0
        %v1286 = vsel %vm532, %v1134, 0.0
        %v1287 = vsel %vm532, %v1183, 0.0
        %v1288 = vadd.f32 %v1286, %v1287
        %v1289 = vsel %vm532, %v1232, 0.0
        %v1290 = vadd.f32 %v1288, %v1289
        %v1291 = vsel %vm532, %v1281, 0.0
        %v1292 = vadd.f32 %v1290, %v1291
        %v1293 = vadd.f32 %v529, %v1292
        %v1294 = vld [vmem:[%s7] sm:$0x1]
        %v1295 = vmul.f32 %v1293, %v1293
        %v1296 = vsel %vm532, %v1295, 0.0
        %1297 = vadd.xlane.f32.xlu0 %v1296
        %v1298 = vpop.xlane.xlu0 %1297
        %v1299 = vmul.f32 %v1298, %v536
        %v1300 = vadd.f32 %v1299, 1e-06
        %v1301 = vrsqrt.pop %v1300
        %v1302 = vmul.f32 %v1293, %v1301
        %v1303 = vadd.f32 %v1294, 1.0
        %v1305 = vlaneseq
        %v1306 = vshrl.u32 %v1305, 7
        %v1307 = vsub.s32 0, %v1306
        %v1308 = vrot.slane %v1303, %v1307
        %v1310 = vmul.f32 %v1302, %v1308
        %v1311 = vpack.c.bf16 %v1310, %v1310
        %v1312 = vld [vmem:[%s8] sm:$0xf]
        %v1313 = vld [vmem:[%s8 + $0x4] sm:$0xf]
        %v1314 = vld [vmem:[%s8 + $0x8] sm:$0xf]
        %v1315 = vld [vmem:[%s8 + $0xc] sm:$0xf]
        %v1320 = vunpack.c.l.b16 %v1312
        %v1321 = vunpack.c.l.b16 %v1313
        %v1322 = vunpack.c.l.b16 %v1314
        %v1323 = vunpack.c.l.b16 %v1315
        %v1324 = vpack.c.b16 %v1321, %v1320
        %v1325 = vpack.c.b16 %v1323, %v1322
        %v1329 = vsel %vm532, %v1311, 0
        %1331 = vmatprep.subr.bf16.mxu0 0
        %1332 = vmatpush1.bf16.msra.mxu0 0
        %1333 = vmatprep.subr.bf16.mxu0 0
        %1334 = vmatpush1.bf16.msra.mxu0 0
        %1335 = vmatprep.subr.bf16.mxu0 0
        %1336 = vmatpush1.bf16.msra.mxu0 0
        %1337 = vmatprep.subr.bf16.mxu0 0
        %1338 = vmatpush1.bf16.msra.mxu0 0
        %1339 = vmatprep.subr.bf16.mxu0 0
        %1340 = vmatpush1.bf16.msra.mxu0 0
        %1341 = vmatprep.subr.bf16.mxu0 0
        %1342 = vmatpush1.bf16.msra.mxu0 0
        %1343 = vmatprep.subr.bf16.mxu0 0
        %1344 = vmatpush1.bf16.msra.mxu0 %v1325
        %1345 = vmatprep.subr.bf16.mxu0 0
        %1346 = vmatpush1.bf16.msra.mxu0 %v1324
        %1347 = vmatprep.subr.bf16.mxu0 0
        %1348 = vmatpush2.bf16.msra.mxu0 0
        %1349 = vmatprep.subr.bf16.mxu0 0
        %1350 = vmatpush2.bf16.msra.mxu0 0
        %1351 = vmatprep.subr.bf16.mxu0 0
        %1352 = vmatpush2.bf16.msra.mxu0 0
        %1353 = vmatprep.subr.bf16.mxu0 0
        %1354 = vmatpush2.bf16.msra.mxu0 0
        %1355 = vmatprep.subr.bf16.mxu0 0
        %1356 = vmatpush2.bf16.msra.mxu0 0
        %1357 = vmatprep.subr.bf16.mxu0 0
        %1358 = vmatpush2.bf16.msra.mxu0 0
        %1359 = vmatprep.subr.bf16.mxu0 0
        %1360 = vmatpush2.bf16.msra.mxu0 0
        %1361 = vmatprep.subr.bf16.mxu0 0
        %1362 = vmatpush2.bf16.msra.mxu0 0
        %1363 = vmatprep.mubr.bf16.mxu0 0
        %1364 = vmatmul.mubr.bf16.gmra.mxu0 %v1329
        %v1365 = vpop.f32.mrf.mxu0
        %v1366 = vadd.f32 0.0, %v1365
        %v1367 = vpop.f32.mrf.mxu0
        %v1368 = vpop.f32.mrf.mxu0
        %v1369 = vpop.f32.mrf.mxu0
        %1370 = vdwg.mxu0
        %v1371 = vmul.f32 %v1366, 0.5
        %v1372 = vmul.f32 %v1366, 0.044715
        %v1373 = vmul.f32 %v1372, %v1366
        %v1374 = vmul.f32 %v1373, %v1366
        %v1375 = vadd.f32 %v1366, %v1374
        %v1376 = vmul.f32 %v1375, 0.7978846
        %v1377 = vtanh.pop %v1376
        %v1378 = vadd.f32 %v1377, 1.0
        %v1379 = vmul.f32 %v1371, %v1378
        %1381 = vrot.lane.b32.xlu0 %v1366, 64
        %v1382 = vpop.permute.xlu0 %1381
        %v1384 = vmul.f32 %v1379, %v1382
        %v1385 = vpack.c.bf16 %v1384, %v1384
        %v1386 = vld [vmem:[%s9] sm:$0xf]
        %v1387 = vld [vmem:[%s9 + $0x4] sm:$0xf]
        %v1388 = vld [vmem:[%s9 + $0x8] sm:$0xf]
        %v1389 = vld [vmem:[%s9 + $0xc] sm:$0xf]
        %v1390 = vld [vmem:[%s9 + $0x10] sm:$0xf]
        %v1391 = vld [vmem:[%s9 + $0x14] sm:$0xf]
        %v1392 = vld [vmem:[%s9 + $0x18] sm:$0xf]
        %v1393 = vld [vmem:[%s9 + $0x1c] sm:$0xf]
        %v1402 = vunpack.c.l.b16 %v1386
        %v1403 = vunpack.c.l.b16 %v1387
        %v1404 = vunpack.c.l.b16 %v1388
        %v1405 = vunpack.c.l.b16 %v1389
        %v1406 = vunpack.c.l.b16 %v1390
        %v1407 = vunpack.c.l.b16 %v1391
        %v1408 = vunpack.c.l.b16 %v1392
        %v1409 = vunpack.c.l.b16 %v1393
        %v1410 = vpack.c.b16 %v1403, %v1402
        %v1411 = vpack.c.b16 %v1405, %v1404
        %v1412 = vpack.c.b16 %v1407, %v1406
        %v1413 = vpack.c.b16 %v1409, %v1408
        %vm1418 = vcmask 523264
        %v1420 = vsel %vm1418, %v1385, 0
        %1422 = vmatprep.subr.bf16.mxu0 0
        %1423 = vmatpush1.bf16.msra.mxu0 0
        %1424 = vmatprep.subr.bf16.mxu0 0
        %1425 = vmatpush1.bf16.msra.mxu0 0
        %1426 = vmatprep.subr.bf16.mxu0 0
        %1427 = vmatpush1.bf16.msra.mxu0 0
        %1428 = vmatprep.subr.bf16.mxu0 0
        %1429 = vmatpush1.bf16.msra.mxu0 0
        %1430 = vmatprep.subr.bf16.mxu0 0
        %1431 = vmatpush1.bf16.msra.mxu0 %v1413
        %1432 = vmatprep.subr.bf16.mxu0 0
        %1433 = vmatpush1.bf16.msra.mxu0 %v1412
        %1434 = vmatprep.subr.bf16.mxu0 0
        %1435 = vmatpush1.bf16.msra.mxu0 %v1411
        %1436 = vmatprep.subr.bf16.mxu0 0
        %1437 = vmatpush1.bf16.msra.mxu0 %v1410
        %1438 = vmatprep.subr.bf16.mxu0 0
        %1439 = vmatpush2.bf16.msra.mxu0 0
        %1440 = vmatprep.subr.bf16.mxu0 0
        %1441 = vmatpush2.bf16.msra.mxu0 0
        %1442 = vmatprep.subr.bf16.mxu0 0
        %1443 = vmatpush2.bf16.msra.mxu0 0
        %1444 = vmatprep.subr.bf16.mxu0 0
        %1445 = vmatpush2.bf16.msra.mxu0 0
        %1446 = vmatprep.subr.bf16.mxu0 0
        %1447 = vmatpush2.bf16.msra.mxu0 0
        %1448 = vmatprep.subr.bf16.mxu0 0
        %1449 = vmatpush2.bf16.msra.mxu0 0
        %1450 = vmatprep.subr.bf16.mxu0 0
        %1451 = vmatpush2.bf16.msra.mxu0 0
        %1452 = vmatprep.subr.bf16.mxu0 0
        %1453 = vmatpush2.bf16.msra.mxu0 0
        %1454 = vmatprep.mubr.bf16.mxu0 0
        %1455 = vmatmul.mubr.bf16.gmra.mxu0 %v1420
        %v1456 = vpop.f32.mrf.mxu0
        %v1457 = vadd.f32 0.0, %v1456
        %v1458 = vpop.f32.mrf.mxu0
        %v1459 = vpop.f32.mrf.mxu0
        %v1460 = vpop.f32.mrf.mxu0
        %1461 = vdwg.mxu0
        %v1462 = vadd.f32 %v1293, %v1457
        %s1463 = scalar_lea.vmem %s4, 1
        %v1464 = vld [vmem:[%s1463] sm:$0x1]
        %v1465 = vmul.f32 %v1462, %v1462
        %v1466 = vsel %vm532, %v1465, 0.0
        %1467 = vadd.xlane.f32.xlu0 %v1466
        %v1468 = vpop.xlane.xlu0 %1467
        %v1469 = vmul.f32 %v1468, %v536
        %v1470 = vadd.f32 %v1469, 1e-06
        %v1471 = vrsqrt.pop %v1470
        %v1472 = vmul.f32 %v1462, %v1471
        %v1473 = vadd.f32 %v1464, 1.0
        %v1475 = vlaneseq
        %v1476 = vshrl.u32 %v1475, 7
        %v1477 = vsub.s32 0, %v1476
        %v1478 = vrot.slane %v1473, %v1477
        %v1480 = vmul.f32 %v1472, %v1478
        %v1481 = vpack.c.bf16 %v1480, %v1480
        %s1482 = scalar_lea.vmem %s5, 32
        %v1483 = vld [vmem:[%s1482] sm:$0xff]
        %v1484 = vld [vmem:[%s1482 + $0x8] sm:$0xff]
        %v1485 = vld [vmem:[%s1482 + $0x10] sm:$0xff]
        %v1486 = vld [vmem:[%s1482 + $0x18] sm:$0xff]
        %v1491 = vunpack.c.l.b16 %v1483
        %v1492 = vunpack.c.h.b16 %v1483
        %v1493 = vunpack.c.l.b16 %v1484
        %v1494 = vunpack.c.h.b16 %v1484
        %v1495 = vunpack.c.l.b16 %v1485
        %v1496 = vunpack.c.h.b16 %v1485
        %v1497 = vunpack.c.l.b16 %v1486
        %v1498 = vunpack.c.h.b16 %v1486
        %v1499 = vpack.c.b16 %v1493, %v1491
        %v1500 = vpack.c.b16 %v1494, %v1492
        %v1501 = vpack.c.b16 %v1497, %v1495
        %v1502 = vpack.c.b16 %v1498, %v1496
        %v1508 = vsel %vm532, %v1481, 0
        %1510 = vmatprep.subr.bf16.mxu0 0
        %1511 = vmatpush1.bf16.msra.mxu0 0
        %1512 = vmatprep.subr.bf16.mxu0 0
        %1513 = vmatpush1.bf16.msra.mxu0 0
        %1514 = vmatprep.subr.bf16.mxu0 0
        %1515 = vmatpush1.bf16.msra.mxu0 0
        %1516 = vmatprep.subr.bf16.mxu0 0
        %1517 = vmatpush1.bf16.msra.mxu0 0
        %1518 = vmatprep.subr.bf16.mxu0 0
        %1519 = vmatpush1.bf16.msra.mxu0 0
        %1520 = vmatprep.subr.bf16.mxu0 0
        %1521 = vmatpush1.bf16.msra.mxu0 0
        %1522 = vmatprep.subr.bf16.mxu0 %v1502
        %1523 = vmatpush1.bf16.msra.mxu0 %v1501
        %1524 = vmatprep.subr.bf16.mxu0 %v1500
        %1525 = vmatpush1.bf16.msra.mxu0 %v1499
        %1526 = vmatprep.subr.bf16.mxu0 0
        %1527 = vmatpush2.bf16.msra.mxu0 0
        %1528 = vmatprep.subr.bf16.mxu0 0
        %1529 = vmatpush2.bf16.msra.mxu0 0
        %1530 = vmatprep.subr.bf16.mxu0 0
        %1531 = vmatpush2.bf16.msra.mxu0 0
        %1532 = vmatprep.subr.bf16.mxu0 0
        %1533 = vmatpush2.bf16.msra.mxu0 0
        %1534 = vmatprep.subr.bf16.mxu0 0
        %1535 = vmatpush2.bf16.msra.mxu0 0
        %1536 = vmatprep.subr.bf16.mxu0 0
        %1537 = vmatpush2.bf16.msra.mxu0 0
        %1538 = vmatprep.subr.bf16.mxu0 0
        %1539 = vmatpush2.bf16.msra.mxu0 0
        %1540 = vmatprep.subr.bf16.mxu0 0
        %1541 = vmatpush2.bf16.msra.mxu0 0
        %1542 = vmatprep.mubr.bf16.mxu0 0
        %1543 = vmatmul.mubr.bf16.gmra.mxu0 %v1508
        %v1544 = vpop.f32.mrf.mxu0
        %v1545 = vadd.f32 0.0, %v1544
        %v1546 = vpop.f32.mrf.mxu0
        %v1547 = vadd.f32 0.0, %v1546
        %v1548 = vpop.f32.mrf.mxu0
        %v1549 = vpop.f32.mrf.mxu0
        %1550 = vdwg.mxu0
        %v1551 = vmul.f32 %v1545, %v526
        %v1552 = vmul.f32 %v1545, %v621
        %1554 = vrot.lane.b32.xlu0 %v1552, 64
        %v1555 = vpop.permute.xlu0 %1554
        %v1557 = vadd.f32 %v1551, %v1555
        %v1558 = vmul.f32 %v1547, %v526
        %v1559 = vmul.f32 %v1547, %v631
        %1561 = vrot.lane.b32.xlu0 %v1559, 96
        %v1562 = vpop.permute.xlu0 %1561
        %v1564 = vadd.f32 %v1558, %v1562
        %1566 = vrot.lane.b32.xlu0 %v1557, 112
        %v1567 = vpop.permute.xlu0 %1566
        %1569 = vrot.lane.b32.xlu0 %v1557, 96
        %v1570 = vpop.permute.xlu0 %1569
        %1572 = vrot.lane.b32.xlu0 %v1557, 80
        %v1573 = vpop.permute.xlu0 %1572
        %v1575 = vpack.c.bf16 %v1557, %v1557
        %v1576 = vpack.c.bf16 %v1567, %v1567
        %v1577 = vpack.c.bf16 %v1570, %v1570
        %v1578 = vpack.c.bf16 %v1573, %v1573
        %1580 = vrot.lane.b32.xlu0 %v1564, 112
        %v1581 = vpop.permute.xlu0 %1580
        %v1583 = vpack.c.bf16 %v1564, %v1564
        %v1584 = vpack.c.bf16 %v1581, %v1581
        %1586 = vrot.lane.b32.xlu0 %v1547, 112
        %v1587 = vpop.permute.xlu0 %1586
        %v1589 = vpack.c.bf16 %v1547, %v1547
        %v1590 = vpack.c.bf16 %v1587, %v1587
        %v1592 = vsel %vm665, %v1575, 0
        %v1595 = vsel %vm665, %v1583, 0
        %1597 = vmatprep.subr.bf16.mxu0 0
        %1598 = vmatpush1.bf16.xpose.msra.mxu0 0
        %1599 = vmatprep.subr.bf16.mxu0 0
        %1600 = vmatpush1.bf16.xpose.msra.mxu0 0
        %1601 = vmatprep.subr.bf16.mxu0 0
        %1602 = vmatpush1.bf16.xpose.msra.mxu0 0
        %1603 = vmatprep.subr.bf16.mxu0 0
        %1604 = vmatpush1.bf16.xpose.msra.mxu0 0
        %1605 = vmatprep.subr.bf16.mxu0 0
        %1606 = vmatpush1.bf16.xpose.msra.mxu0 0
        %1607 = vmatprep.subr.bf16.mxu0 0
        %1608 = vmatpush1.bf16.xpose.msra.mxu0 0
        %1609 = vmatprep.subr.bf16.mxu0 0
        %1610 = vmatpush1.bf16.xpose.msra.mxu0 0
        %1611 = vmatprep.subr.bf16.mxu0 0
        %1612 = vmatpush1.bf16.xpose.msra.mxu0 %v1595
        %1613 = vmatprep.subr.bf16.mxu0 0
        %1614 = vmatpush2.bf16.xpose.msra.mxu0 0
        %1615 = vmatprep.subr.bf16.mxu0 0
        %1616 = vmatpush2.bf16.xpose.msra.mxu0 0
        %1617 = vmatprep.subr.bf16.mxu0 0
        %1618 = vmatpush2.bf16.xpose.msra.mxu0 0
        %1619 = vmatprep.subr.bf16.mxu0 0
        %1620 = vmatpush2.bf16.xpose.msra.mxu0 0
        %1621 = vmatprep.subr.bf16.mxu0 0
        %1622 = vmatpush2.bf16.xpose.msra.mxu0 0
        %1623 = vmatprep.subr.bf16.mxu0 0
        %1624 = vmatpush2.bf16.xpose.msra.mxu0 0
        %1625 = vmatprep.subr.bf16.mxu0 0
        %1626 = vmatpush2.bf16.xpose.msra.mxu0 0
        %1627 = vmatprep.subr.bf16.mxu0 0
        %1628 = vmatpush2.bf16.xpose.msra.mxu0 0
        %1629 = vmatprep.mubr.bf16.mxu0 0
        %1630 = vmatmul.mubr.bf16.gmra.mxu0 %v1592
        %v1631 = vpop.f32.mrf.mxu0
        %v1632 = vadd.f32 %v525, %v1631
        %v1633 = vpop.f32.mrf.mxu0
        %v1634 = vpop.f32.mrf.mxu0
        %v1635 = vpop.f32.mrf.mxu0
        %1636 = vdwg.mxu0
        %v1638 = vsel %vm665, %v1576, 0
        %1640 = vmatprep.subr.bf16.mxu0 0
        %1641 = vmatpush1.bf16.xpose.msra.mxu0 0
        %1642 = vmatprep.subr.bf16.mxu0 0
        %1643 = vmatpush1.bf16.xpose.msra.mxu0 0
        %1644 = vmatprep.subr.bf16.mxu0 0
        %1645 = vmatpush1.bf16.xpose.msra.mxu0 0
        %1646 = vmatprep.subr.bf16.mxu0 0
        %1647 = vmatpush1.bf16.xpose.msra.mxu0 0
        %1648 = vmatprep.subr.bf16.mxu0 0
        %1649 = vmatpush1.bf16.xpose.msra.mxu0 0
        %1650 = vmatprep.subr.bf16.mxu0 0
        %1651 = vmatpush1.bf16.xpose.msra.mxu0 0
        %1652 = vmatprep.subr.bf16.mxu0 0
        %1653 = vmatpush1.bf16.xpose.msra.mxu0 0
        %1654 = vmatprep.subr.bf16.mxu0 0
        %1655 = vmatpush1.bf16.xpose.msra.mxu0 %v1595
        %1656 = vmatprep.subr.bf16.mxu0 0
        %1657 = vmatpush2.bf16.xpose.msra.mxu0 0
        %1658 = vmatprep.subr.bf16.mxu0 0
        %1659 = vmatpush2.bf16.xpose.msra.mxu0 0
        %1660 = vmatprep.subr.bf16.mxu0 0
        %1661 = vmatpush2.bf16.xpose.msra.mxu0 0
        %1662 = vmatprep.subr.bf16.mxu0 0
        %1663 = vmatpush2.bf16.xpose.msra.mxu0 0
        %1664 = vmatprep.subr.bf16.mxu0 0
        %1665 = vmatpush2.bf16.xpose.msra.mxu0 0
        %1666 = vmatprep.subr.bf16.mxu0 0
        %1667 = vmatpush2.bf16.xpose.msra.mxu0 0
        %1668 = vmatprep.subr.bf16.mxu0 0
        %1669 = vmatpush2.bf16.xpose.msra.mxu0 0
        %1670 = vmatprep.subr.bf16.mxu0 0
        %1671 = vmatpush2.bf16.xpose.msra.mxu0 0
        %1672 = vmatprep.mubr.bf16.mxu0 0
        %1673 = vmatmul.mubr.bf16.gmra.mxu0 %v1638
        %v1674 = vpop.f32.mrf.mxu0
        %v1675 = vadd.f32 %v525, %v1674
        %v1676 = vpop.f32.mrf.mxu0
        %v1677 = vpop.f32.mrf.mxu0
        %v1678 = vpop.f32.mrf.mxu0
        %1679 = vdwg.mxu0
        %v1681 = vsel %vm665, %v1577, 0
        %v1684 = vsel %vm665, %v1584, 0
        %1686 = vmatprep.subr.bf16.mxu0 0
        %1687 = vmatpush1.bf16.xpose.msra.mxu0 0
        %1688 = vmatprep.subr.bf16.mxu0 0
        %1689 = vmatpush1.bf16.xpose.msra.mxu0 0
        %1690 = vmatprep.subr.bf16.mxu0 0
        %1691 = vmatpush1.bf16.xpose.msra.mxu0 0
        %1692 = vmatprep.subr.bf16.mxu0 0
        %1693 = vmatpush1.bf16.xpose.msra.mxu0 0
        %1694 = vmatprep.subr.bf16.mxu0 0
        %1695 = vmatpush1.bf16.xpose.msra.mxu0 0
        %1696 = vmatprep.subr.bf16.mxu0 0
        %1697 = vmatpush1.bf16.xpose.msra.mxu0 0
        %1698 = vmatprep.subr.bf16.mxu0 0
        %1699 = vmatpush1.bf16.xpose.msra.mxu0 0
        %1700 = vmatprep.subr.bf16.mxu0 0
        %1701 = vmatpush1.bf16.xpose.msra.mxu0 %v1684
        %1702 = vmatprep.subr.bf16.mxu0 0
        %1703 = vmatpush2.bf16.xpose.msra.mxu0 0
        %1704 = vmatprep.subr.bf16.mxu0 0
        %1705 = vmatpush2.bf16.xpose.msra.mxu0 0
        %1706 = vmatprep.subr.bf16.mxu0 0
        %1707 = vmatpush2.bf16.xpose.msra.mxu0 0
        %1708 = vmatprep.subr.bf16.mxu0 0
        %1709 = vmatpush2.bf16.xpose.msra.mxu0 0
        %1710 = vmatprep.subr.bf16.mxu0 0
        %1711 = vmatpush2.bf16.xpose.msra.mxu0 0
        %1712 = vmatprep.subr.bf16.mxu0 0
        %1713 = vmatpush2.bf16.xpose.msra.mxu0 0
        %1714 = vmatprep.subr.bf16.mxu0 0
        %1715 = vmatpush2.bf16.xpose.msra.mxu0 0
        %1716 = vmatprep.subr.bf16.mxu0 0
        %1717 = vmatpush2.bf16.xpose.msra.mxu0 0
        %1718 = vmatprep.mubr.bf16.mxu0 0
        %1719 = vmatmul.mubr.bf16.gmra.mxu0 %v1681
        %v1720 = vpop.f32.mrf.mxu0
        %v1721 = vadd.f32 %v525, %v1720
        %v1722 = vpop.f32.mrf.mxu0
        %v1723 = vpop.f32.mrf.mxu0
        %v1724 = vpop.f32.mrf.mxu0
        %1725 = vdwg.mxu0
        %v1727 = vsel %vm665, %v1578, 0
        %1729 = vmatprep.subr.bf16.mxu0 0
        %1730 = vmatpush1.bf16.xpose.msra.mxu0 0
        %1731 = vmatprep.subr.bf16.mxu0 0
        %1732 = vmatpush1.bf16.xpose.msra.mxu0 0
        %1733 = vmatprep.subr.bf16.mxu0 0
        %1734 = vmatpush1.bf16.xpose.msra.mxu0 0
        %1735 = vmatprep.subr.bf16.mxu0 0
        %1736 = vmatpush1.bf16.xpose.msra.mxu0 0
        %1737 = vmatprep.subr.bf16.mxu0 0
        %1738 = vmatpush1.bf16.xpose.msra.mxu0 0
        %1739 = vmatprep.subr.bf16.mxu0 0
        %1740 = vmatpush1.bf16.xpose.msra.mxu0 0
        %1741 = vmatprep.subr.bf16.mxu0 0
        %1742 = vmatpush1.bf16.xpose.msra.mxu0 0
        %1743 = vmatprep.subr.bf16.mxu0 0
        %1744 = vmatpush1.bf16.xpose.msra.mxu0 %v1684
        %1745 = vmatprep.subr.bf16.mxu0 0
        %1746 = vmatpush2.bf16.xpose.msra.mxu0 0
        %1747 = vmatprep.subr.bf16.mxu0 0
        %1748 = vmatpush2.bf16.xpose.msra.mxu0 0
        %1749 = vmatprep.subr.bf16.mxu0 0
        %1750 = vmatpush2.bf16.xpose.msra.mxu0 0
        %1751 = vmatprep.subr.bf16.mxu0 0
        %1752 = vmatpush2.bf16.xpose.msra.mxu0 0
        %1753 = vmatprep.subr.bf16.mxu0 0
        %1754 = vmatpush2.bf16.xpose.msra.mxu0 0
        %1755 = vmatprep.subr.bf16.mxu0 0
        %1756 = vmatpush2.bf16.xpose.msra.mxu0 0
        %1757 = vmatprep.subr.bf16.mxu0 0
        %1758 = vmatpush2.bf16.xpose.msra.mxu0 0
        %1759 = vmatprep.subr.bf16.mxu0 0
        %1760 = vmatpush2.bf16.xpose.msra.mxu0 0
        %1761 = vmatprep.mubr.bf16.mxu0 0
        %1762 = vmatmul.mubr.bf16.gmra.mxu0 %v1727
        %v1763 = vpop.f32.mrf.mxu0
        %v1764 = vadd.f32 %v525, %v1763
        %v1765 = vpop.f32.mrf.mxu0
        %v1766 = vpop.f32.mrf.mxu0
        %v1767 = vpop.f32.mrf.mxu0
        %1768 = vdwg.mxu0
        %v1769 = vsel %vm844, %v1632, -inf
        %1770 = vmax.xlane.f32.xlu0 %v1769
        %v1771 = vpop.xlane.xlu0 %1770
        %v1772 = vsel %vm844, %v1675, -inf
        %1773 = vmax.xlane.f32.xlu0 %v1772
        %v1774 = vpop.xlane.xlu0 %1773
        %v1775 = vsel %vm844, %v1721, -inf
        %1776 = vmax.xlane.f32.xlu0 %v1775
        %v1777 = vpop.xlane.xlu0 %1776
        %v1778 = vsel %vm844, %v1764, -inf
        %1779 = vmax.xlane.f32.xlu0 %v1778
        %v1780 = vpop.xlane.xlu0 %1779
        %v1781 = vsub.f32 %v1632, %v1771
        %v1782 = vsub.f32 %v1675, %v1774
        %v1783 = vsub.f32 %v1721, %v1777
        %v1784 = vsub.f32 %v1764, %v1780
        %v1785 = vmul.f32 %v1781, 1.442695
        %v1786 = vpow.pop %v1785
        %v1787 = vmul.f32 %v1782, 1.442695
        %v1788 = vpow.pop %v1787
        %v1789 = vmul.f32 %v1783, 1.442695
        %v1790 = vpow.pop %v1789
        %v1791 = vmul.f32 %v1784, 1.442695
        %v1792 = vpow.pop %v1791
        %v1793 = vsel %vm844, %v1786, 0.0
        %1794 = vadd.xlane.f32.xlu0 %v1793
        %v1795 = vpop.xlane.xlu0 %1794
        %v1796 = vsel %vm844, %v1788, 0.0
        %1797 = vadd.xlane.f32.xlu0 %v1796
        %v1798 = vpop.xlane.xlu0 %1797
        %v1799 = vsel %vm844, %v1790, 0.0
        %1800 = vadd.xlane.f32.xlu0 %v1799
        %v1801 = vpop.xlane.xlu0 %1800
        %v1802 = vsel %vm844, %v1792, 0.0
        %1803 = vadd.xlane.f32.xlu0 %v1802
        %v1804 = vpop.xlane.xlu0 %1803
        %v1805 = vrcp.pop %v1795
        %v1806 = vrcp.pop %v1798
        %v1807 = vrcp.pop %v1801
        %v1808 = vrcp.pop %v1804
        %v1809 = vmul.f32 %v1786, %v1805
        %v1810 = vmul.f32 %v1788, %v1806
        %v1811 = vmul.f32 %v1790, %v1807
        %v1812 = vmul.f32 %v1792, %v1808
        %v1813 = vpack.c.bf16 %v1809, %v1809
        %v1814 = vpack.c.bf16 %v1810, %v1810
        %v1815 = vpack.c.bf16 %v1811, %v1811
        %v1816 = vpack.c.bf16 %v1812, %v1812
        %1818 = vrot.lane.b32.xlu0 %v1589, 64
        %v1819 = vpop.permute.xlu0 %1818
        %v1821 = vsel %vm844, %v1813, 0
        %v1824 = vsel %vm899, %v1819, 0
        %1826 = vmatprep.subr.bf16.mxu0 0
        %1827 = vmatpush1.bf16.msra.mxu0 0
        %1828 = vmatprep.subr.bf16.mxu0 0
        %1829 = vmatpush1.bf16.msra.mxu0 0
        %1830 = vmatprep.subr.bf16.mxu0 0
        %1831 = vmatpush1.bf16.msra.mxu0 0
        %1832 = vmatprep.subr.bf16.mxu0 0
        %1833 = vmatpush1.bf16.msra.mxu0 0
        %1834 = vmatprep.subr.bf16.mxu0 0
        %1835 = vmatpush1.bf16.msra.mxu0 0
        %1836 = vmatprep.subr.bf16.mxu0 0
        %1837 = vmatpush1.bf16.msra.mxu0 0
        %1838 = vmatprep.subr.bf16.mxu0 0
        %1839 = vmatpush1.bf16.msra.mxu0 0
        %1840 = vmatprep.subr.bf16.mxu0 0
        %1841 = vmatpush1.bf16.msra.mxu0 %v1824
        %1842 = vmatprep.subr.bf16.mxu0 0
        %1843 = vmatpush2.bf16.msra.mxu0 0
        %1844 = vmatprep.subr.bf16.mxu0 0
        %1845 = vmatpush2.bf16.msra.mxu0 0
        %1846 = vmatprep.subr.bf16.mxu0 0
        %1847 = vmatpush2.bf16.msra.mxu0 0
        %1848 = vmatprep.subr.bf16.mxu0 0
        %1849 = vmatpush2.bf16.msra.mxu0 0
        %1850 = vmatprep.subr.bf16.mxu0 0
        %1851 = vmatpush2.bf16.msra.mxu0 0
        %1852 = vmatprep.subr.bf16.mxu0 0
        %1853 = vmatpush2.bf16.msra.mxu0 0
        %1854 = vmatprep.subr.bf16.mxu0 0
        %1855 = vmatpush2.bf16.msra.mxu0 0
        %1856 = vmatprep.subr.bf16.mxu0 0
        %1857 = vmatpush2.bf16.msra.mxu0 0
        %1858 = vmatprep.mubr.bf16.mxu0 0
        %1859 = vmatmul.mubr.bf16.gmra.mxu0 %v1821
        %v1860 = vpop.f32.mrf.mxu0
        %v1861 = vadd.f32 0.0, %v1860
        %v1862 = vpop.f32.mrf.mxu0
        %v1863 = vpop.f32.mrf.mxu0
        %v1864 = vpop.f32.mrf.mxu0
        %1865 = vdwg.mxu0
        %v1867 = vsel %vm844, %v1814, 0
        %1869 = vmatprep.subr.bf16.mxu0 0
        %1870 = vmatpush1.bf16.msra.mxu0 0
        %1871 = vmatprep.subr.bf16.mxu0 0
        %1872 = vmatpush1.bf16.msra.mxu0 0
        %1873 = vmatprep.subr.bf16.mxu0 0
        %1874 = vmatpush1.bf16.msra.mxu0 0
        %1875 = vmatprep.subr.bf16.mxu0 0
        %1876 = vmatpush1.bf16.msra.mxu0 0
        %1877 = vmatprep.subr.bf16.mxu0 0
        %1878 = vmatpush1.bf16.msra.mxu0 0
        %1879 = vmatprep.subr.bf16.mxu0 0
        %1880 = vmatpush1.bf16.msra.mxu0 0
        %1881 = vmatprep.subr.bf16.mxu0 0
        %1882 = vmatpush1.bf16.msra.mxu0 0
        %1883 = vmatprep.subr.bf16.mxu0 0
        %1884 = vmatpush1.bf16.msra.mxu0 %v1824
        %1885 = vmatprep.subr.bf16.mxu0 0
        %1886 = vmatpush2.bf16.msra.mxu0 0
        %1887 = vmatprep.subr.bf16.mxu0 0
        %1888 = vmatpush2.bf16.msra.mxu0 0
        %1889 = vmatprep.subr.bf16.mxu0 0
        %1890 = vmatpush2.bf16.msra.mxu0 0
        %1891 = vmatprep.subr.bf16.mxu0 0
        %1892 = vmatpush2.bf16.msra.mxu0 0
        %1893 = vmatprep.subr.bf16.mxu0 0
        %1894 = vmatpush2.bf16.msra.mxu0 0
        %1895 = vmatprep.subr.bf16.mxu0 0
        %1896 = vmatpush2.bf16.msra.mxu0 0
        %1897 = vmatprep.subr.bf16.mxu0 0
        %1898 = vmatpush2.bf16.msra.mxu0 0
        %1899 = vmatprep.subr.bf16.mxu0 0
        %1900 = vmatpush2.bf16.msra.mxu0 0
        %1901 = vmatprep.mubr.bf16.mxu0 0
        %1902 = vmatmul.mubr.bf16.gmra.mxu0 %v1867
        %v1903 = vpop.f32.mrf.mxu0
        %v1904 = vadd.f32 0.0, %v1903
        %v1905 = vpop.f32.mrf.mxu0
        %v1906 = vpop.f32.mrf.mxu0
        %v1907 = vpop.f32.mrf.mxu0
        %1908 = vdwg.mxu0
        %1910 = vrot.lane.b32.xlu0 %v1590, 64
        %v1911 = vpop.permute.xlu0 %1910
        %v1913 = vsel %vm844, %v1815, 0
        %v1916 = vsel %vm899, %v1911, 0
        %1918 = vmatprep.subr.bf16.mxu0 0
        %1919 = vmatpush1.bf16.msra.mxu0 0
        %1920 = vmatprep.subr.bf16.mxu0 0
        %1921 = vmatpush1.bf16.msra.mxu0 0
        %1922 = vmatprep.subr.bf16.mxu0 0
        %1923 = vmatpush1.bf16.msra.mxu0 0
        %1924 = vmatprep.subr.bf16.mxu0 0
        %1925 = vmatpush1.bf16.msra.mxu0 0
        %1926 = vmatprep.subr.bf16.mxu0 0
        %1927 = vmatpush1.bf16.msra.mxu0 0
        %1928 = vmatprep.subr.bf16.mxu0 0
        %1929 = vmatpush1.bf16.msra.mxu0 0
        %1930 = vmatprep.subr.bf16.mxu0 0
        %1931 = vmatpush1.bf16.msra.mxu0 0
        %1932 = vmatprep.subr.bf16.mxu0 0
        %1933 = vmatpush1.bf16.msra.mxu0 %v1916
        %1934 = vmatprep.subr.bf16.mxu0 0
        %1935 = vmatpush2.bf16.msra.mxu0 0
        %1936 = vmatprep.subr.bf16.mxu0 0
        %1937 = vmatpush2.bf16.msra.mxu0 0
        %1938 = vmatprep.subr.bf16.mxu0 0
        %1939 = vmatpush2.bf16.msra.mxu0 0
        %1940 = vmatprep.subr.bf16.mxu0 0
        %1941 = vmatpush2.bf16.msra.mxu0 0
        %1942 = vmatprep.subr.bf16.mxu0 0
        %1943 = vmatpush2.bf16.msra.mxu0 0
        %1944 = vmatprep.subr.bf16.mxu0 0
        %1945 = vmatpush2.bf16.msra.mxu0 0
        %1946 = vmatprep.subr.bf16.mxu0 0
        %1947 = vmatpush2.bf16.msra.mxu0 0
        %1948 = vmatprep.subr.bf16.mxu0 0
        %1949 = vmatpush2.bf16.msra.mxu0 0
        %1950 = vmatprep.mubr.bf16.mxu0 0
        %1951 = vmatmul.mubr.bf16.gmra.mxu0 %v1913
        %v1952 = vpop.f32.mrf.mxu0
        %v1953 = vadd.f32 0.0, %v1952
        %v1954 = vpop.f32.mrf.mxu0
        %v1955 = vpop.f32.mrf.mxu0
        %v1956 = vpop.f32.mrf.mxu0
        %1957 = vdwg.mxu0
        %v1959 = vsel %vm844, %v1816, 0
        %1961 = vmatprep.subr.bf16.mxu0 0
        %1962 = vmatpush1.bf16.msra.mxu0 0
        %1963 = vmatprep.subr.bf16.mxu0 0
        %1964 = vmatpush1.bf16.msra.mxu0 0
        %1965 = vmatprep.subr.bf16.mxu0 0
        %1966 = vmatpush1.bf16.msra.mxu0 0
        %1967 = vmatprep.subr.bf16.mxu0 0
        %1968 = vmatpush1.bf16.msra.mxu0 0
        %1969 = vmatprep.subr.bf16.mxu0 0
        %1970 = vmatpush1.bf16.msra.mxu0 0
        %1971 = vmatprep.subr.bf16.mxu0 0
        %1972 = vmatpush1.bf16.msra.mxu0 0
        %1973 = vmatprep.subr.bf16.mxu0 0
        %1974 = vmatpush1.bf16.msra.mxu0 0
        %1975 = vmatprep.subr.bf16.mxu0 0
        %1976 = vmatpush1.bf16.msra.mxu0 %v1916
        %1977 = vmatprep.subr.bf16.mxu0 0
        %1978 = vmatpush2.bf16.msra.mxu0 0
        %1979 = vmatprep.subr.bf16.mxu0 0
        %1980 = vmatpush2.bf16.msra.mxu0 0
        %1981 = vmatprep.subr.bf16.mxu0 0
        %1982 = vmatpush2.bf16.msra.mxu0 0
        %1983 = vmatprep.subr.bf16.mxu0 0
        %1984 = vmatpush2.bf16.msra.mxu0 0
        %1985 = vmatprep.subr.bf16.mxu0 0
        %1986 = vmatpush2.bf16.msra.mxu0 0
        %1987 = vmatprep.subr.bf16.mxu0 0
        %1988 = vmatpush2.bf16.msra.mxu0 0
        %1989 = vmatprep.subr.bf16.mxu0 0
        %1990 = vmatpush2.bf16.msra.mxu0 0
        %1991 = vmatprep.subr.bf16.mxu0 0
        %1992 = vmatpush2.bf16.msra.mxu0 0
        %1993 = vmatprep.mubr.bf16.mxu0 0
        %1994 = vmatmul.mubr.bf16.gmra.mxu0 %v1959
        %v1995 = vpop.f32.mrf.mxu0
        %v1996 = vadd.f32 0.0, %v1995
        %v1997 = vpop.f32.mrf.mxu0
        %v1998 = vpop.f32.mrf.mxu0
        %v1999 = vpop.f32.mrf.mxu0
        %2000 = vdwg.mxu0
        %v2001 = vpack.c.bf16 %v1861, %v1861
        %v2002 = vpack.c.bf16 %v1904, %v1904
        %v2003 = vpack.c.bf16 %v1953, %v1953
        %v2004 = vpack.c.bf16 %v1996, %v1996
        %s2005 = scalar_lea.vmem [#allocation10], 32
        %v2006 = vld [vmem:[%s2005] sm:$0xf]
        %v2007 = vld [vmem:[%s2005 + $0x4] sm:$0xf]
        %v2008 = vld [vmem:[%s2005 + $0x8] sm:$0xf]
        %v2009 = vld [vmem:[%s2005 + $0xc] sm:$0xf]
        %v2010 = vld [vmem:[%s2005 + $0x10] sm:$0xf]
        %v2011 = vld [vmem:[%s2005 + $0x14] sm:$0xf]
        %v2012 = vld [vmem:[%s2005 + $0x18] sm:$0xf]
        %v2013 = vld [vmem:[%s2005 + $0x1c] sm:$0xf]
        %v2016 = vunpack.c.l.b16 %v2006
        %v2017 = vunpack.c.l.b16 %v2007
        %v2018 = vpack.c.b16 %v2017, %v2016
        %v2021 = vsel %vm665, %v2001, 0
        %2023 = vmatprep.subr.bf16.mxu0 0
        %2024 = vmatpush1.bf16.msra.mxu0 0
        %2025 = vmatprep.subr.bf16.mxu0 0
        %2026 = vmatpush1.bf16.msra.mxu0 0
        %2027 = vmatprep.subr.bf16.mxu0 0
        %2028 = vmatpush1.bf16.msra.mxu0 0
        %2029 = vmatprep.subr.bf16.mxu0 0
        %2030 = vmatpush1.bf16.msra.mxu0 0
        %2031 = vmatprep.subr.bf16.mxu0 0
        %2032 = vmatpush1.bf16.msra.mxu0 0
        %2033 = vmatprep.subr.bf16.mxu0 0
        %2034 = vmatpush1.bf16.msra.mxu0 0
        %2035 = vmatprep.subr.bf16.mxu0 0
        %2036 = vmatpush1.bf16.msra.mxu0 0
        %2037 = vmatprep.subr.bf16.mxu0 0
        %2038 = vmatpush1.bf16.msra.mxu0 %v2018
        %2039 = vmatprep.subr.bf16.mxu0 0
        %2040 = vmatpush2.bf16.msra.mxu0 0
        %2041 = vmatprep.subr.bf16.mxu0 0
        %2042 = vmatpush2.bf16.msra.mxu0 0
        %2043 = vmatprep.subr.bf16.mxu0 0
        %2044 = vmatpush2.bf16.msra.mxu0 0
        %2045 = vmatprep.subr.bf16.mxu0 0
        %2046 = vmatpush2.bf16.msra.mxu0 0
        %2047 = vmatprep.subr.bf16.mxu0 0
        %2048 = vmatpush2.bf16.msra.mxu0 0
        %2049 = vmatprep.subr.bf16.mxu0 0
        %2050 = vmatpush2.bf16.msra.mxu0 0
        %2051 = vmatprep.subr.bf16.mxu0 0
        %2052 = vmatpush2.bf16.msra.mxu0 0
        %2053 = vmatprep.subr.bf16.mxu0 0
        %2054 = vmatpush2.bf16.msra.mxu0 0
        %2055 = vmatprep.mubr.bf16.mxu0 0
        %2056 = vmatmul.mubr.bf16.gmra.mxu0 %v2021
        %v2057 = vpop.f32.mrf.mxu0
        %v2058 = vadd.f32 0.0, %v2057
        %v2059 = vpop.f32.mrf.mxu0
        %v2060 = vpop.f32.mrf.mxu0
        %v2061 = vpop.f32.mrf.mxu0
        %2062 = vdwg.mxu0
        %v2065 = vunpack.c.l.b16 %v2008
        %v2066 = vunpack.c.l.b16 %v2009
        %v2067 = vpack.c.b16 %v2066, %v2065
        %v2070 = vsel %vm665, %v2002, 0
        %2072 = vmatprep.subr.bf16.mxu0 0
        %2073 = vmatpush1.bf16.msra.mxu0 0
        %2074 = vmatprep.subr.bf16.mxu0 0
        %2075 = vmatpush1.bf16.msra.mxu0 0
        %2076 = vmatprep.subr.bf16.mxu0 0
        %2077 = vmatpush1.bf16.msra.mxu0 0
        %2078 = vmatprep.subr.bf16.mxu0 0
        %2079 = vmatpush1.bf16.msra.mxu0 0
        %2080 = vmatprep.subr.bf16.mxu0 0
        %2081 = vmatpush1.bf16.msra.mxu0 0
        %2082 = vmatprep.subr.bf16.mxu0 0
        %2083 = vmatpush1.bf16.msra.mxu0 0
        %2084 = vmatprep.subr.bf16.mxu0 0
        %2085 = vmatpush1.bf16.msra.mxu0 0
        %2086 = vmatprep.subr.bf16.mxu0 0
        %2087 = vmatpush1.bf16.msra.mxu0 %v2067
        %2088 = vmatprep.subr.bf16.mxu0 0
        %2089 = vmatpush2.bf16.msra.mxu0 0
        %2090 = vmatprep.subr.bf16.mxu0 0
        %2091 = vmatpush2.bf16.msra.mxu0 0
        %2092 = vmatprep.subr.bf16.mxu0 0
        %2093 = vmatpush2.bf16.msra.mxu0 0
        %2094 = vmatprep.subr.bf16.mxu0 0
        %2095 = vmatpush2.bf16.msra.mxu0 0
        %2096 = vmatprep.subr.bf16.mxu0 0
        %2097 = vmatpush2.bf16.msra.mxu0 0
        %2098 = vmatprep.subr.bf16.mxu0 0
        %2099 = vmatpush2.bf16.msra.mxu0 0
        %2100 = vmatprep.subr.bf16.mxu0 0
        %2101 = vmatpush2.bf16.msra.mxu0 0
        %2102 = vmatprep.subr.bf16.mxu0 0
        %2103 = vmatpush2.bf16.msra.mxu0 0
        %2104 = vmatprep.mubr.bf16.mxu0 0
        %2105 = vmatmul.mubr.bf16.gmra.mxu0 %v2070
        %v2106 = vpop.f32.mrf.mxu0
        %v2107 = vadd.f32 0.0, %v2106
        %v2108 = vpop.f32.mrf.mxu0
        %v2109 = vpop.f32.mrf.mxu0
        %v2110 = vpop.f32.mrf.mxu0
        %2111 = vdwg.mxu0
        %v2114 = vunpack.c.l.b16 %v2010
        %v2115 = vunpack.c.l.b16 %v2011
        %v2116 = vpack.c.b16 %v2115, %v2114
        %v2119 = vsel %vm665, %v2003, 0
        %2121 = vmatprep.subr.bf16.mxu0 0
        %2122 = vmatpush1.bf16.msra.mxu0 0
        %2123 = vmatprep.subr.bf16.mxu0 0
        %2124 = vmatpush1.bf16.msra.mxu0 0
        %2125 = vmatprep.subr.bf16.mxu0 0
        %2126 = vmatpush1.bf16.msra.mxu0 0
        %2127 = vmatprep.subr.bf16.mxu0 0
        %2128 = vmatpush1.bf16.msra.mxu0 0
        %2129 = vmatprep.subr.bf16.mxu0 0
        %2130 = vmatpush1.bf16.msra.mxu0 0
        %2131 = vmatprep.subr.bf16.mxu0 0
        %2132 = vmatpush1.bf16.msra.mxu0 0
        %2133 = vmatprep.subr.bf16.mxu0 0
        %2134 = vmatpush1.bf16.msra.mxu0 0
        %2135 = vmatprep.subr.bf16.mxu0 0
        %2136 = vmatpush1.bf16.msra.mxu0 %v2116
        %2137 = vmatprep.subr.bf16.mxu0 0
        %2138 = vmatpush2.bf16.msra.mxu0 0
        %2139 = vmatprep.subr.bf16.mxu0 0
        %2140 = vmatpush2.bf16.msra.mxu0 0
        %2141 = vmatprep.subr.bf16.mxu0 0
        %2142 = vmatpush2.bf16.msra.mxu0 0
        %2143 = vmatprep.subr.bf16.mxu0 0
        %2144 = vmatpush2.bf16.msra.mxu0 0
        %2145 = vmatprep.subr.bf16.mxu0 0
        %2146 = vmatpush2.bf16.msra.mxu0 0
        %2147 = vmatprep.subr.bf16.mxu0 0
        %2148 = vmatpush2.bf16.msra.mxu0 0
        %2149 = vmatprep.subr.bf16.mxu0 0
        %2150 = vmatpush2.bf16.msra.mxu0 0
        %2151 = vmatprep.subr.bf16.mxu0 0
        %2152 = vmatpush2.bf16.msra.mxu0 0
        %2153 = vmatprep.mubr.bf16.mxu0 0
        %2154 = vmatmul.mubr.bf16.gmra.mxu0 %v2119
        %v2155 = vpop.f32.mrf.mxu0
        %v2156 = vadd.f32 0.0, %v2155
        %v2157 = vpop.f32.mrf.mxu0
        %v2158 = vpop.f32.mrf.mxu0
        %v2159 = vpop.f32.mrf.mxu0
        %2160 = vdwg.mxu0
        %v2163 = vunpack.c.l.b16 %v2012
        %v2164 = vunpack.c.l.b16 %v2013
        %v2165 = vpack.c.b16 %v2164, %v2163
        %v2168 = vsel %vm665, %v2004, 0
        %2170 = vmatprep.subr.bf16.mxu0 0
        %2171 = vmatpush1.bf16.msra.mxu0 0
        %2172 = vmatprep.subr.bf16.mxu0 0
        %2173 = vmatpush1.bf16.msra.mxu0 0
        %2174 = vmatprep.subr.bf16.mxu0 0
        %2175 = vmatpush1.bf16.msra.mxu0 0
        %2176 = vmatprep.subr.bf16.mxu0 0
        %2177 = vmatpush1.bf16.msra.mxu0 0
        %2178 = vmatprep.subr.bf16.mxu0 0
        %2179 = vmatpush1.bf16.msra.mxu0 0
        %2180 = vmatprep.subr.bf16.mxu0 0
        %2181 = vmatpush1.bf16.msra.mxu0 0
        %2182 = vmatprep.subr.bf16.mxu0 0
        %2183 = vmatpush1.bf16.msra.mxu0 0
        %2184 = vmatprep.subr.bf16.mxu0 0
        %2185 = vmatpush1.bf16.msra.mxu0 %v2165
        %2186 = vmatprep.subr.bf16.mxu0 0
        %2187 = vmatpush2.bf16.msra.mxu0 0
        %2188 = vmatprep.subr.bf16.mxu0 0
        %2189 = vmatpush2.bf16.msra.mxu0 0
        %2190 = vmatprep.subr.bf16.mxu0 0
        %2191 = vmatpush2.bf16.msra.mxu0 0
        %2192 = vmatprep.subr.bf16.mxu0 0
        %2193 = vmatpush2.bf16.msra.mxu0 0
        %2194 = vmatprep.subr.bf16.mxu0 0
        %2195 = vmatpush2.bf16.msra.mxu0 0
        %2196 = vmatprep.subr.bf16.mxu0 0
        %2197 = vmatpush2.bf16.msra.mxu0 0
        %2198 = vmatprep.subr.bf16.mxu0 0
        %2199 = vmatpush2.bf16.msra.mxu0 0
        %2200 = vmatprep.subr.bf16.mxu0 0
        %2201 = vmatpush2.bf16.msra.mxu0 0
        %2202 = vmatprep.mubr.bf16.mxu0 0
        %2203 = vmatmul.mubr.bf16.gmra.mxu0 %v2168
        %v2204 = vpop.f32.mrf.mxu0
        %v2205 = vadd.f32 0.0, %v2204
        %v2206 = vpop.f32.mrf.mxu0
        %v2207 = vpop.f32.mrf.mxu0
        %v2208 = vpop.f32.mrf.mxu0
        %2209 = vdwg.mxu0
        %v2210 = vsel %vm532, %v2058, 0.0
        %v2211 = vsel %vm532, %v2107, 0.0
        %v2212 = vadd.f32 %v2210, %v2211
        %v2213 = vsel %vm532, %v2156, 0.0
        %v2214 = vadd.f32 %v2212, %v2213
        %v2215 = vsel %vm532, %v2205, 0.0
        %v2216 = vadd.f32 %v2214, %v2215
        %v2217 = vadd.f32 %v1462, %v2216
        %s2218 = scalar_lea.vmem %s7, 1
        %v2219 = vld [vmem:[%s2218] sm:$0x1]
        %v2220 = vmul.f32 %v2217, %v2217
        %v2221 = vsel %vm532, %v2220, 0.0
        %2222 = vadd.xlane.f32.xlu0 %v2221
        %v2223 = vpop.xlane.xlu0 %2222
        %v2224 = vmul.f32 %v2223, %v536
        %v2225 = vadd.f32 %v2224, 1e-06
        %v2226 = vrsqrt.pop %v2225
        %v2227 = vmul.f32 %v2217, %v2226
        %v2228 = vadd.f32 %v2219, 1.0
        %v2230 = vlaneseq
        %v2231 = vshrl.u32 %v2230, 7
        %v2232 = vsub.s32 0, %v2231
        %v2233 = vrot.slane %v2228, %v2232
        %v2235 = vmul.f32 %v2227, %v2233
        %v2236 = vpack.c.bf16 %v2235, %v2235
        %s2237 = scalar_lea.vmem %s8, 16
        %v2238 = vld [vmem:[%s2237] sm:$0xf]
        %v2239 = vld [vmem:[%s2237 + $0x4] sm:$0xf]
        %v2240 = vld [vmem:[%s2237 + $0x8] sm:$0xf]
        %v2241 = vld [vmem:[%s2237 + $0xc] sm:$0xf]
        %v2246 = vunpack.c.l.b16 %v2238
        %v2247 = vunpack.c.l.b16 %v2239
        %v2248 = vunpack.c.l.b16 %v2240
        %v2249 = vunpack.c.l.b16 %v2241
        %v2250 = vpack.c.b16 %v2247, %v2246
        %v2251 = vpack.c.b16 %v2249, %v2248
        %v2255 = vsel %vm532, %v2236, 0
        %2257 = vmatprep.subr.bf16.mxu0 0
        %2258 = vmatpush1.bf16.msra.mxu0 0
        %2259 = vmatprep.subr.bf16.mxu0 0
        %2260 = vmatpush1.bf16.msra.mxu0 0
        %2261 = vmatprep.subr.bf16.mxu0 0
        %2262 = vmatpush1.bf16.msra.mxu0 0
        %2263 = vmatprep.subr.bf16.mxu0 0
        %2264 = vmatpush1.bf16.msra.mxu0 0
        %2265 = vmatprep.subr.bf16.mxu0 0
        %2266 = vmatpush1.bf16.msra.mxu0 0
        %2267 = vmatprep.subr.bf16.mxu0 0
        %2268 = vmatpush1.bf16.msra.mxu0 0
        %2269 = vmatprep.subr.bf16.mxu0 0
        %2270 = vmatpush1.bf16.msra.mxu0 %v2251
        %2271 = vmatprep.subr.bf16.mxu0 0
        %2272 = vmatpush1.bf16.msra.mxu0 %v2250
        %2273 = vmatprep.subr.bf16.mxu0 0
        %2274 = vmatpush2.bf16.msra.mxu0 0
        %2275 = vmatprep.subr.bf16.mxu0 0
        %2276 = vmatpush2.bf16.msra.mxu0 0
        %2277 = vmatprep.subr.bf16.mxu0 0
        %2278 = vmatpush2.bf16.msra.mxu0 0
        %2279 = vmatprep.subr.bf16.mxu0 0
        %2280 = vmatpush2.bf16.msra.mxu0 0
        %2281 = vmatprep.subr.bf16.mxu0 0
        %2282 = vmatpush2.bf16.msra.mxu0 0
        %2283 = vmatprep.subr.bf16.mxu0 0
        %2284 = vmatpush2.bf16.msra.mxu0 0
        %2285 = vmatprep.subr.bf16.mxu0 0
        %2286 = vmatpush2.bf16.msra.mxu0 0
        %2287 = vmatprep.subr.bf16.mxu0 0
        %2288 = vmatpush2.bf16.msra.mxu0 0
        %2289 = vmatprep.mubr.bf16.mxu0 0
        %2290 = vmatmul.mubr.bf16.gmra.mxu0 %v2255
        %v2291 = vpop.f32.mrf.mxu0
        %v2292 = vadd.f32 0.0, %v2291
        %v2293 = vpop.f32.mrf.mxu0
        %v2294 = vpop.f32.mrf.mxu0
        %v2295 = vpop.f32.mrf.mxu0
        %2296 = vdwg.mxu0
        %v2297 = vmul.f32 %v2292, 0.5
        %v2298 = vmul.f32 %v2292, 0.044715
        %v2299 = vmul.f32 %v2298, %v2292
        %v2300 = vmul.f32 %v2299, %v2292
        %v2301 = vadd.f32 %v2292, %v2300
        %v2302 = vmul.f32 %v2301, 0.7978846
        %v2303 = vtanh.pop %v2302
        %v2304 = vadd.f32 %v2303, 1.0
        %v2305 = vmul.f32 %v2297, %v2304
        %2307 = vrot.lane.b32.xlu0 %v2292, 64
        %v2308 = vpop.permute.xlu0 %2307
        %v2310 = vmul.f32 %v2305, %v2308
        %v2311 = vpack.c.bf16 %v2310, %v2310
        %s2312 = scalar_lea.vmem %s9, 32
        %v2313 = vld [vmem:[%s2312] sm:$0xf]
        %v2314 = vld [vmem:[%s2312 + $0x4] sm:$0xf]
        %v2315 = vld [vmem:[%s2312 + $0x8] sm:$0xf]
        %v2316 = vld [vmem:[%s2312 + $0xc] sm:$0xf]
        %v2317 = vld [vmem:[%s2312 + $0x10] sm:$0xf]
        %v2318 = vld [vmem:[%s2312 + $0x14] sm:$0xf]
        %v2319 = vld [vmem:[%s2312 + $0x18] sm:$0xf]
        %v2320 = vld [vmem:[%s2312 + $0x1c] sm:$0xf]
        %v2329 = vunpack.c.l.b16 %v2313
        %v2330 = vunpack.c.l.b16 %v2314
        %v2331 = vunpack.c.l.b16 %v2315
        %v2332 = vunpack.c.l.b16 %v2316
        %v2333 = vunpack.c.l.b16 %v2317
        %v2334 = vunpack.c.l.b16 %v2318
        %v2335 = vunpack.c.l.b16 %v2319
        %v2336 = vunpack.c.l.b16 %v2320
        %v2337 = vpack.c.b16 %v2330, %v2329
        %v2338 = vpack.c.b16 %v2332, %v2331
        %v2339 = vpack.c.b16 %v2334, %v2333
        %v2340 = vpack.c.b16 %v2336, %v2335
        %v2346 = vsel %vm1418, %v2311, 0
        %2348 = vmatprep.subr.bf16.mxu0 0
        %2349 = vmatpush1.bf16.msra.mxu0 0
        %2350 = vmatprep.subr.bf16.mxu0 0
        %2351 = vmatpush1.bf16.msra.mxu0 0
        %2352 = vmatprep.subr.bf16.mxu0 0
        %2353 = vmatpush1.bf16.msra.mxu0 0
        %2354 = vmatprep.subr.bf16.mxu0 0
        %2355 = vmatpush1.bf16.msra.mxu0 0
        %2356 = vmatprep.subr.bf16.mxu0 0
        %2357 = vmatpush1.bf16.msra.mxu0 %v2340
        %2358 = vmatprep.subr.bf16.mxu0 0
        %2359 = vmatpush1.bf16.msra.mxu0 %v2339
        %2360 = vmatprep.subr.bf16.mxu0 0
        %2361 = vmatpush1.bf16.msra.mxu0 %v2338
        %2362 = vmatprep.subr.bf16.mxu0 0
        %2363 = vmatpush1.bf16.msra.mxu0 %v2337
        %2364 = vmatprep.subr.bf16.mxu0 0
        %2365 = vmatpush2.bf16.msra.mxu0 0
        %2366 = vmatprep.subr.bf16.mxu0 0
        %2367 = vmatpush2.bf16.msra.mxu0 0
        %2368 = vmatprep.subr.bf16.mxu0 0
        %2369 = vmatpush2.bf16.msra.mxu0 0
        %2370 = vmatprep.subr.bf16.mxu0 0
        %2371 = vmatpush2.bf16.msra.mxu0 0
        %2372 = vmatprep.subr.bf16.mxu0 0
        %2373 = vmatpush2.bf16.msra.mxu0 0
        %2374 = vmatprep.subr.bf16.mxu0 0
        %2375 = vmatpush2.bf16.msra.mxu0 0
        %2376 = vmatprep.subr.bf16.mxu0 0
        %2377 = vmatpush2.bf16.msra.mxu0 0
        %2378 = vmatprep.subr.bf16.mxu0 0
        %2379 = vmatpush2.bf16.msra.mxu0 0
        %2380 = vmatprep.mubr.bf16.mxu0 0
        %2381 = vmatmul.mubr.bf16.gmra.mxu0 %v2346
        %v2382 = vpop.f32.mrf.mxu0
        %v2383 = vadd.f32 0.0, %v2382
        %v2384 = vpop.f32.mrf.mxu0
        %v2385 = vpop.f32.mrf.mxu0
        %v2386 = vpop.f32.mrf.mxu0
        %2387 = vdwg.mxu0
        %v2388 = vadd.f32 %v2217, %v2383
        %v2389 = vld [vmem:[%s10] sm:$0x1]
        %v2390 = vmul.f32 %v2388, %v2388
        %v2391 = vsel %vm532, %v2390, 0.0
        %2392 = vadd.xlane.f32.xlu0 %v2391
        %v2393 = vpop.xlane.xlu0 %2392
        %v2394 = vmul.f32 %v2393, %v536
        %v2395 = vadd.f32 %v2394, 1e-06
        %v2396 = vrsqrt.pop %v2395
        %v2397 = vmul.f32 %v2388, %v2396
        %v2398 = vadd.f32 %v2389, 1.0
        %v2400 = vlaneseq
        %v2401 = vshrl.u32 %v2400, 7
        %v2402 = vsub.s32 0, %v2401
        %v2403 = vrot.slane %v2398, %v2402
        %v2405 = vmul.f32 %v2397, %v2403
        %2406 = vst.msk [vmem:[%s523] sm:$0xff] %vm532, %v2405
        %s2407 = sand.u32 %s293, 1
        %s2408 = scalar_lea.sflag [#allocation4], %s2407
        %s2409 = sand.u32 %s293, 1
        %s2410 = smul.addr %s2409, 8
        %s2411 = scalar_lea.vmem [#allocation11], %s2410
        // Predicated region
        $region85: #{tpu_custom_call.1} parent=63 // pred_check
          %p2412 = pneg %p303
        $region86: #{tpu_custom_call.1} parent=63 // pred_check_branch
          %2414 = sbr.rel (%p2412) target = $region88
        $region87: #{tpu_custom_call.1} parent=63 // pred_region
          %s2416 = ssub.s32 128, 128
          %2417 = vsyncadd %s2408, %s2416
          %s2418 = smul.addr %s34, 128
          %s2419 = scalar_lea.hbm %s11, %s2418
          %s2421 = sshll.u32 %s2411, 4
          %s2422 = int_to_ptr.vmem [resolvable:$true] %s2421
          %2424 = dma.vmem_to_hbm [thread:$0]  %s2422, 128, %s2419, %s2408
        $region88: #{tpu_custom_call.1} parent=63 // pred_fallthru
          _
      $region64: #{tpu_custom_call.1} parent=5 // pred_fallthru
        _
      %p2425 = scmp.le.s32.totalorder 2, %s29
      // Predicated region
      $region89: #{tpu_custom_call.1} parent=5 // pred_check
        %p2426 = pneg %p2425
      $region90: #{tpu_custom_call.1} parent=5 // pred_check_branch
        %2428 = sbr.rel (%p2426) target = $region92
      $region91: #{tpu_custom_call.1} parent=5 // pred_region
        %s2429 = ssub.s32 %s29, 2
        // Predicated region
        $region93: #{tpu_custom_call.1} parent=91 // pred_check
          %p2430 = pneg %p309
        $region94: #{tpu_custom_call.1} parent=91 // pred_check_branch
          %2432 = sbr.rel (%p2430) target = $region96
        $region95: #{tpu_custom_call.1} parent=91 // pred_region
          %s2433 = sand.u32 %s294, 1
          %s2434 = scalar_lea.sflag [#allocation4], %s2433
          %s2435 = sand.u32 %s294, 1
          %s2436 = smul.addr %s2435, 8
          %s2437 = scalar_lea.vmem [#allocation11], %s2436
          %2438 = dma.done %s2434, 128
        $region96: #{tpu_custom_call.1} parent=91 // pred_fallthru
          _
      $region92: #{tpu_custom_call.1} parent=5 // pred_fallthru
        _
    $region6: #{tpu_custom_call.1} parent=1 // loop_footer
      %s33 = sadd.s32 1, %s29
    $region7: #{tpu_custom_call.1} parent=1 // loop_footer_branch
      %28 = sbr.rel target = $region3
    $region8: #{tpu_custom_call.1} parent=1 // loop_exit
      _
    %2439 = vsyncpa [#allocation3], 1
    %s2440 = scalar_lea.sflag [#allocation3], 1
    %2441 = vsyncpa %s2440, 1
    %2442 = vsyncpa [#allocation6], 1
    %s2443 = scalar_lea.sflag [#allocation6], 1
    %2444 = vsyncpa %s2443, 1
    %2445 = vsyncpa [#allocation9], 1
    %s2446 = scalar_lea.sflag [#allocation9], 1
    %2447 = vsyncpa %s2446, 1
    %2448 = vsyncpa [#allocation4], 1
    %s2449 = scalar_lea.sflag [#allocation4], 1
    %2450 = vsyncpa %s2449, 1

</llo_original>
